<compile_context>
chip_gen: v7x
topology: tpu7x:2x2x1
jax: 0.10.0
libtpu: 0.0.40
codegen_flags: <defaults>
</compile_context>

<pallas_src>
import functools

import jax
import jax.numpy as jnp
from jax.experimental import pallas as pl
from jax.experimental.pallas import tpu as pltpu


def bottleneck_kernel(x_ref, w1_ref, w2_ref, w3_ref,
                      s1_ref, b1_ref, s2_ref, b2_ref, s3_ref, b3_ref,
                      out_ref, pad_ref):
    """One batch element per grid step; full (H, W, C) NHWC tile in VMEM."""
    H, W, Cin = x_ref.shape
    P = w1_ref.shape[1]
    Cout = w3_ref.shape[1]

    # ---- conv1 (1x1) + bn1 + relu --------------------------------------
    xm = x_ref[...].reshape(H * W, Cin)                         # bf16
    y1 = jnp.dot(xm, w1_ref[...], preferred_element_type=jnp.float32)
    y1 = jnp.maximum(y1 * s1_ref[...] + b1_ref[...], 0.0)       # f32

    # ---- conv2 (3x3, stride=1, pad=1) + bn2 + relu ----------------------
    # Zero only the 1-pixel border of the padded scratch; the interior is
    # fully overwritten each step.  (Per-step border init is megacore-safe.)
    zrow = jnp.zeros((1, W + 2, P), pad_ref.dtype)
    zcol = jnp.zeros((H + 2, 1, P), pad_ref.dtype)
    pad_ref[0:1, :, :] = zrow
    pad_ref[H + 1:H + 2, :, :] = zrow
    pad_ref[:, 0:1, :] = zcol
    pad_ref[:, W + 1:W + 2, :] = zcol
    pad_ref[1:H + 1, 1:W + 1, :] = y1.reshape(H, W, P).astype(pad_ref.dtype)

    # im2col: one (H*W, 9P) @ (9P, P) matmul instead of 9 small-K matmuls.
    patches = jnp.concatenate(
        [pad_ref[ky:ky + H, kx:kx + W, :]
         for ky in range(3) for kx in range(3)],
        axis=-1).reshape(H * W, 9 * P)
    y2 = jnp.dot(patches, w2_ref[...], preferred_element_type=jnp.float32)
    y2 = jnp.maximum(y2 * s2_ref[...] + b2_ref[...], 0.0)       # f32

    # ---- conv3 (1x1) + bn3 + residual add + relu ------------------------
    y3 = jnp.dot(y2.astype(w3_ref.dtype), w3_ref[...],
                 preferred_element_type=jnp.float32)
    y3 = y3 * s3_ref[...] + b3_ref[...]

    identity = x_ref[...].reshape(H * W, Cout).astype(jnp.float32)
    out = jnp.maximum(y3 + identity, 0.0)
    out_ref[...] = out.reshape(H, W, Cout).astype(out_ref.dtype)


def bottleneck_forward_nhwc(x_nhwc, params):
    """x_nhwc: (N, H, W, Cin) float32.  Returns (N, H, W, Cin) float32."""
    w1, w2, w3, s1, b1, s2, b2, s3, b3 = params
    N, H, W, Cin = x_nhwc.shape
    P = w1.shape[1]
    Cout = w3.shape[1]
    assert Cout == Cin, "residual add requires inplanes == planes * expansion"

    # bf16 operands into the MXU (f32 accumulation inside the kernel).
    xb = x_nhwc.astype(jnp.bfloat16)
    w1b = w1.astype(jnp.bfloat16)
    w2b = w2.reshape(9 * P, P).astype(jnp.bfloat16)   # rows ordered (ky,kx,ci)
    w3b = w3.astype(jnp.bfloat16)

    full = lambda a: pl.BlockSpec(a.shape, lambda n: (0,) * a.ndim)

    # TODO(synk): for large H*W (e.g. 56x56x256 ResNet stages) tile the H axis
    # with a 1-row halo (grid (N, H//TH)) so the working set fits v7x's 64 MiB
    # VMEM and the pipeline/megacore get more grid steps.
    out = pl.pallas_call(
        bottleneck_kernel,
        out_shape=jax.ShapeDtypeStruct((N, H, W, Cout), jnp.float32),
        grid=(N,),
        in_specs=[
            pl.BlockSpec((None, H, W, Cin), lambda n: (n, 0, 0, 0)),
            full(w1b), full(w2b), full(w3b),
            full(s1), full(b1), full(s2), full(b2), full(s3), full(b3),
        ],
        out_specs=pl.BlockSpec((None, H, W, Cout), lambda n: (n, 0, 0, 0)),
        scratch_shapes=[pltpu.VMEM((H + 2, W + 2, P), jnp.bfloat16)],
        compiler_params=pltpu.CompilerParams(
            dimension_semantics=("parallel",),
            vmem_limit_bytes=32 * 1024 * 1024),
    )(xb, w1b, w2b, w3b, s1, b1, s2, b2, s3, b3)
    return out


def bottleneck_forward(x_nchw, params):
    """PyTorch-interface wrapper: (N, Cin, H, W) -> (N, Cin, H, W).

    TODO(synk): keep activations NHWC end-to-end across blocks (call
    bottleneck_forward_nhwc directly) to avoid these two boundary transposes.
    """
    x = jnp.transpose(x_nchw, (0, 2, 3, 1))                  # -> NHWC
    out = bottleneck_forward_nhwc(x, params)
    return jnp.transpose(out, (0, 3, 1, 2))                  # -> NCHW


def make_params(key, inplanes, planes):
    """Deterministic synthetic params (conv weights + folded BN affine)."""
    expansion = 4
    cout = planes * expansion
    ks = jax.random.split(key, 12)
    eps = 1e-5

    w1 = 0.2 * jax.random.normal(ks[0], (inplanes, planes), jnp.float32)
    w2 = 0.2 * jax.random.normal(ks[1], (3, 3, planes, planes), jnp.float32)
    w3 = 0.2 * jax.random.normal(ks[2], (planes, cout), jnp.float32)

    def bn(kg, kb, km, kv, c):
        gamma = 1.0 + 0.1 * jax.random.normal(kg, (c,), jnp.float32)
        beta = 0.1 * jax.random.normal(kb, (c,), jnp.float32)
        mean = 0.1 * jax.random.normal(km, (c,), jnp.float32)
        var = jax.random.uniform(kv, (c,), jnp.float32, 0.5, 1.5)
        scale = gamma / jnp.sqrt(var + eps)
        bias = beta - mean * scale
        return scale.reshape(1, c), bias.reshape(1, c)

    s1, b1 = bn(ks[3], ks[4], ks[5], ks[6], planes)
    s2, b2 = bn(ks[7], ks[8], ks[9], ks[10], planes)
    s3, b3 = bn(ks[11], ks[3], ks[7], ks[0], cout)
    return (w1, w2, w3, s1, b1, s2, b2, s3, b3)


def bottleneck_reference(x_nchw, params):
    """Pure-JAX reference (lax convs, NHWC) with matching bf16 matmul inputs."""
    w1, w2, w3, s1, b1, s2, b2, s3, b3 = params
    x = jnp.transpose(x_nchw, (0, 2, 3, 1)).astype(jnp.bfloat16)
    dn = ('NHWC', 'HWIO', 'NHWC')
    conv = functools.partial(jax.lax.conv_general_dilated,
                             window_strides=(1, 1), dimension_numbers=dn,
                             preferred_element_type=jnp.float32)
    y = conv(x, w1.reshape(1, 1, *w1.shape).astype(jnp.bfloat16),
             padding='VALID')
    y = jnp.maximum(y * s1[0] + b1[0], 0.0)
    y = conv(y.astype(jnp.bfloat16), w2.astype(jnp.bfloat16),
             padding=((1, 1), (1, 1)))
    y = jnp.maximum(y * s2[0] + b2[0], 0.0)
    y = conv(y.astype(jnp.bfloat16),
             w3.reshape(1, 1, *w3.shape).astype(jnp.bfloat16), padding='VALID')
    y = y * s3[0] + b3[0]
    y = jnp.maximum(y + x.astype(jnp.float32), 0.0)
    return jnp.transpose(y, (0, 3, 1, 2))


if __name__ == "__main__":
    key = jax.random.PRNGKey(0)
    kx, kp = jax.random.split(key)

    # inplanes == planes * 4; Cin/Cout = 128 keeps output stores lane-dense.
    N, inplanes, planes, H, W = 2, 128, 32, 16, 16
    x = jax.random.normal(kx, (N, inplanes, H, W), jnp.float32)
    params = make_params(kp, inplanes, planes)

    out = bottleneck_forward(x, params)
    out = jax.block_until_ready(out)

    ref = bottleneck_reference(x, params)
    assert out.shape == ref.shape == (N, inplanes, H, W)
    assert jnp.allclose(out, ref, atol=2e-2, rtol=2e-2), (
        float(jnp.max(jnp.abs(out - ref))))

    print("KERNEL_OK")
</pallas_src>

<mosaic_0001>
module attributes {stable_mosaic.version = 11 : i64} {
  func.func @bottleneck_kernel(%arg0: i32, %arg1: memref<1x16x16x128xbf16, #tpu.memory_space<vmem>>, %arg2: memref<128x32xbf16, #tpu.memory_space<vmem>>, %arg3: memref<288x32xbf16, #tpu.memory_space<vmem>>, %arg4: memref<32x128xbf16, #tpu.memory_space<vmem>>, %arg5: memref<1x32xf32, #tpu.memory_space<vmem>>, %arg6: memref<1x32xf32, #tpu.memory_space<vmem>>, %arg7: memref<1x32xf32, #tpu.memory_space<vmem>>, %arg8: memref<1x32xf32, #tpu.memory_space<vmem>>, %arg9: memref<1x128xf32, #tpu.memory_space<vmem>>, %arg10: memref<1x128xf32, #tpu.memory_space<vmem>>, %arg11: memref<1x16x16x128xf32, #tpu.memory_space<vmem>>, %arg12: memref<18x18x32xbf16, #tpu.memory_space<vmem>>) attributes {dimension_semantics = [#tpu.dimension_semantics<parallel>], iteration_bounds = array<i64: 2>, scalar_prefetch = 0 : i64, scratch_operands = 1 : i64, tpu.core_type = #tpu.core_type<tc>, window_params = [{transform_indices = @transform_0, window_bounds = array<i64: 1, 16, 16, 128>}, {pipeline_mode = #tpu.pipeline_mode<synchronous>, transform_indices = @transform_1, window_bounds = array<i64: 128, 32>}, {pipeline_mode = #tpu.pipeline_mode<synchronous>, transform_indices = @transform_2, window_bounds = array<i64: 288, 32>}, {pipeline_mode = #tpu.pipeline_mode<synchronous>, transform_indices = @transform_3, window_bounds = array<i64: 32, 128>}, {pipeline_mode = #tpu.pipeline_mode<synchronous>, transform_indices = @transform_4, window_bounds = array<i64: 1, 32>}, {pipeline_mode = #tpu.pipeline_mode<synchronous>, transform_indices = @transform_5, window_bounds = array<i64: 1, 32>}, {pipeline_mode = #tpu.pipeline_mode<synchronous>, transform_indices = @transform_6, window_bounds = array<i64: 1, 32>}, {pipeline_mode = #tpu.pipeline_mode<synchronous>, transform_indices = @transform_7, window_bounds = array<i64: 1, 32>}, {pipeline_mode = #tpu.pipeline_mode<synchronous>, transform_indices = @transform_8, window_bounds = array<i64: 1, 128>}, {pipeline_mode = #tpu.pipeline_mode<synchronous>, transform_indices = @transform_9, window_bounds = array<i64: 1, 128>}, {transform_indices = @transform_10, window_bounds = array<i64: 1, 16, 16, 128>}]} {
    %c0 = arith.constant 0 : index
    %c0_0 = arith.constant 0 : index
    %c0_1 = arith.constant 0 : index
    %c0_2 = arith.constant 0 : index
    %0 = vector.load %arg1[%c0, %c0_0, %c0_1, %c0_2] : memref<1x16x16x128xbf16, #tpu.memory_space<vmem>>, vector<1x16x16x128xbf16>
    %1 = vector.shape_cast %0 : vector<1x16x16x128xbf16> to vector<16x16x128xbf16>
    %2 = vector.shape_cast %1 : vector<16x16x128xbf16> to vector<256x128xbf16>
    %c0_3 = arith.constant 0 : index
    %c0_4 = arith.constant 0 : index
    %3 = vector.load %arg2[%c0_3, %c0_4] : memref<128x32xbf16, #tpu.memory_space<vmem>>, vector<128x32xbf16>
    %cst = arith.constant dense<0.000000e+00> : vector<256x32xf32>
    %4 = tpu.matmul %2, %3, %cst {dimension_numbers = #tpu.dot_dimension_numbers<[1], [0], [0], [1], [0, 0, 1, 1], [], []>} : vector<256x128xbf16>, vector<128x32xbf16>, vector<256x32xf32> -> vector<256x32xf32>
    %c0_5 = arith.constant 0 : index
    %c0_6 = arith.constant 0 : index
    %5 = vector.load %arg5[%c0_5, %c0_6] : memref<1x32xf32, #tpu.memory_space<vmem>>, vector<1x32xf32>
    %6 = vector.broadcast %5 : vector<1x32xf32> to vector<256x32xf32>
    %7 = arith.mulf %4, %6 : vector<256x32xf32>
    %c0_7 = arith.constant 0 : index
    %c0_8 = arith.constant 0 : index
    %8 = vector.load %arg6[%c0_7, %c0_8] : memref<1x32xf32, #tpu.memory_space<vmem>>, vector<1x32xf32>
    %9 = vector.broadcast %8 : vector<1x32xf32> to vector<256x32xf32>
    %10 = arith.addf %7, %9 : vector<256x32xf32>
    %cst_9 = arith.constant 0.000000e+00 : f32
    %11 = vector.broadcast %cst_9 : f32 to vector<256x32xf32>
    %12 = arith.maximumf %10, %11 : vector<256x32xf32>
    %cst_10 = arith.constant 0.000000e+00 : bf16
    %13 = vector.broadcast %cst_10 : bf16 to vector<1x18x32xbf16>
    %cst_11 = arith.constant 0.000000e+00 : bf16
    %14 = vector.broadcast %cst_11 : bf16 to vector<18x1x32xbf16>
    %c0_12 = arith.constant 0 : index
    %c0_13 = arith.constant 0 : index
    %c0_14 = arith.constant 0 : index
    %15 = vector.load %arg12[%c0_12, %c0_13, %c0_14] : memref<18x18x32xbf16, #tpu.memory_space<vmem>>, vector<1x18x32xbf16>
    tpu.vector_store %arg12[%c0_12, %c0_13, %c0_14], %13 {strides = array<i32>} : memref<18x18x32xbf16, #tpu.memory_space<vmem>>, vector<1x18x32xbf16>,
    %c17 = arith.constant 17 : index
    %c0_15 = arith.constant 0 : index
    %c0_16 = arith.constant 0 : index
    %16 = vector.load %arg12[%c17, %c0_15, %c0_16] : memref<18x18x32xbf16, #tpu.memory_space<vmem>>, vector<1x18x32xbf16>
    tpu.vector_store %arg12[%c17, %c0_15, %c0_16], %13 {strides = array<i32>} : memref<18x18x32xbf16, #tpu.memory_space<vmem>>, vector<1x18x32xbf16>,
    %c0_17 = arith.constant 0 : index
    %c0_18 = arith.constant 0 : index
    %c0_19 = arith.constant 0 : index
    %17 = vector.load %arg12[%c0_17, %c0_18, %c0_19] : memref<18x18x32xbf16, #tpu.memory_space<vmem>>, vector<18x1x32xbf16>
    tpu.vector_store %arg12[%c0_17, %c0_18, %c0_19], %14 {strides = array<i32>} : memref<18x18x32xbf16, #tpu.memory_space<vmem>>, vector<18x1x32xbf16>,
    %c0_20 = arith.constant 0 : index
    %c17_21 = arith.constant 17 : index
    %c0_22 = arith.constant 0 : index
    %18 = vector.load %arg12[%c0_20, %c17_21, %c0_22] : memref<18x18x32xbf16, #tpu.memory_space<vmem>>, vector<18x1x32xbf16>
    tpu.vector_store %arg12[%c0_20, %c17_21, %c0_22], %14 {strides = array<i32>} : memref<18x18x32xbf16, #tpu.memory_space<vmem>>, vector<18x1x32xbf16>,
    %19 = vector.shape_cast %12 : vector<256x32xf32> to vector<16x16x32xf32>
    %20 = arith.truncf %19 : vector<16x16x32xf32> to vector<16x16x32xbf16>
    %c1 = arith.constant 1 : index
    %c1_23 = arith.constant 1 : index
    %c0_24 = arith.constant 0 : index
    %21 = vector.load %arg12[%c1, %c1_23, %c0_24] : memref<18x18x32xbf16, #tpu.memory_space<vmem>>, vector<16x16x32xbf16>
    tpu.vector_store %arg12[%c1, %c1_23, %c0_24], %20 {strides = array<i32>} : memref<18x18x32xbf16, #tpu.memory_space<vmem>>, vector<16x16x32xbf16>,
    %c0_25 = arith.constant 0 : index
    %c0_26 = arith.constant 0 : index
    %c0_27 = arith.constant 0 : index
    %22 = vector.load %arg12[%c0_25, %c0_26, %c0_27] : memref<18x18x32xbf16, #tpu.memory_space<vmem>>, vector<16x16x32xbf16>
    %c0_28 = arith.constant 0 : index
    %c1_29 = arith.constant 1 : index
    %c0_30 = arith.constant 0 : index
    %23 = vector.load %arg12[%c0_28, %c1_29, %c0_30] : memref<18x18x32xbf16, #tpu.memory_space<vmem>>, vector<16x16x32xbf16>
    %c0_31 = arith.constant 0 : index
    %c2 = arith.constant 2 : index
    %c0_32 = arith.constant 0 : index
    %24 = vector.load %arg12[%c0_31, %c2, %c0_32] : memref<18x18x32xbf16, #tpu.memory_space<vmem>>, vector<16x16x32xbf16>
    %c1_33 = arith.constant 1 : index
    %c0_34 = arith.constant 0 : index
    %c0_35 = arith.constant 0 : index
    %25 = vector.load %arg12[%c1_33, %c0_34, %c0_35] : memref<18x18x32xbf16, #tpu.memory_space<vmem>>, vector<16x16x32xbf16>
    %c1_36 = arith.constant 1 : index
    %c1_37 = arith.constant 1 : index
    %c0_38 = arith.constant 0 : index
    %26 = vector.load %arg12[%c1_36, %c1_37, %c0_38] : memref<18x18x32xbf16, #tpu.memory_space<vmem>>, vector<16x16x32xbf16>
    %c1_39 = arith.constant 1 : index
    %c2_40 = arith.constant 2 : index
    %c0_41 = arith.constant 0 : index
    %27 = vector.load %arg12[%c1_39, %c2_40, %c0_41] : memref<18x18x32xbf16, #tpu.memory_space<vmem>>, vector<16x16x32xbf16>
    %c2_42 = arith.constant 2 : index
    %c0_43 = arith.constant 0 : index
    %c0_44 = arith.constant 0 : index
    %28 = vector.load %arg12[%c2_42, %c0_43, %c0_44] : memref<18x18x32xbf16, #tpu.memory_space<vmem>>, vector<16x16x32xbf16>
    %c2_45 = arith.constant 2 : index
    %c1_46 = arith.constant 1 : index
    %c0_47 = arith.constant 0 : index
    %29 = vector.load %arg12[%c2_45, %c1_46, %c0_47] : memref<18x18x32xbf16, #tpu.memory_space<vmem>>, vector<16x16x32xbf16>
    %c2_48 = arith.constant 2 : index
    %c2_49 = arith.constant 2 : index
    %c0_50 = arith.constant 0 : index
    %30 = vector.load %arg12[%c2_48, %c2_49, %c0_50] : memref<18x18x32xbf16, #tpu.memory_space<vmem>>, vector<16x16x32xbf16>
    %31 = tpu.concatenate %22, %23, %24, %25, %26, %27, %28, %29, %30 in 2 : vector<16x16x32xbf16>, vector<16x16x32xbf16>, vector<16x16x32xbf16>, vector<16x16x32xbf16>, vector<16x16x32xbf16>, vector<16x16x32xbf16>, vector<16x16x32xbf16>, vector<16x16x32xbf16>, vector<16x16x32xbf16> -> vector<16x16x288xbf16>
    %32 = vector.shape_cast %31 : vector<16x16x288xbf16> to vector<256x288xbf16>
    %c0_51 = arith.constant 0 : index
    %c0_52 = arith.constant 0 : index
    %33 = vector.load %arg3[%c0_51, %c0_52] : memref<288x32xbf16, #tpu.memory_space<vmem>>, vector<288x32xbf16>
    %cst_53 = arith.constant dense<0.000000e+00> : vector<256x32xf32>
    %34 = tpu.matmul %32, %33, %cst_53 {dimension_numbers = #tpu.dot_dimension_numbers<[1], [0], [0], [1], [0, 0, 1, 1], [], []>} : vector<256x288xbf16>, vector<288x32xbf16>, vector<256x32xf32> -> vector<256x32xf32>
    %c0_54 = arith.constant 0 : index
    %c0_55 = arith.constant 0 : index
    %35 = vector.load %arg7[%c0_54, %c0_55] : memref<1x32xf32, #tpu.memory_space<vmem>>, vector<1x32xf32>
    %36 = vector.broadcast %35 : vector<1x32xf32> to vector<256x32xf32>
    %37 = arith.mulf %34, %36 : vector<256x32xf32>
    %c0_56 = arith.constant 0 : index
    %c0_57 = arith.constant 0 : index
    %38 = vector.load %arg8[%c0_56, %c0_57] : memref<1x32xf32, #tpu.memory_space<vmem>>, vector<1x32xf32>
    %39 = vector.broadcast %38 : vector<1x32xf32> to vector<256x32xf32>
    %40 = arith.addf %37, %39 : vector<256x32xf32>
    %cst_58 = arith.constant 0.000000e+00 : f32
    %41 = vector.broadcast %cst_58 : f32 to vector<256x32xf32>
    %42 = arith.maximumf %40, %41 : vector<256x32xf32>
    %43 = arith.truncf %42 : vector<256x32xf32> to vector<256x32xbf16>
    %c0_59 = arith.constant 0 : index
    %c0_60 = arith.constant 0 : index
    %44 = vector.load %arg4[%c0_59, %c0_60] : memref<32x128xbf16, #tpu.memory_space<vmem>>, vector<32x128xbf16>
    %cst_61 = arith.constant dense<0.000000e+00> : vector<256x128xf32>
    %45 = tpu.matmul %43, %44, %cst_61 {dimension_numbers = #tpu.dot_dimension_numbers<[1], [0], [0], [1], [0, 0, 1, 1], [], []>} : vector<256x32xbf16>, vector<32x128xbf16>, vector<256x128xf32> -> vector<256x128xf32>
    %c0_62 = arith.constant 0 : index
    %c0_63 = arith.constant 0 : index
    %46 = vector.load %arg9[%c0_62, %c0_63] : memref<1x128xf32, #tpu.memory_space<vmem>>, vector<1x128xf32>
    %47 = vector.broadcast %46 : vector<1x128xf32> to vector<256x128xf32>
    %48 = arith.mulf %45, %47 : vector<256x128xf32>
    %c0_64 = arith.constant 0 : index
    %c0_65 = arith.constant 0 : index
    %49 = vector.load %arg10[%c0_64, %c0_65] : memref<1x128xf32, #tpu.memory_space<vmem>>, vector<1x128xf32>
    %50 = vector.broadcast %49 : vector<1x128xf32> to vector<256x128xf32>
    %51 = arith.addf %48, %50 : vector<256x128xf32>
    %c0_66 = arith.constant 0 : index
    %c0_67 = arith.constant 0 : index
    %c0_68 = arith.constant 0 : index
    %c0_69 = arith.constant 0 : index
    %52 = vector.load %arg1[%c0_66, %c0_67, %c0_68, %c0_69] : memref<1x16x16x128xbf16, #tpu.memory_space<vmem>>, vector<1x16x16x128xbf16>
    %53 = vector.shape_cast %52 : vector<1x16x16x128xbf16> to vector<16x16x128xbf16>
    %54 = vector.shape_cast %53 : vector<16x16x128xbf16> to vector<256x128xbf16>
    %55 = arith.extf %54 : vector<256x128xbf16> to vector<256x128xf32>
    %56 = arith.addf %51, %55 : vector<256x128xf32>
    %cst_70 = arith.constant 0.000000e+00 : f32
    %57 = vector.broadcast %cst_70 : f32 to vector<256x128xf32>
    %58 = arith.maximumf %56, %57 : vector<256x128xf32>
    %59 = vector.shape_cast %58 : vector<256x128xf32> to vector<16x16x128xf32>
    %c0_71 = arith.constant 0 : index
    %c0_72 = arith.constant 0 : index
    %c0_73 = arith.constant 0 : index
    %c0_74 = arith.constant 0 : index
    %60 = vector.load %arg11[%c0_71, %c0_72, %c0_73, %c0_74] : memref<1x16x16x128xf32, #tpu.memory_space<vmem>>, vector<1x16x16x128xf32>
    %61 = vector.shape_cast %60 : vector<1x16x16x128xf32> to vector<16x16x128xf32>
    %62 = vector.shape_cast %59 : vector<16x16x128xf32> to vector<1x16x16x128xf32>
    tpu.vector_store %arg11[%c0_71, %c0_72, %c0_73, %c0_74], %62 {strides = array<i32>} : memref<1x16x16x128xf32, #tpu.memory_space<vmem>>, vector<1x16x16x128xf32>,
    return
  }
  func.func @transform_0(%arg0: i32) -> (i32, i32, i32, i32) {
    %c0_i32 = arith.constant 0 : i32
    %c0_i32_0 = arith.constant 0 : i32
    %c0_i32_1 = arith.constant 0 : i32
    %c0_i32_2 = arith.constant 0 : i32
    return %arg0, %c0_i32, %c0_i32_0, %c0_i32_1 : i32, i32, i32, i32
  }
  func.func @transform_1(%arg0: i32) -> (i32, i32) {
    %c0_i32 = arith.constant 0 : i32
    %c0_i32_0 = arith.constant 0 : i32
    %c0_i32_1 = arith.constant 0 : i32
    return %c0_i32, %c0_i32_0 : i32, i32
  }
  func.func @transform_2(%arg0: i32) -> (i32, i32) {
    %c0_i32 = arith.constant 0 : i32
    %c0_i32_0 = arith.constant 0 : i32
    %c0_i32_1 = arith.constant 0 : i32
    return %c0_i32, %c0_i32_0 : i32, i32
  }
  func.func @transform_3(%arg0: i32) -> (i32, i32) {
    %c0_i32 = arith.constant 0 : i32
    %c0_i32_0 = arith.constant 0 : i32
    %c0_i32_1 = arith.constant 0 : i32
    return %c0_i32, %c0_i32_0 : i32, i32
  }
  func.func @transform_4(%arg0: i32) -> (i32, i32) {
    %c0_i32 = arith.constant 0 : i32
    %c0_i32_0 = arith.constant 0 : i32
    %c0_i32_1 = arith.constant 0 : i32
    return %c0_i32, %c0_i32_0 : i32, i32
  }
  func.func @transform_5(%arg0: i32) -> (i32, i32) {
    %c0_i32 = arith.constant 0 : i32
    %c0_i32_0 = arith.constant 0 : i32
    %c0_i32_1 = arith.constant 0 : i32
    return %c0_i32, %c0_i32_0 : i32, i32
  }
  func.func @transform_6(%arg0: i32) -> (i32, i32) {
    %c0_i32 = arith.constant 0 : i32
    %c0_i32_0 = arith.constant 0 : i32
    %c0_i32_1 = arith.constant 0 : i32
    return %c0_i32, %c0_i32_0 : i32, i32
  }
  func.func @transform_7(%arg0: i32) -> (i32, i32) {
    %c0_i32 = arith.constant 0 : i32
    %c0_i32_0 = arith.constant 0 : i32
    %c0_i32_1 = arith.constant 0 : i32
    return %c0_i32, %c0_i32_0 : i32, i32
  }
  func.func @transform_8(%arg0: i32) -> (i32, i32) {
    %c0_i32 = arith.constant 0 : i32
    %c0_i32_0 = arith.constant 0 : i32
    %c0_i32_1 = arith.constant 0 : i32
    return %c0_i32, %c0_i32_0 : i32, i32
  }
  func.func @transform_9(%arg0: i32) -> (i32, i32) {
    %c0_i32 = arith.constant 0 : i32
    %c0_i32_0 = arith.constant 0 : i32
    %c0_i32_1 = arith.constant 0 : i32
    return %c0_i32, %c0_i32_0 : i32, i32
  }
  func.func @transform_10(%arg0: i32) -> (i32, i32, i32, i32) {
    %c0_i32 = arith.constant 0 : i32
    %c0_i32_0 = arith.constant 0 : i32
    %c0_i32_1 = arith.constant 0 : i32
    %c0_i32_2 = arith.constant 0 : i32
    return %arg0, %c0_i32, %c0_i32_0, %c0_i32_1 : i32, i32, i32, i32
  }
}

</mosaic_0001>

<llo_original>
// kernel: tpu_custom_call.1
$region0: #{tpu_custom_call.1}
  #allocation0 [shape = 'u32[]', space=smem, size = 0x4, offset = 0x4, fixed_abs, tag = 'smem constant byte address 0x4 - core index']
  #allocation1 [shape = 'u32[144,128]{1,0:T(1,128)}', space=vmem, size = 0x12000, scoped, tag = 'internal scratch']
  #allocation2 [shape = 'bf16[18,18,32]{2,1,0:T(8,128)(2,1)}', space=vmem, size = 0x1b000, scoped, tag = 'scratch operand']
  %s0 = inlined_call_operand.vmem [shape: bf16[2,16,16,128], index: 0, kind: input, shape index: {}]
  %s1 = inlined_call_operand.vmem [shape: bf16[128,32], index: 1, kind: input, shape index: {}]
  %s2 = inlined_call_operand.vmem [shape: bf16[288,32], index: 2, kind: input, shape index: {}]
  %s3 = inlined_call_operand.vmem [shape: bf16[32,128], index: 3, kind: input, shape index: {}]
  %s4 = inlined_call_operand.vmem [shape: f32[1,32], index: 4, kind: input, shape index: {}]
  %s5 = inlined_call_operand.vmem [shape: f32[1,32], index: 5, kind: input, shape index: {}]
  %s6 = inlined_call_operand.vmem [shape: f32[1,32], index: 6, kind: input, shape index: {}]
  %s7 = inlined_call_operand.vmem [shape: f32[1,32], index: 7, kind: input, shape index: {}]
  %s8 = inlined_call_operand.vmem [shape: f32[1,128], index: 8, kind: input, shape index: {}]
  %s9 = inlined_call_operand.vmem [shape: f32[1,128], index: 9, kind: input, shape index: {}]
  %s10 = inlined_call_operand.hbm [shape: f32[2,16,16,128], index: 10, kind: output, shape index: {}]
  %s11 = sld [smem:[#allocation0]]
  $region73: #{tpu_custom_call.1} parent=0
    _
  %s13 = ssub.s32 1, %s11
  %s14 = scalar_select 0, %s13, %s11
  $region1: #{tpu_custom_call.1} parent=0
    #allocation3 [shape = 'u8[262144]{0}', space=vmem, size = 0x40000, scoped, tag = 'output window, operand 0']
    #allocation4 [shape = 's32[2]{0}', space=sflag, size = 0x8, scoped, tag = 'scoped memory for tpu_custom_call.1']
    %15 = vsyncpa [#allocation4], 0
    %s16 = scalar_lea.sflag [#allocation4], 1
    %17 = vsyncpa %s16, 0
    loop: start=0, step=1, limit=4
    $region2: #{tpu_custom_call.1} parent=1 // loop_pre_header
      _
    $region3: #{tpu_custom_call.1} parent=1 // loop_header
      %s19 = sphi 0, %s23
      %p20 = scmp.ge.s32.totalorder %s19, 4
      %s29 = sphi 0, %s31
      %s32 = sphi 0, %s29
      %s33 = sphi 0, %s32
      %s49 = sphi 0, %s33
      %s53 = sphi 0, %s53
      %s55 = sphi 0, %s53
      %s56 = sphi 0, %s55
      %s70 = sphi 0, %s56
      %s74 = sphi 0, %s74
      %s76 = sphi 0, %s74
      %s77 = sphi 0, %s76
      %s91 = sphi 0, %s77
      %s95 = sphi 0, %s95
      %s97 = sphi 0, %s95
      %s98 = sphi 0, %s97
      %s112 = sphi 0, %s98
      %s116 = sphi 0, %s116
      %s118 = sphi 0, %s116
      %s119 = sphi 0, %s118
      %s133 = sphi 0, %s119
      %s137 = sphi 0, %s137
      %s139 = sphi 0, %s137
      %s140 = sphi 0, %s139
      %s154 = sphi 0, %s140
      %s158 = sphi 0, %s158
      %s160 = sphi 0, %s158
      %s161 = sphi 0, %s160
      %s175 = sphi 0, %s161
      %s179 = sphi 0, %s179
      %s181 = sphi 0, %s179
      %s182 = sphi 0, %s181
      %s196 = sphi 0, %s182
      %s200 = sphi 0, %s200
      %s202 = sphi 0, %s200
      %s203 = sphi 0, %s202
      %s217 = sphi 0, %s203
      %s221 = sphi 0, %s221
      %s223 = sphi 0, %s221
      %s224 = sphi 0, %s223
      %s238 = sphi 0, %s224
      %s244 = sphi 0, %s246
      %s247 = sphi 0, %s244
      %s248 = sphi 0, %s247
      %s264 = sphi 0, %s248
    $region4: #{tpu_custom_call.1} parent=1 // loop_header_branch
      %22 = sbr.rel (%p20) target = $region8
    $region5: #{tpu_custom_call.1} parent=1 // loop_body
      %s24 = ssub.s32 %s19, 1
      %s25 = ssub.s32 %s19, 2
      %s26 = sadd.s32 %s19, 1
      %s27 = ssub.s32 %s19, %s26
      %p28 = scmp.eq.s32.totalorder %s27, 0
      %s30 = sadd.s32 %s29, 1
      %s31 = scalar_select %p28, %s29, %s30
      %p34 = pneg %p28
      %p35 = scmp.eq.s32.totalorder %s19, 1
      %p36 = por %p34, %p35
      %p37 = scmp.ne.s32.totalorder %s29, %s32
      %p38 = scmp.eq.s32.totalorder %s19, 0
      %p39 = por %p37, %p38
      %p40 = scmp.ne.s32.totalorder %s29, %s32
      %p41 = scmp.eq.s32.totalorder %s24, 1
      %p42 = por %p40, %p41
      %p43 = scmp.ne.s32.totalorder %s32, %s33
      %p44 = scmp.eq.s32.totalorder %s24, 0
      %p45 = por %p43, %p44
      %p46 = scmp.ne.s32.totalorder %s32, %s33
      %p47 = scmp.eq.s32.totalorder %s25, 1
      %p48 = por %p46, %p47
      %p50 = scmp.ne.s32.totalorder %s33, %s49
      %p51 = scmp.eq.s32.totalorder %s25, 0
      %p52 = por %p50, %p51
      %s54 = sadd.s32 %s53, 1
      %p57 = scmp.eq.s32.totalorder %s19, 1
      %p58 = scmp.ne.s32.totalorder %s53, %s55
      %p59 = scmp.eq.s32.totalorder %s19, 0
      %p60 = por %p58, %p59
      %p61 = scmp.ne.s32.totalorder %s53, %s55
      %p62 = scmp.eq.s32.totalorder %s24, 1
      %p63 = por %p61, %p62
      %p64 = scmp.ne.s32.totalorder %s55, %s56
      %p65 = scmp.eq.s32.totalorder %s24, 0
      %p66 = por %p64, %p65
      %p67 = scmp.ne.s32.totalorder %s55, %s56
      %p68 = scmp.eq.s32.totalorder %s25, 1
      %p69 = por %p67, %p68
      %p71 = scmp.ne.s32.totalorder %s56, %s70
      %p72 = scmp.eq.s32.totalorder %s25, 0
      %p73 = por %p71, %p72
      %s75 = sadd.s32 %s74, 1
      %p78 = scmp.eq.s32.totalorder %s19, 1
      %p79 = scmp.ne.s32.totalorder %s74, %s76
      %p80 = scmp.eq.s32.totalorder %s19, 0
      %p81 = por %p79, %p80
      %p82 = scmp.ne.s32.totalorder %s74, %s76
      %p83 = scmp.eq.s32.totalorder %s24, 1
      %p84 = por %p82, %p83
      %p85 = scmp.ne.s32.totalorder %s76, %s77
      %p86 = scmp.eq.s32.totalorder %s24, 0
      %p87 = por %p85, %p86
      %p88 = scmp.ne.s32.totalorder %s76, %s77
      %p89 = scmp.eq.s32.totalorder %s25, 1
      %p90 = por %p88, %p89
      %p92 = scmp.ne.s32.totalorder %s77, %s91
      %p93 = scmp.eq.s32.totalorder %s25, 0
      %p94 = por %p92, %p93
      %s96 = sadd.s32 %s95, 1
      %p99 = scmp.eq.s32.totalorder %s19, 1
      %p100 = scmp.ne.s32.totalorder %s95, %s97
      %p101 = scmp.eq.s32.totalorder %s19, 0
      %p102 = por %p100, %p101
      %p103 = scmp.ne.s32.totalorder %s95, %s97
      %p104 = scmp.eq.s32.totalorder %s24, 1
      %p105 = por %p103, %p104
      %p106 = scmp.ne.s32.totalorder %s97, %s98
      %p107 = scmp.eq.s32.totalorder %s24, 0
      %p108 = por %p106, %p107
      %p109 = scmp.ne.s32.totalorder %s97, %s98
      %p110 = scmp.eq.s32.totalorder %s25, 1
      %p111 = por %p109, %p110
      %p113 = scmp.ne.s32.totalorder %s98, %s112
      %p114 = scmp.eq.s32.totalorder %s25, 0
      %p115 = por %p113, %p114
      %s117 = sadd.s32 %s116, 1
      %p120 = scmp.eq.s32.totalorder %s19, 1
      %p121 = scmp.ne.s32.totalorder %s116, %s118
      %p122 = scmp.eq.s32.totalorder %s19, 0
      %p123 = por %p121, %p122
      %p124 = scmp.ne.s32.totalorder %s116, %s118
      %p125 = scmp.eq.s32.totalorder %s24, 1
      %p126 = por %p124, %p125
      %p127 = scmp.ne.s32.totalorder %s118, %s119
      %p128 = scmp.eq.s32.totalorder %s24, 0
      %p129 = por %p127, %p128
      %p130 = scmp.ne.s32.totalorder %s118, %s119
      %p131 = scmp.eq.s32.totalorder %s25, 1
      %p132 = por %p130, %p131
      %p134 = scmp.ne.s32.totalorder %s119, %s133
      %p135 = scmp.eq.s32.totalorder %s25, 0
      %p136 = por %p134, %p135
      %s138 = sadd.s32 %s137, 1
      %p141 = scmp.eq.s32.totalorder %s19, 1
      %p142 = scmp.ne.s32.totalorder %s137, %s139
      %p143 = scmp.eq.s32.totalorder %s19, 0
      %p144 = por %p142, %p143
      %p145 = scmp.ne.s32.totalorder %s137, %s139
      %p146 = scmp.eq.s32.totalorder %s24, 1
      %p147 = por %p145, %p146
      %p148 = scmp.ne.s32.totalorder %s139, %s140
      %p149 = scmp.eq.s32.totalorder %s24, 0
      %p150 = por %p148, %p149
      %p151 = scmp.ne.s32.totalorder %s139, %s140
      %p152 = scmp.eq.s32.totalorder %s25, 1
      %p153 = por %p151, %p152
      %p155 = scmp.ne.s32.totalorder %s140, %s154
      %p156 = scmp.eq.s32.totalorder %s25, 0
      %p157 = por %p155, %p156
      %s159 = sadd.s32 %s158, 1
      %p162 = scmp.eq.s32.totalorder %s19, 1
      %p163 = scmp.ne.s32.totalorder %s158, %s160
      %p164 = scmp.eq.s32.totalorder %s19, 0
      %p165 = por %p163, %p164
      %p166 = scmp.ne.s32.totalorder %s158, %s160
      %p167 = scmp.eq.s32.totalorder %s24, 1
      %p168 = por %p166, %p167
      %p169 = scmp.ne.s32.totalorder %s160, %s161
      %p170 = scmp.eq.s32.totalorder %s24, 0
      %p171 = por %p169, %p170
      %p172 = scmp.ne.s32.totalorder %s160, %s161
      %p173 = scmp.eq.s32.totalorder %s25, 1
      %p174 = por %p172, %p173
      %p176 = scmp.ne.s32.totalorder %s161, %s175
      %p177 = scmp.eq.s32.totalorder %s25, 0
      %p178 = por %p176, %p177
      %s180 = sadd.s32 %s179, 1
      %p183 = scmp.eq.s32.totalorder %s19, 1
      %p184 = scmp.ne.s32.totalorder %s179, %s181
      %p185 = scmp.eq.s32.totalorder %s19, 0
      %p186 = por %p184, %p185
      %p187 = scmp.ne.s32.totalorder %s179, %s181
      %p188 = scmp.eq.s32.totalorder %s24, 1
      %p189 = por %p187, %p188
      %p190 = scmp.ne.s32.totalorder %s181, %s182
      %p191 = scmp.eq.s32.totalorder %s24, 0
      %p192 = por %p190, %p191
      %p193 = scmp.ne.s32.totalorder %s181, %s182
      %p194 = scmp.eq.s32.totalorder %s25, 1
      %p195 = por %p193, %p194
      %p197 = scmp.ne.s32.totalorder %s182, %s196
      %p198 = scmp.eq.s32.totalorder %s25, 0
      %p199 = por %p197, %p198
      %s201 = sadd.s32 %s200, 1
      %p204 = scmp.eq.s32.totalorder %s19, 1
      %p205 = scmp.ne.s32.totalorder %s200, %s202
      %p206 = scmp.eq.s32.totalorder %s19, 0
      %p207 = por %p205, %p206
      %p208 = scmp.ne.s32.totalorder %s200, %s202
      %p209 = scmp.eq.s32.totalorder %s24, 1
      %p210 = por %p208, %p209
      %p211 = scmp.ne.s32.totalorder %s202, %s203
      %p212 = scmp.eq.s32.totalorder %s24, 0
      %p213 = por %p211, %p212
      %p214 = scmp.ne.s32.totalorder %s202, %s203
      %p215 = scmp.eq.s32.totalorder %s25, 1
      %p216 = por %p214, %p215
      %p218 = scmp.ne.s32.totalorder %s203, %s217
      %p219 = scmp.eq.s32.totalorder %s25, 0
      %p220 = por %p218, %p219
      %s222 = sadd.s32 %s221, 1
      %p225 = scmp.eq.s32.totalorder %s19, 1
      %p226 = scmp.ne.s32.totalorder %s221, %s223
      %p227 = scmp.eq.s32.totalorder %s19, 0
      %p228 = por %p226, %p227
      %p229 = scmp.ne.s32.totalorder %s221, %s223
      %p230 = scmp.eq.s32.totalorder %s24, 1
      %p231 = por %p229, %p230
      %p232 = scmp.ne.s32.totalorder %s223, %s224
      %p233 = scmp.eq.s32.totalorder %s24, 0
      %p234 = por %p232, %p233
      %p235 = scmp.ne.s32.totalorder %s223, %s224
      %p236 = scmp.eq.s32.totalorder %s25, 1
      %p237 = por %p235, %p236
      %p239 = scmp.ne.s32.totalorder %s224, %s238
      %p240 = scmp.eq.s32.totalorder %s25, 0
      %p241 = por %p239, %p240
      %s242 = ssub.s32 %s19, %s26
      %p243 = scmp.eq.s32.totalorder %s242, 0
      %s245 = sadd.s32 %s244, 1
      %s246 = scalar_select %p243, %s244, %s245
      %p249 = pneg %p243
      %p250 = scmp.eq.s32.totalorder %s19, 1
      %p251 = por %p249, %p250
      %p252 = scmp.ne.s32.totalorder %s244, %s247
      %p253 = scmp.eq.s32.totalorder %s19, 0
      %p254 = por %p252, %p253
      %p255 = scmp.ne.s32.totalorder %s244, %s247
      %p256 = scmp.eq.s32.totalorder %s24, 1
      %p257 = por %p255, %p256
      %p258 = scmp.ne.s32.totalorder %s247, %s248
      %p259 = scmp.eq.s32.totalorder %s24, 0
      %p260 = por %p258, %p259
      %p261 = scmp.ne.s32.totalorder %s247, %s248
      %p262 = scmp.eq.s32.totalorder %s25, 1
      %p263 = por %p261, %p262
      %p265 = scmp.ne.s32.totalorder %s248, %s264
      %p266 = scmp.eq.s32.totalorder %s25, 0
      %p267 = por %p265, %p266
      %p268 = scmp.le.s32.totalorder 1, %s19
      %p269 = scmp.lt.s32.totalorder %s19, 3
      %p270 = pnand %p268, %p269
      %p271 = pneg %p270
      // Predicated region
      $region9: #{tpu_custom_call.1} parent=5 // pred_check
        _
      $region10: #{tpu_custom_call.1} parent=5 // pred_check_branch
        %273 = sbr.rel (%p270) target = $region12
      $region11: #{tpu_custom_call.1} parent=5 // pred_region
        %s274 = ssub.s32 %s19, 1
        // Predicated region
        $region13: #{tpu_custom_call.1} parent=11 // pred_check
          %p275 = pneg %p66
        $region14: #{tpu_custom_call.1} parent=11 // pred_check_branch
          %277 = sbr.rel (%p275) target = $region16
        $region15: #{tpu_custom_call.1} parent=11 // pred_region
          _
        $region16: #{tpu_custom_call.1} parent=11 // pred_fallthru
          _
        // Predicated region
        $region17: #{tpu_custom_call.1} parent=11 // pred_check
          %p278 = pneg %p87
        $region18: #{tpu_custom_call.1} parent=11 // pred_check_branch
          %280 = sbr.rel (%p278) target = $region20
        $region19: #{tpu_custom_call.1} parent=11 // pred_region
          _
        $region20: #{tpu_custom_call.1} parent=11 // pred_fallthru
          _
        // Predicated region
        $region21: #{tpu_custom_call.1} parent=11 // pred_check
          %p281 = pneg %p108
        $region22: #{tpu_custom_call.1} parent=11 // pred_check_branch
          %283 = sbr.rel (%p281) target = $region24
        $region23: #{tpu_custom_call.1} parent=11 // pred_region
          _
        $region24: #{tpu_custom_call.1} parent=11 // pred_fallthru
          _
        // Predicated region
        $region25: #{tpu_custom_call.1} parent=11 // pred_check
          %p284 = pneg %p129
        $region26: #{tpu_custom_call.1} parent=11 // pred_check_branch
          %286 = sbr.rel (%p284) target = $region28
        $region27: #{tpu_custom_call.1} parent=11 // pred_region
          _
        $region28: #{tpu_custom_call.1} parent=11 // pred_fallthru
          _
        // Predicated region
        $region29: #{tpu_custom_call.1} parent=11 // pred_check
          %p287 = pneg %p150
        $region30: #{tpu_custom_call.1} parent=11 // pred_check_branch
          %289 = sbr.rel (%p287) target = $region32
        $region31: #{tpu_custom_call.1} parent=11 // pred_region
          _
        $region32: #{tpu_custom_call.1} parent=11 // pred_fallthru
          _
        // Predicated region
        $region33: #{tpu_custom_call.1} parent=11 // pred_check
          %p290 = pneg %p171
        $region34: #{tpu_custom_call.1} parent=11 // pred_check_branch
          %292 = sbr.rel (%p290) target = $region36
        $region35: #{tpu_custom_call.1} parent=11 // pred_region
          _
        $region36: #{tpu_custom_call.1} parent=11 // pred_fallthru
          _
        // Predicated region
        $region37: #{tpu_custom_call.1} parent=11 // pred_check
          %p293 = pneg %p192
        $region38: #{tpu_custom_call.1} parent=11 // pred_check_branch
          %295 = sbr.rel (%p293) target = $region40
        $region39: #{tpu_custom_call.1} parent=11 // pred_region
          _
        $region40: #{tpu_custom_call.1} parent=11 // pred_fallthru
          _
        // Predicated region
        $region41: #{tpu_custom_call.1} parent=11 // pred_check
          %p296 = pneg %p213
        $region42: #{tpu_custom_call.1} parent=11 // pred_check_branch
          %298 = sbr.rel (%p296) target = $region44
        $region43: #{tpu_custom_call.1} parent=11 // pred_region
          _
        $region44: #{tpu_custom_call.1} parent=11 // pred_fallthru
          _
        // Predicated region
        $region45: #{tpu_custom_call.1} parent=11 // pred_check
          %p299 = pneg %p234
        $region46: #{tpu_custom_call.1} parent=11 // pred_check_branch
          %301 = sbr.rel (%p299) target = $region48
        $region47: #{tpu_custom_call.1} parent=11 // pred_region
          _
        $region48: #{tpu_custom_call.1} parent=11 // pred_fallthru
          _
      $region12: #{tpu_custom_call.1} parent=5 // pred_fallthru
        _
      %p302 = scmp.lt.s32.totalorder %s19, 2
      // Predicated region
      $region49: #{tpu_custom_call.1} parent=5 // pred_check
        %p303 = pneg %p302
      $region50: #{tpu_custom_call.1} parent=5 // pred_check_branch
        %305 = sbr.rel (%p303) target = $region52
      $region51: #{tpu_custom_call.1} parent=5 // pred_region
        // Predicated region
        $region53: #{tpu_custom_call.1} parent=51 // pred_check
          %p306 = pneg %p39
        $region54: #{tpu_custom_call.1} parent=51 // pred_check_branch
          %308 = sbr.rel (%p306) target = $region56
        $region55: #{tpu_custom_call.1} parent=51 // pred_region
          %p309 = scmp.lt.s32.totalorder %s19, 1
          %s310 = scalar_select %p309, %s19, 1
          %s311 = smul.addr %s310, 32
          %s312 = smul.addr %s311, 4
          %s313 = scalar_lea.vmem %s0, %s312
        $region56: #{tpu_custom_call.1} parent=51 // pred_fallthru
          _
      $region52: #{tpu_custom_call.1} parent=5 // pred_fallthru
        _
      %p314 = scmp.le.s32.totalorder 1, %s19
      %p315 = scmp.lt.s32.totalorder %s19, 3
      %p316 = pnand %p314, %p315
      %p317 = pneg %p316
      // Predicated region
      $region57: #{tpu_custom_call.1} parent=5 // pred_check
        _
      $region58: #{tpu_custom_call.1} parent=5 // pred_check_branch
        %319 = sbr.rel (%p316) target = $region60
      $region59: #{tpu_custom_call.1} parent=5 // pred_region
        %s320 = ssub.s32 %s19, 1
        %p321 = scmp.lt.s32.totalorder %s24, 1
        %s322 = scalar_select %p321, %s24, 1
        %s323 = smul.addr %s322, 32
        %s324 = smul.addr %s323, 4
        %s325 = scalar_lea.vmem %s0, %s324
        %p326 = pneg %p45
        %p327 = pneg %p42
        %p328 = pneg %p66
        %p329 = pneg %p63
        %p330 = pneg %p87
        %p331 = pneg %p84
        %p332 = pneg %p108
        %p333 = pneg %p105
        %p334 = pneg %p129
        %p335 = pneg %p126
        %p336 = pneg %p150
        %p337 = pneg %p147
        %p338 = pneg %p171
        %p339 = pneg %p168
        %p340 = pneg %p192
        %p341 = pneg %p189
        %p342 = pneg %p213
        %p343 = pneg %p210
        %p344 = pneg %p234
        %p345 = pneg %p231
        %p346 = pneg %p260
        %p347 = pneg %p257
        %s348 = sand.u32 %s247, 1
        %s349 = scalar_lea.sflag [#allocation4], %s348
        %s350 = sand.u32 %s247, 1
        %s351 = smul.addr %s350, 256
        %s352 = scalar_lea.vmem [#allocation3], %s351
        %p353 = scmp.lt.s32.totalorder %s24, 1
        %s354 = scalar_select %p353, %s24, 1
        %s355 = smul.addr %s354, 32
        %s356 = smul.addr %s355, 4
        %s357 = scalar_lea.vmem %s0, %s356
        %v359 = vld [vmem:[%s357] sm:$0xf]
        %v360 = vld [vmem:[%s357 + $0x4] sm:$0xf]
        %v361 = vld [vmem:[%s357 + $0x8] sm:$0xf]
        %v362 = vld [vmem:[%s357 + $0xc] sm:$0xf]
        %v363 = vld [vmem:[%s357 + $0x10] sm:$0xf]
        %v364 = vld [vmem:[%s357 + $0x14] sm:$0xf]
        %v365 = vld [vmem:[%s357 + $0x18] sm:$0xf]
        %v366 = vld [vmem:[%s357 + $0x1c] sm:$0xf]
        %v367 = vld [vmem:[%s357 + $0x20] sm:$0xf]
        %v368 = vld [vmem:[%s357 + $0x24] sm:$0xf]
        %v369 = vld [vmem:[%s357 + $0x28] sm:$0xf]
        %v370 = vld [vmem:[%s357 + $0x2c] sm:$0xf]
        %v371 = vld [vmem:[%s357 + $0x30] sm:$0xf]
        %v372 = vld [vmem:[%s357 + $0x34] sm:$0xf]
        %v373 = vld [vmem:[%s357 + $0x38] sm:$0xf]
        %v374 = vld [vmem:[%s357 + $0x3c] sm:$0xf]
        %v375 = vld [vmem:[%s357 + $0x40] sm:$0xf]
        %v376 = vld [vmem:[%s357 + $0x44] sm:$0xf]
        %v377 = vld [vmem:[%s357 + $0x48] sm:$0xf]
        %v378 = vld [vmem:[%s357 + $0x4c] sm:$0xf]
        %v379 = vld [vmem:[%s357 + $0x50] sm:$0xf]
        %v380 = vld [vmem:[%s357 + $0x54] sm:$0xf]
        %v381 = vld [vmem:[%s357 + $0x58] sm:$0xf]
        %v382 = vld [vmem:[%s357 + $0x5c] sm:$0xf]
        %v383 = vld [vmem:[%s357 + $0x60] sm:$0xf]
        %v384 = vld [vmem:[%s357 + $0x64] sm:$0xf]
        %v385 = vld [vmem:[%s357 + $0x68] sm:$0xf]
        %v386 = vld [vmem:[%s357 + $0x6c] sm:$0xf]
        %v387 = vld [vmem:[%s357 + $0x70] sm:$0xf]
        %v388 = vld [vmem:[%s357 + $0x74] sm:$0xf]
        %v389 = vld [vmem:[%s357 + $0x78] sm:$0xf]
        %v390 = vld [vmem:[%s357 + $0x7c] sm:$0xf]
        %v391 = vld [vmem:[%s1] sm:$0xf]
        %v392 = vld [vmem:[%s1 + $0x4] sm:$0xf]
        %v393 = vld [vmem:[%s1 + $0x8] sm:$0xf]
        %v394 = vld [vmem:[%s1 + $0xc] sm:$0xf]
        %v395 = vld [vmem:[%s1 + $0x10] sm:$0xf]
        %v396 = vld [vmem:[%s1 + $0x14] sm:$0xf]
        %v397 = vld [vmem:[%s1 + $0x18] sm:$0xf]
        %v398 = vld [vmem:[%s1 + $0x1c] sm:$0xf]
        %v399 = vld [vmem:[%s1 + $0x20] sm:$0xf]
        %v400 = vld [vmem:[%s1 + $0x24] sm:$0xf]
        %v401 = vld [vmem:[%s1 + $0x28] sm:$0xf]
        %v402 = vld [vmem:[%s1 + $0x2c] sm:$0xf]
        %v403 = vld [vmem:[%s1 + $0x30] sm:$0xf]
        %v404 = vld [vmem:[%s1 + $0x34] sm:$0xf]
        %v405 = vld [vmem:[%s1 + $0x38] sm:$0xf]
        %v406 = vld [vmem:[%s1 + $0x3c] sm:$0xf]
        %v439 = vunpack.c.l.b16 %v359
        %v440 = vunpack.c.l.b16 %v360
        %v441 = vunpack.c.l.b16 %v361
        %v442 = vunpack.c.l.b16 %v362
        %v443 = vunpack.c.l.b16 %v363
        %v444 = vunpack.c.l.b16 %v364
        %v445 = vunpack.c.l.b16 %v365
        %v446 = vunpack.c.l.b16 %v366
        %v447 = vunpack.c.l.b16 %v367
        %v448 = vunpack.c.l.b16 %v368
        %v449 = vunpack.c.l.b16 %v369
        %v450 = vunpack.c.l.b16 %v370
        %v451 = vunpack.c.l.b16 %v371
        %v452 = vunpack.c.l.b16 %v372
        %v453 = vunpack.c.l.b16 %v373
        %v454 = vunpack.c.l.b16 %v374
        %v455 = vunpack.c.l.b16 %v375
        %v456 = vunpack.c.l.b16 %v376
        %v457 = vunpack.c.l.b16 %v377
        %v458 = vunpack.c.l.b16 %v378
        %v459 = vunpack.c.l.b16 %v379
        %v460 = vunpack.c.l.b16 %v380
        %v461 = vunpack.c.l.b16 %v381
        %v462 = vunpack.c.l.b16 %v382
        %v463 = vunpack.c.l.b16 %v383
        %v464 = vunpack.c.l.b16 %v384
        %v465 = vunpack.c.l.b16 %v385
        %v466 = vunpack.c.l.b16 %v386
        %v467 = vunpack.c.l.b16 %v387
        %v468 = vunpack.c.l.b16 %v388
        %v469 = vunpack.c.l.b16 %v389
        %v470 = vunpack.c.l.b16 %v390
        %v471 = vpack.c.b16 %v440, %v439
        %v472 = vpack.c.b16 %v442, %v441
        %v473 = vpack.c.b16 %v444, %v443
        %v474 = vpack.c.b16 %v446, %v445
        %v475 = vpack.c.b16 %v448, %v447
        %v476 = vpack.c.b16 %v450, %v449
        %v477 = vpack.c.b16 %v452, %v451
        %v478 = vpack.c.b16 %v454, %v453
        %v479 = vpack.c.b16 %v456, %v455
        %v480 = vpack.c.b16 %v458, %v457
        %v481 = vpack.c.b16 %v460, %v459
        %v482 = vpack.c.b16 %v462, %v461
        %v483 = vpack.c.b16 %v464, %v463
        %v484 = vpack.c.b16 %v466, %v465
        %v485 = vpack.c.b16 %v468, %v467
        %v486 = vpack.c.b16 %v470, %v469
        %v519 = vunpack.c.l.b16 %v391
        %v520 = vunpack.c.l.b16 %v392
        %v521 = vunpack.c.l.b16 %v393
        %v522 = vunpack.c.l.b16 %v394
        %v523 = vunpack.c.l.b16 %v395
        %v524 = vunpack.c.l.b16 %v396
        %v525 = vunpack.c.l.b16 %v397
        %v526 = vunpack.c.l.b16 %v398
        %v527 = vunpack.c.l.b16 %v399
        %v528 = vunpack.c.l.b16 %v400
        %v529 = vunpack.c.l.b16 %v401
        %v530 = vunpack.c.l.b16 %v402
        %v531 = vunpack.c.l.b16 %v403
        %v532 = vunpack.c.l.b16 %v404
        %v533 = vunpack.c.l.b16 %v405
        %v534 = vunpack.c.l.b16 %v406
        %v535 = vpack.c.b16 %v520, %v519
        %v536 = vpack.c.b16 %v522, %v521
        %v537 = vpack.c.b16 %v524, %v523
        %v538 = vpack.c.b16 %v526, %v525
        %v539 = vpack.c.b16 %v528, %v527
        %v540 = vpack.c.b16 %v530, %v529
        %v541 = vpack.c.b16 %v532, %v531
        %v542 = vpack.c.b16 %v534, %v533
        %551 = vmatprep.subr.bf16.mxu0 0
        %552 = vmatpush1.bf16.msra.mxu0 %v535
        %553 = vmatprep.subr.bf16.mxu0 0
        %554 = vmatpush1.bf16.msra.mxu0 %v536
        %555 = vmatprep.subr.bf16.mxu0 0
        %556 = vmatpush1.bf16.msra.mxu0 %v537
        %557 = vmatprep.subr.bf16.mxu0 0
        %558 = vmatpush1.bf16.msra.mxu0 %v538
        %559 = vmatprep.subr.bf16.mxu0 0
        %560 = vmatpush1.bf16.msra.mxu0 %v539
        %561 = vmatprep.subr.bf16.mxu0 0
        %562 = vmatpush1.bf16.msra.mxu0 %v540
        %563 = vmatprep.subr.bf16.mxu0 0
        %564 = vmatpush1.bf16.msra.mxu0 %v541
        %565 = vmatprep.subr.bf16.mxu0 0
        %566 = vmatpush1.bf16.msra.mxu0 %v542
        %567 = vmatprep.subr.bf16.mxu0 0
        %568 = vmatpush1.bf16.msra.mxu0 0
        %569 = vmatprep.subr.bf16.mxu0 0
        %570 = vmatpush1.bf16.msra.mxu0 0
        %571 = vmatprep.subr.bf16.mxu0 0
        %572 = vmatpush1.bf16.msra.mxu0 0
        %573 = vmatprep.subr.bf16.mxu0 0
        %574 = vmatpush1.bf16.msra.mxu0 0
        %575 = vmatprep.subr.bf16.mxu0 0
        %576 = vmatpush1.bf16.msra.mxu0 0
        %577 = vmatprep.subr.bf16.mxu0 0
        %578 = vmatpush1.bf16.msra.mxu0 0
        %579 = vmatprep.subr.bf16.mxu0 0
        %580 = vmatpush1.bf16.msra.mxu0 0
        %581 = vmatprep.subr.bf16.mxu0 0
        %582 = vmatpush1.bf16.msra.mxu0 0
        %583 = vmatprep.mubr.bf16.mxu0 0
        %584 = vmatmul.mubr.bf16.gmra.mrb[0].mxu0 %v471
        %v585 = vpop.f32.mrb[0].mxu0
        %v586 = vadd.f32 0.0, %v585
        %v587 = vpop.f32.mrb[0].mxu0
        %v588 = vpop.f32.mrb[0].mxu0
        %v589 = vadd.f32 0.0, %v588
        %v590 = vpop.f32.mrb[0].mxu0
        %591 = vmatprep.mubr.bf16.mxu0 0
        %592 = vmatmul.mubr.bf16.gmra.mrb[0].mxu0 %v472
        %v593 = vpop.f32.mrb[0].mxu0
        %v594 = vadd.f32 0.0, %v593
        %v595 = vpop.f32.mrb[0].mxu0
        %v596 = vpop.f32.mrb[0].mxu0
        %v597 = vadd.f32 0.0, %v596
        %v598 = vpop.f32.mrb[0].mxu0
        %599 = vmatprep.mubr.bf16.mxu0 0
        %600 = vmatmul.mubr.bf16.gmra.mrb[0].mxu0 %v473
        %v601 = vpop.f32.mrb[0].mxu0
        %v602 = vadd.f32 0.0, %v601
        %v603 = vpop.f32.mrb[0].mxu0
        %v604 = vpop.f32.mrb[0].mxu0
        %v605 = vadd.f32 0.0, %v604
        %v606 = vpop.f32.mrb[0].mxu0
        %607 = vmatprep.mubr.bf16.mxu0 0
        %608 = vmatmul.mubr.bf16.gmra.mrb[0].mxu0 %v474
        %v609 = vpop.f32.mrb[0].mxu0
        %v610 = vadd.f32 0.0, %v609
        %v611 = vpop.f32.mrb[0].mxu0
        %v612 = vpop.f32.mrb[0].mxu0
        %v613 = vadd.f32 0.0, %v612
        %v614 = vpop.f32.mrb[0].mxu0
        %615 = vmatprep.mubr.bf16.mxu0 0
        %616 = vmatmul.mubr.bf16.gmra.mrb[0].mxu0 %v475
        %v617 = vpop.f32.mrb[0].mxu0
        %v618 = vadd.f32 0.0, %v617
        %v619 = vpop.f32.mrb[0].mxu0
        %v620 = vpop.f32.mrb[0].mxu0
        %v621 = vadd.f32 0.0, %v620
        %v622 = vpop.f32.mrb[0].mxu0
        %623 = vmatprep.mubr.bf16.mxu0 0
        %624 = vmatmul.mubr.bf16.gmra.mrb[0].mxu0 %v476
        %v625 = vpop.f32.mrb[0].mxu0
        %v626 = vadd.f32 0.0, %v625
        %v627 = vpop.f32.mrb[0].mxu0
        %v628 = vpop.f32.mrb[0].mxu0
        %v629 = vadd.f32 0.0, %v628
        %v630 = vpop.f32.mrb[0].mxu0
        %631 = vmatprep.mubr.bf16.mxu0 0
        %632 = vmatmul.mubr.bf16.gmra.mrb[0].mxu0 %v477
        %v633 = vpop.f32.mrb[0].mxu0
        %v634 = vadd.f32 0.0, %v633
        %v635 = vpop.f32.mrb[0].mxu0
        %v636 = vpop.f32.mrb[0].mxu0
        %v637 = vadd.f32 0.0, %v636
        %v638 = vpop.f32.mrb[0].mxu0
        %639 = vmatprep.mubr.bf16.mxu0 0
        %640 = vmatmul.mubr.bf16.gmra.mrb[0].mxu0 %v478
        %v641 = vpop.f32.mrb[0].mxu0
        %v642 = vadd.f32 0.0, %v641
        %v643 = vpop.f32.mrb[0].mxu0
        %v644 = vpop.f32.mrb[0].mxu0
        %v645 = vadd.f32 0.0, %v644
        %v646 = vpop.f32.mrb[0].mxu0
        %647 = vmatprep.mubr.bf16.mxu0 0
        %648 = vmatmul.mubr.bf16.gmra.mrb[0].mxu0 %v479
        %v649 = vpop.f32.mrb[0].mxu0
        %v650 = vadd.f32 0.0, %v649
        %v651 = vpop.f32.mrb[0].mxu0
        %v652 = vpop.f32.mrb[0].mxu0
        %v653 = vadd.f32 0.0, %v652
        %v654 = vpop.f32.mrb[0].mxu0
        %655 = vmatprep.mubr.bf16.mxu0 0
        %656 = vmatmul.mubr.bf16.gmra.mrb[0].mxu0 %v480
        %v657 = vpop.f32.mrb[0].mxu0
        %v658 = vadd.f32 0.0, %v657
        %v659 = vpop.f32.mrb[0].mxu0
        %v660 = vpop.f32.mrb[0].mxu0
        %v661 = vadd.f32 0.0, %v660
        %v662 = vpop.f32.mrb[0].mxu0
        %663 = vmatprep.mubr.bf16.mxu0 0
        %664 = vmatmul.mubr.bf16.gmra.mrb[0].mxu0 %v481
        %v665 = vpop.f32.mrb[0].mxu0
        %v666 = vadd.f32 0.0, %v665
        %v667 = vpop.f32.mrb[0].mxu0
        %v668 = vpop.f32.mrb[0].mxu0
        %v669 = vadd.f32 0.0, %v668
        %v670 = vpop.f32.mrb[0].mxu0
        %671 = vmatprep.mubr.bf16.mxu0 0
        %672 = vmatmul.mubr.bf16.gmra.mrb[0].mxu0 %v482
        %v673 = vpop.f32.mrb[0].mxu0
        %v674 = vadd.f32 0.0, %v673
        %v675 = vpop.f32.mrb[0].mxu0
        %v676 = vpop.f32.mrb[0].mxu0
        %v677 = vadd.f32 0.0, %v676
        %v678 = vpop.f32.mrb[0].mxu0
        %679 = vmatprep.mubr.bf16.mxu0 0
        %680 = vmatmul.mubr.bf16.gmra.mrb[0].mxu0 %v483
        %v681 = vpop.f32.mrb[0].mxu0
        %v682 = vadd.f32 0.0, %v681
        %v683 = vpop.f32.mrb[0].mxu0
        %v684 = vpop.f32.mrb[0].mxu0
        %v685 = vadd.f32 0.0, %v684
        %v686 = vpop.f32.mrb[0].mxu0
        %687 = vmatprep.mubr.bf16.mxu0 0
        %688 = vmatmul.mubr.bf16.gmra.mrb[0].mxu0 %v484
        %v689 = vpop.f32.mrb[0].mxu0
        %v690 = vadd.f32 0.0, %v689
        %v691 = vpop.f32.mrb[0].mxu0
        %v692 = vpop.f32.mrb[0].mxu0
        %v693 = vadd.f32 0.0, %v692
        %v694 = vpop.f32.mrb[0].mxu0
        %695 = vmatprep.mubr.bf16.mxu0 0
        %696 = vmatmul.mubr.bf16.gmra.mrb[0].mxu0 %v485
        %v697 = vpop.f32.mrb[0].mxu0
        %v698 = vadd.f32 0.0, %v697
        %v699 = vpop.f32.mrb[0].mxu0
        %v700 = vpop.f32.mrb[0].mxu0
        %v701 = vadd.f32 0.0, %v700
        %v702 = vpop.f32.mrb[0].mxu0
        %703 = vmatprep.mubr.bf16.mxu0 0
        %704 = vmatmul.mubr.bf16.gmra.mrb[0].mxu0 %v486
        %v705 = vpop.f32.mrb[0].mxu0
        %v706 = vadd.f32 0.0, %v705
        %v707 = vpop.f32.mrb[0].mxu0
        %v708 = vpop.f32.mrb[0].mxu0
        %v709 = vadd.f32 0.0, %v708
        %v710 = vpop.f32.mrb[0].mxu0
        %711 = vdwg.mxu0
        %v712 = vld [vmem:[%s4] sm:$0x1]
        %v714 = vlaneseq
        %v715 = vshrl.u32 %v714, 7
        %v716 = vsub.s32 0, %v715
        %v717 = vrot.slane %v712, %v716
        %v719 = vmul.f32 %v586, %v717
        %v720 = vmul.f32 %v589, %v717
        %v721 = vmul.f32 %v594, %v717
        %v722 = vmul.f32 %v597, %v717
        %v723 = vmul.f32 %v602, %v717
        %v724 = vmul.f32 %v605, %v717
        %v725 = vmul.f32 %v610, %v717
        %v726 = vmul.f32 %v613, %v717
        %v727 = vmul.f32 %v618, %v717
        %v728 = vmul.f32 %v621, %v717
        %v729 = vmul.f32 %v626, %v717
        %v730 = vmul.f32 %v629, %v717
        %v731 = vmul.f32 %v634, %v717
        %v732 = vmul.f32 %v637, %v717
        %v733 = vmul.f32 %v642, %v717
        %v734 = vmul.f32 %v645, %v717
        %v735 = vmul.f32 %v650, %v717
        %v736 = vmul.f32 %v653, %v717
        %v737 = vmul.f32 %v658, %v717
        %v738 = vmul.f32 %v661, %v717
        %v739 = vmul.f32 %v666, %v717
        %v740 = vmul.f32 %v669, %v717
        %v741 = vmul.f32 %v674, %v717
        %v742 = vmul.f32 %v677, %v717
        %v743 = vmul.f32 %v682, %v717
        %v744 = vmul.f32 %v685, %v717
        %v745 = vmul.f32 %v690, %v717
        %v746 = vmul.f32 %v693, %v717
        %v747 = vmul.f32 %v698, %v717
        %v748 = vmul.f32 %v701, %v717
        %v749 = vmul.f32 %v706, %v717
        %v750 = vmul.f32 %v709, %v717
        %v751 = vld [vmem:[%s5] sm:$0x1]
        %v753 = vlaneseq
        %v754 = vshrl.u32 %v753, 7
        %v755 = vsub.s32 0, %v754
        %v756 = vrot.slane %v751, %v755
        %v758 = vadd.f32 %v719, %v756
        %v759 = vadd.f32 %v720, %v756
        %v760 = vadd.f32 %v721, %v756
        %v761 = vadd.f32 %v722, %v756
        %v762 = vadd.f32 %v723, %v756
        %v763 = vadd.f32 %v724, %v756
        %v764 = vadd.f32 %v725, %v756
        %v765 = vadd.f32 %v726, %v756
        %v766 = vadd.f32 %v727, %v756
        %v767 = vadd.f32 %v728, %v756
        %v768 = vadd.f32 %v729, %v756
        %v769 = vadd.f32 %v730, %v756
        %v770 = vadd.f32 %v731, %v756
        %v771 = vadd.f32 %v732, %v756
        %v772 = vadd.f32 %v733, %v756
        %v773 = vadd.f32 %v734, %v756
        %v774 = vadd.f32 %v735, %v756
        %v775 = vadd.f32 %v736, %v756
        %v776 = vadd.f32 %v737, %v756
        %v777 = vadd.f32 %v738, %v756
        %v778 = vadd.f32 %v739, %v756
        %v779 = vadd.f32 %v740, %v756
        %v780 = vadd.f32 %v741, %v756
        %v781 = vadd.f32 %v742, %v756
        %v782 = vadd.f32 %v743, %v756
        %v783 = vadd.f32 %v744, %v756
        %v784 = vadd.f32 %v745, %v756
        %v785 = vadd.f32 %v746, %v756
        %v786 = vadd.f32 %v747, %v756
        %v787 = vadd.f32 %v748, %v756
        %v788 = vadd.f32 %v749, %v756
        %v789 = vadd.f32 %v750, %v756
        %v790 = vmax.f32 %v758, 0.0
        %v791 = vmax.f32 %v759, 0.0
        %v792 = vmax.f32 %v760, 0.0
        %v793 = vmax.f32 %v761, 0.0
        %v794 = vmax.f32 %v762, 0.0
        %v795 = vmax.f32 %v763, 0.0
        %v796 = vmax.f32 %v764, 0.0
        %v797 = vmax.f32 %v765, 0.0
        %v798 = vmax.f32 %v766, 0.0
        %v799 = vmax.f32 %v767, 0.0
        %v800 = vmax.f32 %v768, 0.0
        %v801 = vmax.f32 %v769, 0.0
        %v802 = vmax.f32 %v770, 0.0
        %v803 = vmax.f32 %v771, 0.0
        %v804 = vmax.f32 %v772, 0.0
        %v805 = vmax.f32 %v773, 0.0
        %v806 = vmax.f32 %v774, 0.0
        %v807 = vmax.f32 %v775, 0.0
        %v808 = vmax.f32 %v776, 0.0
        %v809 = vmax.f32 %v777, 0.0
        %v810 = vmax.f32 %v778, 0.0
        %v811 = vmax.f32 %v779, 0.0
        %v812 = vmax.f32 %v780, 0.0
        %v813 = vmax.f32 %v781, 0.0
        %v814 = vmax.f32 %v782, 0.0
        %v815 = vmax.f32 %v783, 0.0
        %v816 = vmax.f32 %v784, 0.0
        %v817 = vmax.f32 %v785, 0.0
        %v818 = vmax.f32 %v786, 0.0
        %v819 = vmax.f32 %v787, 0.0
        %v820 = vmax.f32 %v788, 0.0
        %v821 = vmax.f32 %v789, 0.0
        %vm822 = vcmask 257024
        %823 = vst.msk [vmem:[#allocation2] sm:$0xf] %vm822, 0
        %824 = vst.msk [vmem:[#allocation2 + $0x4] sm:$0xf] %vm822, 0
        %vm825 = vcmask 253952
        %826 = vst.msk [vmem:[#allocation2 + $0x8] sm:$0x1] %vm825, 0
        %s827 = scalar_lea.vmem [#allocation2], 204
        %828 = vst.msk [vmem:[%s827] sm:$0xf] %vm822, 0
        %829 = vst.msk [vmem:[%s827 + $0x4] sm:$0xf] %vm822, 0
        %830 = vst.msk [vmem:[%s827 + $0x8] sm:$0x1] %vm825, 0
        %vm831 = vcmask 253952
        %vm832 = vsmask.f32 256
        %vm833 = vmand %vm831, %vm832
        %v834 = vld [vmem:[#allocation2] sm:$0x1]
        %v835 = vsel %vm833, 0, %v834
        %836 = vst [vmem:[#allocation2] sm:$0x1] %v835
        %v837 = vld [vmem:[#allocation2 + $0xc] sm:$0x1]
        %v838 = vsel %vm833, 0, %v837
        %839 = vst [vmem:[#allocation2 + $0xc] sm:$0x1] %v838
        %v840 = vld [vmem:[#allocation2 + $0x18] sm:$0x1]
        %v841 = vsel %vm833, 0, %v840
        %842 = vst [vmem:[#allocation2 + $0x18] sm:$0x1] %v841
        %v843 = vld [vmem:[#allocation2 + $0x24] sm:$0x1]
        %v844 = vsel %vm833, 0, %v843
        %845 = vst [vmem:[#allocation2 + $0x24] sm:$0x1] %v844
        %v846 = vld [vmem:[#allocation2 + $0x30] sm:$0x1]
        %v847 = vsel %vm833, 0, %v846
        %848 = vst [vmem:[#allocation2 + $0x30] sm:$0x1] %v847
        %v849 = vld [vmem:[#allocation2 + $0x3c] sm:$0x1]
        %v850 = vsel %vm833, 0, %v849
        %851 = vst [vmem:[#allocation2 + $0x3c] sm:$0x1] %v850
        %v852 = vld [vmem:[#allocation2 + $0x48] sm:$0x1]
        %v853 = vsel %vm833, 0, %v852
        %854 = vst [vmem:[#allocation2 + $0x48] sm:$0x1] %v853
        %v855 = vld [vmem:[#allocation2 + $0x54] sm:$0x1]
        %v856 = vsel %vm833, 0, %v855
        %857 = vst [vmem:[#allocation2 + $0x54] sm:$0x1] %v856
        %v858 = vld [vmem:[#allocation2 + $0x60] sm:$0x1]
        %v859 = vsel %vm833, 0, %v858
        %860 = vst [vmem:[#allocation2 + $0x60] sm:$0x1] %v859
        %v861 = vld [vmem:[#allocation2 + $0x6c] sm:$0x1]
        %v862 = vsel %vm833, 0, %v861
        %863 = vst [vmem:[#allocation2 + $0x6c] sm:$0x1] %v862
        %v864 = vld [vmem:[#allocation2 + $0x78] sm:$0x1]
        %v865 = vsel %vm833, 0, %v864
        %866 = vst [vmem:[#allocation2 + $0x78] sm:$0x1] %v865
        %v867 = vld [vmem:[#allocation2 + $0x84] sm:$0x1]
        %v868 = vsel %vm833, 0, %v867
        %869 = vst [vmem:[#allocation2 + $0x84] sm:$0x1] %v868
        %v870 = vld [vmem:[#allocation2 + $0x90] sm:$0x1]
        %v871 = vsel %vm833, 0, %v870
        %872 = vst [vmem:[#allocation2 + $0x90] sm:$0x1] %v871
        %v873 = vld [vmem:[#allocation2 + $0x9c] sm:$0x1]
        %v874 = vsel %vm833, 0, %v873
        %875 = vst [vmem:[#allocation2 + $0x9c] sm:$0x1] %v874
        %v876 = vld [vmem:[#allocation2 + $0xa8] sm:$0x1]
        %v877 = vsel %vm833, 0, %v876
        %878 = vst [vmem:[#allocation2 + $0xa8] sm:$0x1] %v877
        %v879 = vld [vmem:[#allocation2 + $0xb4] sm:$0x1]
        %v880 = vsel %vm833, 0, %v879
        %881 = vst [vmem:[#allocation2 + $0xb4] sm:$0x1] %v880
        %v882 = vld [vmem:[#allocation2 + $0xc0] sm:$0x1]
        %v883 = vsel %vm833, 0, %v882
        %884 = vst [vmem:[#allocation2 + $0xc0] sm:$0x1] %v883
        %v885 = vld [vmem:[#allocation2 + $0xcc] sm:$0x1]
        %v886 = vsel %vm833, 0, %v885
        %887 = vst [vmem:[#allocation2 + $0xcc] sm:$0x1] %v886
        %vm888 = vsmask.f32 7938
        %vm889 = vmand %vm831, %vm888
        %v890 = vld [vmem:[#allocation2 + $0x8] sm:$0x1]
        %v891 = vsel %vm889, 0, %v890
        %892 = vst [vmem:[#allocation2 + $0x8] sm:$0x1] %v891
        %v893 = vld [vmem:[#allocation2 + $0x14] sm:$0x1]
        %v894 = vsel %vm889, 0, %v893
        %895 = vst [vmem:[#allocation2 + $0x14] sm:$0x1] %v894
        %v896 = vld [vmem:[#allocation2 + $0x20] sm:$0x1]
        %v897 = vsel %vm889, 0, %v896
        %898 = vst [vmem:[#allocation2 + $0x20] sm:$0x1] %v897
        %v899 = vld [vmem:[#allocation2 + $0x2c] sm:$0x1]
        %v900 = vsel %vm889, 0, %v899
        %901 = vst [vmem:[#allocation2 + $0x2c] sm:$0x1] %v900
        %v902 = vld [vmem:[#allocation2 + $0x38] sm:$0x1]
        %v903 = vsel %vm889, 0, %v902
        %904 = vst [vmem:[#allocation2 + $0x38] sm:$0x1] %v903
        %v905 = vld [vmem:[#allocation2 + $0x44] sm:$0x1]
        %v906 = vsel %vm889, 0, %v905
        %907 = vst [vmem:[#allocation2 + $0x44] sm:$0x1] %v906
        %v908 = vld [vmem:[#allocation2 + $0x50] sm:$0x1]
        %v909 = vsel %vm889, 0, %v908
        %910 = vst [vmem:[#allocation2 + $0x50] sm:$0x1] %v909
        %v911 = vld [vmem:[#allocation2 + $0x5c] sm:$0x1]
        %v912 = vsel %vm889, 0, %v911
        %913 = vst [vmem:[#allocation2 + $0x5c] sm:$0x1] %v912
        %v914 = vld [vmem:[#allocation2 + $0x68] sm:$0x1]
        %v915 = vsel %vm889, 0, %v914
        %916 = vst [vmem:[#allocation2 + $0x68] sm:$0x1] %v915
        %v917 = vld [vmem:[#allocation2 + $0x74] sm:$0x1]
        %v918 = vsel %vm889, 0, %v917
        %919 = vst [vmem:[#allocation2 + $0x74] sm:$0x1] %v918
        %v920 = vld [vmem:[#allocation2 + $0x80] sm:$0x1]
        %v921 = vsel %vm889, 0, %v920
        %922 = vst [vmem:[#allocation2 + $0x80] sm:$0x1] %v921
        %v923 = vld [vmem:[#allocation2 + $0x8c] sm:$0x1]
        %v924 = vsel %vm889, 0, %v923
        %925 = vst [vmem:[#allocation2 + $0x8c] sm:$0x1] %v924
        %v926 = vld [vmem:[#allocation2 + $0x98] sm:$0x1]
        %v927 = vsel %vm889, 0, %v926
        %928 = vst [vmem:[#allocation2 + $0x98] sm:$0x1] %v927
        %v929 = vld [vmem:[#allocation2 + $0xa4] sm:$0x1]
        %v930 = vsel %vm889, 0, %v929
        %931 = vst [vmem:[#allocation2 + $0xa4] sm:$0x1] %v930
        %v932 = vld [vmem:[#allocation2 + $0xb0] sm:$0x1]
        %v933 = vsel %vm889, 0, %v932
        %934 = vst [vmem:[#allocation2 + $0xb0] sm:$0x1] %v933
        %v935 = vld [vmem:[#allocation2 + $0xbc] sm:$0x1]
        %v936 = vsel %vm889, 0, %v935
        %937 = vst [vmem:[#allocation2 + $0xbc] sm:$0x1] %v936
        %v938 = vld [vmem:[#allocation2 + $0xc8] sm:$0x1]
        %v939 = vsel %vm889, 0, %v938
        %940 = vst [vmem:[#allocation2 + $0xc8] sm:$0x1] %v939
        %v941 = vld [vmem:[#allocation2 + $0xd4] sm:$0x1]
        %v942 = vsel %vm889, 0, %v941
        %943 = vst [vmem:[#allocation2 + $0xd4] sm:$0x1] %v942
        %v944 = vpack.c.bf16 %v791, %v790
        %v945 = vpack.c.bf16 %v793, %v792
        %v946 = vpack.c.bf16 %v795, %v794
        %v947 = vpack.c.bf16 %v797, %v796
        %v948 = vpack.c.bf16 %v799, %v798
        %v949 = vpack.c.bf16 %v801, %v800
        %v950 = vpack.c.bf16 %v803, %v802
        %v951 = vpack.c.bf16 %v805, %v804
        %v952 = vpack.c.bf16 %v807, %v806
        %v953 = vpack.c.bf16 %v809, %v808
        %v954 = vpack.c.bf16 %v811, %v810
        %v955 = vpack.c.bf16 %v813, %v812
        %v956 = vpack.c.bf16 %v815, %v814
        %v957 = vpack.c.bf16 %v817, %v816
        %v958 = vpack.c.bf16 %v819, %v818
        %v959 = vpack.c.bf16 %v821, %v820
        %v976 = vunpack.c.l.b16 %v944
        %v977 = vunpack.c.h.b16 %v944
        %v978 = vunpack.c.l.b16 %v945
        %v979 = vunpack.c.h.b16 %v945
        %v980 = vunpack.c.l.b16 %v946
        %v981 = vunpack.c.h.b16 %v946
        %v982 = vunpack.c.l.b16 %v947
        %v983 = vunpack.c.h.b16 %v947
        %v984 = vunpack.c.l.b16 %v948
        %v985 = vunpack.c.h.b16 %v948
        %v986 = vunpack.c.l.b16 %v949
        %v987 = vunpack.c.h.b16 %v949
        %v988 = vunpack.c.l.b16 %v950
        %v989 = vunpack.c.h.b16 %v950
        %v990 = vunpack.c.l.b16 %v951
        %v991 = vunpack.c.h.b16 %v951
        %v992 = vunpack.c.l.b16 %v952
        %v993 = vunpack.c.h.b16 %v952
        %v994 = vunpack.c.l.b16 %v953
        %v995 = vunpack.c.h.b16 %v953
        %v996 = vunpack.c.l.b16 %v954
        %v997 = vunpack.c.h.b16 %v954
        %v998 = vunpack.c.l.b16 %v955
        %v999 = vunpack.c.h.b16 %v955
        %v1000 = vunpack.c.l.b16 %v956
        %v1001 = vunpack.c.h.b16 %v956
        %v1002 = vunpack.c.l.b16 %v957
        %v1003 = vunpack.c.h.b16 %v957
        %v1004 = vunpack.c.l.b16 %v958
        %v1005 = vunpack.c.h.b16 %v958
        %v1006 = vunpack.c.l.b16 %v959
        %v1007 = vunpack.c.h.b16 %v959
        %v1008 = vpack.c.b16 %v976, %v976
        %v1009 = vpack.c.b16 %v977, %v977
        %v1010 = vpack.c.b16 %v978, %v978
        %v1011 = vpack.c.b16 %v979, %v979
        %v1012 = vpack.c.b16 %v980, %v980
        %v1013 = vpack.c.b16 %v981, %v981
        %v1014 = vpack.c.b16 %v982, %v982
        %v1015 = vpack.c.b16 %v983, %v983
        %v1016 = vpack.c.b16 %v984, %v984
        %v1017 = vpack.c.b16 %v985, %v985
        %v1018 = vpack.c.b16 %v986, %v986
        %v1019 = vpack.c.b16 %v987, %v987
        %v1020 = vpack.c.b16 %v988, %v988
        %v1021 = vpack.c.b16 %v989, %v989
        %v1022 = vpack.c.b16 %v990, %v990
        %v1023 = vpack.c.b16 %v991, %v991
        %v1024 = vpack.c.b16 %v992, %v992
        %v1025 = vpack.c.b16 %v993, %v993
        %v1026 = vpack.c.b16 %v994, %v994
        %v1027 = vpack.c.b16 %v995, %v995
        %v1028 = vpack.c.b16 %v996, %v996
        %v1029 = vpack.c.b16 %v997, %v997
        %v1030 = vpack.c.b16 %v998, %v998
        %v1031 = vpack.c.b16 %v999, %v999
        %v1032 = vpack.c.b16 %v1000, %v1000
        %v1033 = vpack.c.b16 %v1001, %v1001
        %v1034 = vpack.c.b16 %v1002, %v1002
        %v1035 = vpack.c.b16 %v1003, %v1003
        %v1036 = vpack.c.b16 %v1004, %v1004
        %v1037 = vpack.c.b16 %v1005, %v1005
        %v1038 = vpack.c.b16 %v1006, %v1006
        %v1039 = vpack.c.b16 %v1007, %v1007
        %vm1040 = vsmask.f32 4368
        %vm1041 = vmor %vm832, %vm1040
        %v1043 = vshrl.u32 %v1008, 16
        %v1045 = vrot.slane %v1043, 7
        %v1046 = vshll.u32 %v1008, 16
        %v1048 = vor.u32 %v1045, %v1046
        %v1049 = vrot.slane %v1045, 4
        %v1051 = vshrl.u32 %v1009, 16
        %v1053 = vrot.slane %v1051, 7
        %v1054 = vshll.u32 %v1009, 16
        %v1056 = vor.u32 %v1053, %v1054
        %v1057 = vsel %vm1041, %v1049, %v1056
        %v1058 = vrot.slane %v1053, 4
        %v1060 = vshrl.u32 %v1010, 16
        %v1062 = vrot.slane %v1060, 7
        %v1063 = vshll.u32 %v1010, 16
        %v1065 = vor.u32 %v1062, %v1063
        %v1066 = vrot.slane %v1062, 4
        %v1068 = vshrl.u32 %v1011, 16
        %v1070 = vrot.slane %v1068, 7
        %v1071 = vshll.u32 %v1011, 16
        %v1073 = vor.u32 %v1070, %v1071
        %v1074 = vsel %vm1041, %v1066, %v1073
        %v1075 = vrot.slane %v1070, 4
        %v1077 = vshrl.u32 %v1012, 16
        %v1079 = vrot.slane %v1077, 7
        %v1080 = vshll.u32 %v1012, 16
        %v1082 = vor.u32 %v1079, %v1080
        %v1083 = vrot.slane %v1079, 4
        %v1085 = vshrl.u32 %v1013, 16
        %v1087 = vrot.slane %v1085, 7
        %v1088 = vshll.u32 %v1013, 16
        %v1090 = vor.u32 %v1087, %v1088
        %v1091 = vsel %vm1041, %v1083, %v1090
        %v1092 = vrot.slane %v1087, 4
        %v1094 = vshrl.u32 %v1014, 16
        %v1096 = vrot.slane %v1094, 7
        %v1097 = vshll.u32 %v1014, 16
        %v1099 = vor.u32 %v1096, %v1097
        %v1100 = vrot.slane %v1096, 4
        %v1102 = vshrl.u32 %v1015, 16
        %v1104 = vrot.slane %v1102, 7
        %v1105 = vshll.u32 %v1015, 16
        %v1107 = vor.u32 %v1104, %v1105
        %v1108 = vsel %vm1041, %v1100, %v1107
        %v1109 = vrot.slane %v1104, 4
        %v1111 = vshrl.u32 %v1016, 16
        %v1113 = vrot.slane %v1111, 7
        %v1114 = vshll.u32 %v1016, 16
        %v1116 = vor.u32 %v1113, %v1114
        %v1117 = vrot.slane %v1113, 4
        %v1119 = vshrl.u32 %v1017, 16
        %v1121 = vrot.slane %v1119, 7
        %v1122 = vshll.u32 %v1017, 16
        %v1124 = vor.u32 %v1121, %v1122
        %v1125 = vsel %vm1041, %v1117, %v1124
        %v1126 = vrot.slane %v1121, 4
        %v1128 = vshrl.u32 %v1018, 16
        %v1130 = vrot.slane %v1128, 7
        %v1131 = vshll.u32 %v1018, 16
        %v1133 = vor.u32 %v1130, %v1131
        %v1134 = vrot.slane %v1130, 4
        %v1136 = vshrl.u32 %v1019, 16
        %v1138 = vrot.slane %v1136, 7
        %v1139 = vshll.u32 %v1019, 16
        %v1141 = vor.u32 %v1138, %v1139
        %v1142 = vsel %vm1041, %v1134, %v1141
        %v1143 = vrot.slane %v1138, 4
        %v1145 = vshrl.u32 %v1020, 16
        %v1147 = vrot.slane %v1145, 7
        %v1148 = vshll.u32 %v1020, 16
        %v1150 = vor.u32 %v1147, %v1148
        %v1151 = vrot.slane %v1147, 4
        %v1153 = vshrl.u32 %v1021, 16
        %v1155 = vrot.slane %v1153, 7
        %v1156 = vshll.u32 %v1021, 16
        %v1158 = vor.u32 %v1155, %v1156
        %v1159 = vsel %vm1041, %v1151, %v1158
        %v1160 = vrot.slane %v1155, 4
        %v1162 = vshrl.u32 %v1022, 16
        %v1164 = vrot.slane %v1162, 7
        %v1165 = vshll.u32 %v1022, 16
        %v1167 = vor.u32 %v1164, %v1165
        %v1168 = vrot.slane %v1164, 4
        %v1170 = vshrl.u32 %v1023, 16
        %v1172 = vrot.slane %v1170, 7
        %v1173 = vshll.u32 %v1023, 16
        %v1175 = vor.u32 %v1172, %v1173
        %v1176 = vsel %vm1041, %v1168, %v1175
        %v1177 = vrot.slane %v1172, 4
        %v1179 = vshrl.u32 %v1024, 16
        %v1181 = vrot.slane %v1179, 7
        %v1182 = vshll.u32 %v1024, 16
        %v1184 = vor.u32 %v1181, %v1182
        %v1185 = vrot.slane %v1181, 4
        %v1187 = vshrl.u32 %v1025, 16
        %v1189 = vrot.slane %v1187, 7
        %v1190 = vshll.u32 %v1025, 16
        %v1192 = vor.u32 %v1189, %v1190
        %v1193 = vsel %vm1041, %v1185, %v1192
        %v1194 = vrot.slane %v1189, 4
        %v1196 = vshrl.u32 %v1026, 16
        %v1198 = vrot.slane %v1196, 7
        %v1199 = vshll.u32 %v1026, 16
        %v1201 = vor.u32 %v1198, %v1199
        %v1202 = vrot.slane %v1198, 4
        %v1204 = vshrl.u32 %v1027, 16
        %v1206 = vrot.slane %v1204, 7
        %v1207 = vshll.u32 %v1027, 16
        %v1209 = vor.u32 %v1206, %v1207
        %v1210 = vsel %vm1041, %v1202, %v1209
        %v1211 = vrot.slane %v1206, 4
        %v1213 = vshrl.u32 %v1028, 16
        %v1215 = vrot.slane %v1213, 7
        %v1216 = vshll.u32 %v1028, 16
        %v1218 = vor.u32 %v1215, %v1216
        %v1219 = vrot.slane %v1215, 4
        %v1221 = vshrl.u32 %v1029, 16
        %v1223 = vrot.slane %v1221, 7
        %v1224 = vshll.u32 %v1029, 16
        %v1226 = vor.u32 %v1223, %v1224
        %v1227 = vsel %vm1041, %v1219, %v1226
        %v1228 = vrot.slane %v1223, 4
        %v1230 = vshrl.u32 %v1030, 16
        %v1232 = vrot.slane %v1230, 7
        %v1233 = vshll.u32 %v1030, 16
        %v1235 = vor.u32 %v1232, %v1233
        %v1236 = vrot.slane %v1232, 4
        %v1238 = vshrl.u32 %v1031, 16
        %v1240 = vrot.slane %v1238, 7
        %v1241 = vshll.u32 %v1031, 16
        %v1243 = vor.u32 %v1240, %v1241
        %v1244 = vsel %vm1041, %v1236, %v1243
        %v1245 = vrot.slane %v1240, 4
        %v1247 = vshrl.u32 %v1032, 16
        %v1249 = vrot.slane %v1247, 7
        %v1250 = vshll.u32 %v1032, 16
        %v1252 = vor.u32 %v1249, %v1250
        %v1253 = vrot.slane %v1249, 4
        %v1255 = vshrl.u32 %v1033, 16
        %v1257 = vrot.slane %v1255, 7
        %v1258 = vshll.u32 %v1033, 16
        %v1260 = vor.u32 %v1257, %v1258
        %v1261 = vsel %vm1041, %v1253, %v1260
        %v1262 = vrot.slane %v1257, 4
        %v1264 = vshrl.u32 %v1034, 16
        %v1266 = vrot.slane %v1264, 7
        %v1267 = vshll.u32 %v1034, 16
        %v1269 = vor.u32 %v1266, %v1267
        %v1270 = vrot.slane %v1266, 4
        %v1272 = vshrl.u32 %v1035, 16
        %v1274 = vrot.slane %v1272, 7
        %v1275 = vshll.u32 %v1035, 16
        %v1277 = vor.u32 %v1274, %v1275
        %v1278 = vsel %vm1041, %v1270, %v1277
        %v1279 = vrot.slane %v1274, 4
        %v1281 = vshrl.u32 %v1036, 16
        %v1283 = vrot.slane %v1281, 7
        %v1284 = vshll.u32 %v1036, 16
        %v1286 = vor.u32 %v1283, %v1284
        %v1287 = vrot.slane %v1283, 4
        %v1289 = vshrl.u32 %v1037, 16
        %v1291 = vrot.slane %v1289, 7
        %v1292 = vshll.u32 %v1037, 16
        %v1294 = vor.u32 %v1291, %v1292
        %v1295 = vsel %vm1041, %v1287, %v1294
        %v1296 = vrot.slane %v1291, 4
        %v1298 = vshrl.u32 %v1038, 16
        %v1300 = vrot.slane %v1298, 7
        %v1301 = vshll.u32 %v1038, 16
        %v1303 = vor.u32 %v1300, %v1301
        %v1304 = vrot.slane %v1300, 4
        %v1306 = vshrl.u32 %v1039, 16
        %v1308 = vrot.slane %v1306, 7
        %v1309 = vshll.u32 %v1039, 16
        %v1311 = vor.u32 %v1308, %v1309
        %v1312 = vsel %vm1041, %v1304, %v1311
        %v1313 = vrot.slane %v1308, 4
        %s1362 = scalar_lea.vmem [#allocation2], 12
        %vm1363 = vcmask 257024
        %vm1364 = vmand %vm1363, %vm888
        %v1365 = vld [vmem:[%s1362] sm:$0xf]
        %v1366 = vsel %vm1364, %v1048, %v1365
        %1367 = vst [vmem:[%s1362] sm:$0xf] %v1366
        %1368 = vst.msk [vmem:[%s1362 + $0x4] sm:$0xf] %vm822, %v1057
        %v1369 = vld [vmem:[%s1362 + $0x8] sm:$0x1]
        %v1370 = vsel %vm833, %v1058, %v1369
        %1371 = vst [vmem:[%s1362 + $0x8] sm:$0x1] %v1370
        %v1372 = vld [vmem:[%s1362 + $0xc] sm:$0xf]
        %v1373 = vsel %vm1364, %v1065, %v1372
        %1374 = vst [vmem:[%s1362 + $0xc] sm:$0xf] %v1373
        %1375 = vst.msk [vmem:[%s1362 + $0x10] sm:$0xf] %vm822, %v1074
        %v1376 = vld [vmem:[%s1362 + $0x14] sm:$0x1]
        %v1377 = vsel %vm833, %v1075, %v1376
        %1378 = vst [vmem:[%s1362 + $0x14] sm:$0x1] %v1377
        %v1379 = vld [vmem:[%s1362 + $0x18] sm:$0xf]
        %v1380 = vsel %vm1364, %v1082, %v1379
        %1381 = vst [vmem:[%s1362 + $0x18] sm:$0xf] %v1380
        %1382 = vst.msk [vmem:[%s1362 + $0x1c] sm:$0xf] %vm822, %v1091
        %v1383 = vld [vmem:[%s1362 + $0x20] sm:$0x1]
        %v1384 = vsel %vm833, %v1092, %v1383
        %1385 = vst [vmem:[%s1362 + $0x20] sm:$0x1] %v1384
        %v1386 = vld [vmem:[%s1362 + $0x24] sm:$0xf]
        %v1387 = vsel %vm1364, %v1099, %v1386
        %1388 = vst [vmem:[%s1362 + $0x24] sm:$0xf] %v1387
        %1389 = vst.msk [vmem:[%s1362 + $0x28] sm:$0xf] %vm822, %v1108
        %v1390 = vld [vmem:[%s1362 + $0x2c] sm:$0x1]
        %v1391 = vsel %vm833, %v1109, %v1390
        %1392 = vst [vmem:[%s1362 + $0x2c] sm:$0x1] %v1391
        %v1393 = vld [vmem:[%s1362 + $0x30] sm:$0xf]
        %v1394 = vsel %vm1364, %v1116, %v1393
        %1395 = vst [vmem:[%s1362 + $0x30] sm:$0xf] %v1394
        %1396 = vst.msk [vmem:[%s1362 + $0x34] sm:$0xf] %vm822, %v1125
        %v1397 = vld [vmem:[%s1362 + $0x38] sm:$0x1]
        %v1398 = vsel %vm833, %v1126, %v1397
        %1399 = vst [vmem:[%s1362 + $0x38] sm:$0x1] %v1398
        %v1400 = vld [vmem:[%s1362 + $0x3c] sm:$0xf]
        %v1401 = vsel %vm1364, %v1133, %v1400
        %1402 = vst [vmem:[%s1362 + $0x3c] sm:$0xf] %v1401
        %1403 = vst.msk [vmem:[%s1362 + $0x40] sm:$0xf] %vm822, %v1142
        %v1404 = vld [vmem:[%s1362 + $0x44] sm:$0x1]
        %v1405 = vsel %vm833, %v1143, %v1404
        %1406 = vst [vmem:[%s1362 + $0x44] sm:$0x1] %v1405
        %v1407 = vld [vmem:[%s1362 + $0x48] sm:$0xf]
        %v1408 = vsel %vm1364, %v1150, %v1407
        %1409 = vst [vmem:[%s1362 + $0x48] sm:$0xf] %v1408
        %1410 = vst.msk [vmem:[%s1362 + $0x4c] sm:$0xf] %vm822, %v1159
        %v1411 = vld [vmem:[%s1362 + $0x50] sm:$0x1]
        %v1412 = vsel %vm833, %v1160, %v1411
        %1413 = vst [vmem:[%s1362 + $0x50] sm:$0x1] %v1412
        %v1414 = vld [vmem:[%s1362 + $0x54] sm:$0xf]
        %v1415 = vsel %vm1364, %v1167, %v1414
        %1416 = vst [vmem:[%s1362 + $0x54] sm:$0xf] %v1415
        %1417 = vst.msk [vmem:[%s1362 + $0x58] sm:$0xf] %vm822, %v1176
        %v1418 = vld [vmem:[%s1362 + $0x5c] sm:$0x1]
        %v1419 = vsel %vm833, %v1177, %v1418
        %1420 = vst [vmem:[%s1362 + $0x5c] sm:$0x1] %v1419
        %v1421 = vld [vmem:[%s1362 + $0x60] sm:$0xf]
        %v1422 = vsel %vm1364, %v1184, %v1421
        %1423 = vst [vmem:[%s1362 + $0x60] sm:$0xf] %v1422
        %1424 = vst.msk [vmem:[%s1362 + $0x64] sm:$0xf] %vm822, %v1193
        %v1425 = vld [vmem:[%s1362 + $0x68] sm:$0x1]
        %v1426 = vsel %vm833, %v1194, %v1425
        %1427 = vst [vmem:[%s1362 + $0x68] sm:$0x1] %v1426
        %v1428 = vld [vmem:[%s1362 + $0x6c] sm:$0xf]
        %v1429 = vsel %vm1364, %v1201, %v1428
        %1430 = vst [vmem:[%s1362 + $0x6c] sm:$0xf] %v1429
        %1431 = vst.msk [vmem:[%s1362 + $0x70] sm:$0xf] %vm822, %v1210
        %v1432 = vld [vmem:[%s1362 + $0x74] sm:$0x1]
        %v1433 = vsel %vm833, %v1211, %v1432
        %1434 = vst [vmem:[%s1362 + $0x74] sm:$0x1] %v1433
        %v1435 = vld [vmem:[%s1362 + $0x78] sm:$0xf]
        %v1436 = vsel %vm1364, %v1218, %v1435
        %1437 = vst [vmem:[%s1362 + $0x78] sm:$0xf] %v1436
        %1438 = vst.msk [vmem:[%s1362 + $0x7c] sm:$0xf] %vm822, %v1227
        %v1439 = vld [vmem:[%s1362 + $0x80] sm:$0x1]
        %v1440 = vsel %vm833, %v1228, %v1439
        %1441 = vst [vmem:[%s1362 + $0x80] sm:$0x1] %v1440
        %v1442 = vld [vmem:[%s1362 + $0x84] sm:$0xf]
        %v1443 = vsel %vm1364, %v1235, %v1442
        %1444 = vst [vmem:[%s1362 + $0x84] sm:$0xf] %v1443
        %1445 = vst.msk [vmem:[%s1362 + $0x88] sm:$0xf] %vm822, %v1244
        %v1446 = vld [vmem:[%s1362 + $0x8c] sm:$0x1]
        %v1447 = vsel %vm833, %v1245, %v1446
        %1448 = vst [vmem:[%s1362 + $0x8c] sm:$0x1] %v1447
        %v1449 = vld [vmem:[%s1362 + $0x90] sm:$0xf]
        %v1450 = vsel %vm1364, %v1252, %v1449
        %1451 = vst [vmem:[%s1362 + $0x90] sm:$0xf] %v1450
        %1452 = vst.msk [vmem:[%s1362 + $0x94] sm:$0xf] %vm822, %v1261
        %v1453 = vld [vmem:[%s1362 + $0x98] sm:$0x1]
        %v1454 = vsel %vm833, %v1262, %v1453
        %1455 = vst [vmem:[%s1362 + $0x98] sm:$0x1] %v1454
        %v1456 = vld [vmem:[%s1362 + $0x9c] sm:$0xf]
        %v1457 = vsel %vm1364, %v1269, %v1456
        %1458 = vst [vmem:[%s1362 + $0x9c] sm:$0xf] %v1457
        %1459 = vst.msk [vmem:[%s1362 + $0xa0] sm:$0xf] %vm822, %v1278
        %v1460 = vld [vmem:[%s1362 + $0xa4] sm:$0x1]
        %v1461 = vsel %vm833, %v1279, %v1460
        %1462 = vst [vmem:[%s1362 + $0xa4] sm:$0x1] %v1461
        %v1463 = vld [vmem:[%s1362 + $0xa8] sm:$0xf]
        %v1464 = vsel %vm1364, %v1286, %v1463
        %1465 = vst [vmem:[%s1362 + $0xa8] sm:$0xf] %v1464
        %1466 = vst.msk [vmem:[%s1362 + $0xac] sm:$0xf] %vm822, %v1295
        %v1467 = vld [vmem:[%s1362 + $0xb0] sm:$0x1]
        %v1468 = vsel %vm833, %v1296, %v1467
        %1469 = vst [vmem:[%s1362 + $0xb0] sm:$0x1] %v1468
        %v1470 = vld [vmem:[%s1362 + $0xb4] sm:$0xf]
        %v1471 = vsel %vm1364, %v1303, %v1470
        %1472 = vst [vmem:[%s1362 + $0xb4] sm:$0xf] %v1471
        %1473 = vst.msk [vmem:[%s1362 + $0xb8] sm:$0xf] %vm822, %v1312
        %v1474 = vld [vmem:[%s1362 + $0xbc] sm:$0x1]
        %v1475 = vsel %vm833, %v1313, %v1474
        %1476 = vst [vmem:[%s1362 + $0xbc] sm:$0x1] %v1475
        %v1477 = vld [vmem:[#allocation2] sm:$0xf]
        %v1478 = vld [vmem:[#allocation2 + $0x4] sm:$0xf]
        %v1479 = vld [vmem:[#allocation2 + $0xc] sm:$0xf]
        %v1480 = vld [vmem:[#allocation2 + $0x10] sm:$0xf]
        %v1481 = vld [vmem:[#allocation2 + $0x18] sm:$0xf]
        %v1482 = vld [vmem:[#allocation2 + $0x1c] sm:$0xf]
        %v1483 = vld [vmem:[#allocation2 + $0x24] sm:$0xf]
        %v1484 = vld [vmem:[#allocation2 + $0x28] sm:$0xf]
        %v1485 = vld [vmem:[#allocation2 + $0x30] sm:$0xf]
        %v1486 = vld [vmem:[#allocation2 + $0x34] sm:$0xf]
        %v1487 = vld [vmem:[#allocation2 + $0x3c] sm:$0xf]
        %v1488 = vld [vmem:[#allocation2 + $0x40] sm:$0xf]
        %v1489 = vld [vmem:[#allocation2 + $0x48] sm:$0xf]
        %v1490 = vld [vmem:[#allocation2 + $0x4c] sm:$0xf]
        %v1491 = vld [vmem:[#allocation2 + $0x54] sm:$0xf]
        %v1492 = vld [vmem:[#allocation2 + $0x58] sm:$0xf]
        %v1493 = vld [vmem:[#allocation2 + $0x60] sm:$0xf]
        %v1494 = vld [vmem:[#allocation2 + $0x64] sm:$0xf]
        %v1495 = vld [vmem:[#allocation2 + $0x6c] sm:$0xf]
        %v1496 = vld [vmem:[#allocation2 + $0x70] sm:$0xf]
        %v1497 = vld [vmem:[#allocation2 + $0x78] sm:$0xf]
        %v1498 = vld [vmem:[#allocation2 + $0x7c] sm:$0xf]
        %v1499 = vld [vmem:[#allocation2 + $0x84] sm:$0xf]
        %v1500 = vld [vmem:[#allocation2 + $0x88] sm:$0xf]
        %v1501 = vld [vmem:[#allocation2 + $0x90] sm:$0xf]
        %v1502 = vld [vmem:[#allocation2 + $0x94] sm:$0xf]
        %v1503 = vld [vmem:[#allocation2 + $0x9c] sm:$0xf]
        %v1504 = vld [vmem:[#allocation2 + $0xa0] sm:$0xf]
        %v1505 = vld [vmem:[#allocation2 + $0xa8] sm:$0xf]
        %v1506 = vld [vmem:[#allocation2 + $0xac] sm:$0xf]
        %v1507 = vld [vmem:[#allocation2 + $0xb4] sm:$0xf]
        %v1508 = vld [vmem:[#allocation2 + $0xb8] sm:$0xf]
        %v1509 = vld [vmem:[#allocation2 + $0x8] sm:$0x1]
        %v1510 = vld [vmem:[#allocation2 + $0x14] sm:$0x1]
        %v1511 = vld [vmem:[#allocation2 + $0x20] sm:$0x1]
        %v1512 = vld [vmem:[#allocation2 + $0x2c] sm:$0x1]
        %v1513 = vld [vmem:[#allocation2 + $0x38] sm:$0x1]
        %v1514 = vld [vmem:[#allocation2 + $0x44] sm:$0x1]
        %v1515 = vld [vmem:[#allocation2 + $0x50] sm:$0x1]
        %v1516 = vld [vmem:[#allocation2 + $0x5c] sm:$0x1]
        %v1517 = vld [vmem:[#allocation2 + $0x68] sm:$0x1]
        %v1518 = vld [vmem:[#allocation2 + $0x74] sm:$0x1]
        %v1519 = vld [vmem:[#allocation2 + $0x80] sm:$0x1]
        %v1520 = vld [vmem:[#allocation2 + $0x8c] sm:$0x1]
        %v1521 = vld [vmem:[#allocation2 + $0x98] sm:$0x1]
        %v1522 = vld [vmem:[#allocation2 + $0xa4] sm:$0x1]
        %v1523 = vld [vmem:[#allocation2 + $0xb0] sm:$0x1]
        %v1524 = vld [vmem:[#allocation2 + $0xbc] sm:$0x1]
        %v1525 = vld [vmem:[#allocation2] sm:$0xe]
        %v1526 = vld [vmem:[#allocation2 + $0xc] sm:$0xe]
        %v1527 = vld [vmem:[#allocation2 + $0x18] sm:$0xe]
        %v1528 = vld [vmem:[#allocation2 + $0x24] sm:$0xe]
        %v1529 = vld [vmem:[#allocation2 + $0x30] sm:$0xe]
        %v1530 = vld [vmem:[#allocation2 + $0x3c] sm:$0xe]
        %v1531 = vld [vmem:[#allocation2 + $0x48] sm:$0xe]
        %v1532 = vld [vmem:[#allocation2 + $0x54] sm:$0xe]
        %v1533 = vld [vmem:[#allocation2 + $0x60] sm:$0xe]
        %v1534 = vld [vmem:[#allocation2 + $0x6c] sm:$0xe]
        %v1535 = vld [vmem:[#allocation2 + $0x78] sm:$0xe]
        %v1536 = vld [vmem:[#allocation2 + $0x84] sm:$0xe]
        %v1537 = vld [vmem:[#allocation2 + $0x90] sm:$0xe]
        %v1538 = vld [vmem:[#allocation2 + $0x9c] sm:$0xe]
        %v1539 = vld [vmem:[#allocation2 + $0xa8] sm:$0xe]
        %v1540 = vld [vmem:[#allocation2 + $0xb4] sm:$0xe]
        %v1541 = vld [vmem:[%s1362] sm:$0xf]
        %v1542 = vld [vmem:[%s1362 + $0x4] sm:$0xf]
        %v1543 = vld [vmem:[%s1362 + $0xc] sm:$0xf]
        %v1544 = vld [vmem:[%s1362 + $0x10] sm:$0xf]
        %v1545 = vld [vmem:[%s1362 + $0x18] sm:$0xf]
        %v1546 = vld [vmem:[%s1362 + $0x1c] sm:$0xf]
        %v1547 = vld [vmem:[%s1362 + $0x24] sm:$0xf]
        %v1548 = vld [vmem:[%s1362 + $0x28] sm:$0xf]
        %v1549 = vld [vmem:[%s1362 + $0x30] sm:$0xf]
        %v1550 = vld [vmem:[%s1362 + $0x34] sm:$0xf]
        %v1551 = vld [vmem:[%s1362 + $0x3c] sm:$0xf]
        %v1552 = vld [vmem:[%s1362 + $0x40] sm:$0xf]
        %v1553 = vld [vmem:[%s1362 + $0x48] sm:$0xf]
        %v1554 = vld [vmem:[%s1362 + $0x4c] sm:$0xf]
        %v1555 = vld [vmem:[%s1362 + $0x54] sm:$0xf]
        %v1556 = vld [vmem:[%s1362 + $0x58] sm:$0xf]
        %v1557 = vld [vmem:[%s1362 + $0x60] sm:$0xf]
        %v1558 = vld [vmem:[%s1362 + $0x64] sm:$0xf]
        %v1559 = vld [vmem:[%s1362 + $0x6c] sm:$0xf]
        %v1560 = vld [vmem:[%s1362 + $0x70] sm:$0xf]
        %v1561 = vld [vmem:[%s1362 + $0x78] sm:$0xf]
        %v1562 = vld [vmem:[%s1362 + $0x7c] sm:$0xf]
        %v1563 = vld [vmem:[%s1362 + $0x84] sm:$0xf]
        %v1564 = vld [vmem:[%s1362 + $0x88] sm:$0xf]
        %v1565 = vld [vmem:[%s1362 + $0x90] sm:$0xf]
        %v1566 = vld [vmem:[%s1362 + $0x94] sm:$0xf]
        %v1567 = vld [vmem:[%s1362 + $0x9c] sm:$0xf]
        %v1568 = vld [vmem:[%s1362 + $0xa0] sm:$0xf]
        %v1569 = vld [vmem:[%s1362 + $0xa8] sm:$0xf]
        %v1570 = vld [vmem:[%s1362 + $0xac] sm:$0xf]
        %v1571 = vld [vmem:[%s1362 + $0xb4] sm:$0xf]
        %v1572 = vld [vmem:[%s1362 + $0xb8] sm:$0xf]
        %v1573 = vld [vmem:[%s1362 + $0x8] sm:$0x1]
        %v1574 = vld [vmem:[%s1362 + $0x14] sm:$0x1]
        %v1575 = vld [vmem:[%s1362 + $0x20] sm:$0x1]
        %v1576 = vld [vmem:[%s1362 + $0x2c] sm:$0x1]
        %v1577 = vld [vmem:[%s1362 + $0x38] sm:$0x1]
        %v1578 = vld [vmem:[%s1362 + $0x44] sm:$0x1]
        %v1579 = vld [vmem:[%s1362 + $0x50] sm:$0x1]
        %v1580 = vld [vmem:[%s1362 + $0x5c] sm:$0x1]
        %v1581 = vld [vmem:[%s1362 + $0x68] sm:$0x1]
        %v1582 = vld [vmem:[%s1362 + $0x74] sm:$0x1]
        %v1583 = vld [vmem:[%s1362 + $0x80] sm:$0x1]
        %v1584 = vld [vmem:[%s1362 + $0x8c] sm:$0x1]
        %v1585 = vld [vmem:[%s1362 + $0x98] sm:$0x1]
        %v1586 = vld [vmem:[%s1362 + $0xa4] sm:$0x1]
        %v1587 = vld [vmem:[%s1362 + $0xb0] sm:$0x1]
        %v1588 = vld [vmem:[%s1362 + $0xbc] sm:$0x1]
        %v1589 = vld [vmem:[%s1362] sm:$0xe]
        %v1590 = vld [vmem:[%s1362 + $0xc] sm:$0xe]
        %v1591 = vld [vmem:[%s1362 + $0x18] sm:$0xe]
        %v1592 = vld [vmem:[%s1362 + $0x24] sm:$0xe]
        %v1593 = vld [vmem:[%s1362 + $0x30] sm:$0xe]
        %v1594 = vld [vmem:[%s1362 + $0x3c] sm:$0xe]
        %v1595 = vld [vmem:[%s1362 + $0x48] sm:$0xe]
        %v1596 = vld [vmem:[%s1362 + $0x54] sm:$0xe]
        %v1597 = vld [vmem:[%s1362 + $0x60] sm:$0xe]
        %v1598 = vld [vmem:[%s1362 + $0x6c] sm:$0xe]
        %v1599 = vld [vmem:[%s1362 + $0x78] sm:$0xe]
        %v1600 = vld [vmem:[%s1362 + $0x84] sm:$0xe]
        %v1601 = vld [vmem:[%s1362 + $0x90] sm:$0xe]
        %v1602 = vld [vmem:[%s1362 + $0x9c] sm:$0xe]
        %v1603 = vld [vmem:[%s1362 + $0xa8] sm:$0xe]
        %v1604 = vld [vmem:[%s1362 + $0xb4] sm:$0xe]
        %s1605 = scalar_lea.vmem [#allocation2], 24
        %v1606 = vld [vmem:[%s1605] sm:$0xf]
        %v1607 = vld [vmem:[%s1605 + $0x4] sm:$0xf]
        %v1608 = vld [vmem:[%s1605 + $0xc] sm:$0xf]
        %v1609 = vld [vmem:[%s1605 + $0x10] sm:$0xf]
        %v1610 = vld [vmem:[%s1605 + $0x18] sm:$0xf]
        %v1611 = vld [vmem:[%s1605 + $0x1c] sm:$0xf]
        %v1612 = vld [vmem:[%s1605 + $0x24] sm:$0xf]
        %v1613 = vld [vmem:[%s1605 + $0x28] sm:$0xf]
        %v1614 = vld [vmem:[%s1605 + $0x30] sm:$0xf]
        %v1615 = vld [vmem:[%s1605 + $0x34] sm:$0xf]
        %v1616 = vld [vmem:[%s1605 + $0x3c] sm:$0xf]
        %v1617 = vld [vmem:[%s1605 + $0x40] sm:$0xf]
        %v1618 = vld [vmem:[%s1605 + $0x48] sm:$0xf]
        %v1619 = vld [vmem:[%s1605 + $0x4c] sm:$0xf]
        %v1620 = vld [vmem:[%s1605 + $0x54] sm:$0xf]
        %v1621 = vld [vmem:[%s1605 + $0x58] sm:$0xf]
        %v1622 = vld [vmem:[%s1605 + $0x60] sm:$0xf]
        %v1623 = vld [vmem:[%s1605 + $0x64] sm:$0xf]
        %v1624 = vld [vmem:[%s1605 + $0x6c] sm:$0xf]
        %v1625 = vld [vmem:[%s1605 + $0x70] sm:$0xf]
        %v1626 = vld [vmem:[%s1605 + $0x78] sm:$0xf]
        %v1627 = vld [vmem:[%s1605 + $0x7c] sm:$0xf]
        %v1628 = vld [vmem:[%s1605 + $0x84] sm:$0xf]
        %v1629 = vld [vmem:[%s1605 + $0x88] sm:$0xf]
        %v1630 = vld [vmem:[%s1605 + $0x90] sm:$0xf]
        %v1631 = vld [vmem:[%s1605 + $0x94] sm:$0xf]
        %v1632 = vld [vmem:[%s1605 + $0x9c] sm:$0xf]
        %v1633 = vld [vmem:[%s1605 + $0xa0] sm:$0xf]
        %v1634 = vld [vmem:[%s1605 + $0xa8] sm:$0xf]
        %v1635 = vld [vmem:[%s1605 + $0xac] sm:$0xf]
        %v1636 = vld [vmem:[%s1605 + $0xb4] sm:$0xf]
        %v1637 = vld [vmem:[%s1605 + $0xb8] sm:$0xf]
        %v1638 = vld [vmem:[%s1605 + $0x8] sm:$0x1]
        %v1639 = vld [vmem:[%s1605 + $0x14] sm:$0x1]
        %v1640 = vld [vmem:[%s1605 + $0x20] sm:$0x1]
        %v1641 = vld [vmem:[%s1605 + $0x2c] sm:$0x1]
        %v1642 = vld [vmem:[%s1605 + $0x38] sm:$0x1]
        %v1643 = vld [vmem:[%s1605 + $0x44] sm:$0x1]
        %v1644 = vld [vmem:[%s1605 + $0x50] sm:$0x1]
        %v1645 = vld [vmem:[%s1605 + $0x5c] sm:$0x1]
        %v1646 = vld [vmem:[%s1605 + $0x68] sm:$0x1]
        %v1647 = vld [vmem:[%s1605 + $0x74] sm:$0x1]
        %v1648 = vld [vmem:[%s1605 + $0x80] sm:$0x1]
        %v1649 = vld [vmem:[%s1605 + $0x8c] sm:$0x1]
        %v1650 = vld [vmem:[%s1605 + $0x98] sm:$0x1]
        %v1651 = vld [vmem:[%s1605 + $0xa4] sm:$0x1]
        %v1652 = vld [vmem:[%s1605 + $0xb0] sm:$0x1]
        %v1653 = vld [vmem:[%s1605 + $0xbc] sm:$0x1]
        %v1654 = vld [vmem:[%s1605] sm:$0xe]
        %v1655 = vld [vmem:[%s1605 + $0xc] sm:$0xe]
        %v1656 = vld [vmem:[%s1605 + $0x18] sm:$0xe]
        %v1657 = vld [vmem:[%s1605 + $0x24] sm:$0xe]
        %v1658 = vld [vmem:[%s1605 + $0x30] sm:$0xe]
        %v1659 = vld [vmem:[%s1605 + $0x3c] sm:$0xe]
        %v1660 = vld [vmem:[%s1605 + $0x48] sm:$0xe]
        %v1661 = vld [vmem:[%s1605 + $0x54] sm:$0xe]
        %v1662 = vld [vmem:[%s1605 + $0x60] sm:$0xe]
        %v1663 = vld [vmem:[%s1605 + $0x6c] sm:$0xe]
        %v1664 = vld [vmem:[%s1605 + $0x78] sm:$0xe]
        %v1665 = vld [vmem:[%s1605 + $0x84] sm:$0xe]
        %v1666 = vld [vmem:[%s1605 + $0x90] sm:$0xe]
        %v1667 = vld [vmem:[%s1605 + $0x9c] sm:$0xe]
        %v1668 = vld [vmem:[%s1605 + $0xa8] sm:$0xe]
        %v1669 = vld [vmem:[%s1605 + $0xb4] sm:$0xe]
        %v1702 = vunpack.c.l.b16 %v1477
        %v1703 = vunpack.c.l.b16 %v1478
        %v1704 = vunpack.c.l.b16 %v1479
        %v1705 = vunpack.c.l.b16 %v1480
        %v1706 = vunpack.c.l.b16 %v1481
        %v1707 = vunpack.c.l.b16 %v1482
        %v1708 = vunpack.c.l.b16 %v1483
        %v1709 = vunpack.c.l.b16 %v1484
        %v1710 = vunpack.c.l.b16 %v1485
        %v1711 = vunpack.c.l.b16 %v1486
        %v1712 = vunpack.c.l.b16 %v1487
        %v1713 = vunpack.c.l.b16 %v1488
        %v1714 = vunpack.c.l.b16 %v1489
        %v1715 = vunpack.c.l.b16 %v1490
        %v1716 = vunpack.c.l.b16 %v1491
        %v1717 = vunpack.c.l.b16 %v1492
        %v1718 = vunpack.c.l.b16 %v1493
        %v1719 = vunpack.c.l.b16 %v1494
        %v1720 = vunpack.c.l.b16 %v1495
        %v1721 = vunpack.c.l.b16 %v1496
        %v1722 = vunpack.c.l.b16 %v1497
        %v1723 = vunpack.c.l.b16 %v1498
        %v1724 = vunpack.c.l.b16 %v1499
        %v1725 = vunpack.c.l.b16 %v1500
        %v1726 = vunpack.c.l.b16 %v1501
        %v1727 = vunpack.c.l.b16 %v1502
        %v1728 = vunpack.c.l.b16 %v1503
        %v1729 = vunpack.c.l.b16 %v1504
        %v1730 = vunpack.c.l.b16 %v1505
        %v1731 = vunpack.c.l.b16 %v1506
        %v1732 = vunpack.c.l.b16 %v1507
        %v1733 = vunpack.c.l.b16 %v1508
        %v1734 = vpack.c.b16 %v1703, %v1702
        %v1735 = vpack.c.b16 %v1705, %v1704
        %v1736 = vpack.c.b16 %v1707, %v1706
        %v1737 = vpack.c.b16 %v1709, %v1708
        %v1738 = vpack.c.b16 %v1711, %v1710
        %v1739 = vpack.c.b16 %v1713, %v1712
        %v1740 = vpack.c.b16 %v1715, %v1714
        %v1741 = vpack.c.b16 %v1717, %v1716
        %v1742 = vpack.c.b16 %v1719, %v1718
        %v1743 = vpack.c.b16 %v1721, %v1720
        %v1744 = vpack.c.b16 %v1723, %v1722
        %v1745 = vpack.c.b16 %v1725, %v1724
        %v1746 = vpack.c.b16 %v1727, %v1726
        %v1747 = vpack.c.b16 %v1729, %v1728
        %v1748 = vpack.c.b16 %v1731, %v1730
        %v1749 = vpack.c.b16 %v1733, %v1732
        %v1766 = vunpack.c.l.b16 %v1509
        %v1767 = vunpack.c.l.b16 %v1510
        %v1768 = vunpack.c.l.b16 %v1511
        %v1769 = vunpack.c.l.b16 %v1512
        %v1770 = vunpack.c.l.b16 %v1513
        %v1771 = vunpack.c.l.b16 %v1514
        %v1772 = vunpack.c.l.b16 %v1515
        %v1773 = vunpack.c.l.b16 %v1516
        %v1774 = vunpack.c.l.b16 %v1517
        %v1775 = vunpack.c.l.b16 %v1518
        %v1776 = vunpack.c.l.b16 %v1519
        %v1777 = vunpack.c.l.b16 %v1520
        %v1778 = vunpack.c.l.b16 %v1521
        %v1779 = vunpack.c.l.b16 %v1522
        %v1780 = vunpack.c.l.b16 %v1523
        %v1781 = vunpack.c.l.b16 %v1524
        %v1782 = vpack.c.b16 %v1766, %v1766
        %v1783 = vpack.c.b16 %v1767, %v1767
        %v1784 = vpack.c.b16 %v1768, %v1768
        %v1785 = vpack.c.b16 %v1769, %v1769
        %v1786 = vpack.c.b16 %v1770, %v1770
        %v1787 = vpack.c.b16 %v1771, %v1771
        %v1788 = vpack.c.b16 %v1772, %v1772
        %v1789 = vpack.c.b16 %v1773, %v1773
        %v1790 = vpack.c.b16 %v1774, %v1774
        %v1791 = vpack.c.b16 %v1775, %v1775
        %v1792 = vpack.c.b16 %v1776, %v1776
        %v1793 = vpack.c.b16 %v1777, %v1777
        %v1794 = vpack.c.b16 %v1778, %v1778
        %v1795 = vpack.c.b16 %v1779, %v1779
        %v1796 = vpack.c.b16 %v1780, %v1780
        %v1797 = vpack.c.b16 %v1781, %v1781
        %vm1798 = vsmask.f32 7424
        %v1800 = vshrl.u32 %v1734, 16
        %v1802 = vshll.u32 %v1734, 16
        %v1804 = vrot.slane %v1802, 1
        %v1805 = vor.u32 %v1800, %v1804
        %v1807 = vshll.u32 %v1782, 16
        %v1809 = vrot.slane %v1807, 1
        %v1810 = vsel %vm1798, %v1805, %v1809
        %v1812 = vshrl.u32 %v1735, 16
        %v1814 = vshll.u32 %v1735, 16
        %v1816 = vrot.slane %v1814, 1
        %v1817 = vor.u32 %v1812, %v1816
        %v1819 = vshll.u32 %v1783, 16
        %v1821 = vrot.slane %v1819, 1
        %v1822 = vsel %vm1798, %v1817, %v1821
        %v1824 = vshrl.u32 %v1736, 16
        %v1826 = vshll.u32 %v1736, 16
        %v1828 = vrot.slane %v1826, 1
        %v1829 = vor.u32 %v1824, %v1828
        %v1831 = vshll.u32 %v1784, 16
        %v1833 = vrot.slane %v1831, 1
        %v1834 = vsel %vm1798, %v1829, %v1833
        %v1836 = vshrl.u32 %v1737, 16
        %v1838 = vshll.u32 %v1737, 16
        %v1840 = vrot.slane %v1838, 1
        %v1841 = vor.u32 %v1836, %v1840
        %v1843 = vshll.u32 %v1785, 16
        %v1845 = vrot.slane %v1843, 1
        %v1846 = vsel %vm1798, %v1841, %v1845
        %v1848 = vshrl.u32 %v1738, 16
        %v1850 = vshll.u32 %v1738, 16
        %v1852 = vrot.slane %v1850, 1
        %v1853 = vor.u32 %v1848, %v1852
        %v1855 = vshll.u32 %v1786, 16
        %v1857 = vrot.slane %v1855, 1
        %v1858 = vsel %vm1798, %v1853, %v1857
        %v1860 = vshrl.u32 %v1739, 16
        %v1862 = vshll.u32 %v1739, 16
        %v1864 = vrot.slane %v1862, 1
        %v1865 = vor.u32 %v1860, %v1864
        %v1867 = vshll.u32 %v1787, 16
        %v1869 = vrot.slane %v1867, 1
        %v1870 = vsel %vm1798, %v1865, %v1869
        %v1872 = vshrl.u32 %v1740, 16
        %v1874 = vshll.u32 %v1740, 16
        %v1876 = vrot.slane %v1874, 1
        %v1877 = vor.u32 %v1872, %v1876
        %v1879 = vshll.u32 %v1788, 16
        %v1881 = vrot.slane %v1879, 1
        %v1882 = vsel %vm1798, %v1877, %v1881
        %v1884 = vshrl.u32 %v1741, 16
        %v1886 = vshll.u32 %v1741, 16
        %v1888 = vrot.slane %v1886, 1
        %v1889 = vor.u32 %v1884, %v1888
        %v1891 = vshll.u32 %v1789, 16
        %v1893 = vrot.slane %v1891, 1
        %v1894 = vsel %vm1798, %v1889, %v1893
        %v1896 = vshrl.u32 %v1742, 16
        %v1898 = vshll.u32 %v1742, 16
        %v1900 = vrot.slane %v1898, 1
        %v1901 = vor.u32 %v1896, %v1900
        %v1903 = vshll.u32 %v1790, 16
        %v1905 = vrot.slane %v1903, 1
        %v1906 = vsel %vm1798, %v1901, %v1905
        %v1908 = vshrl.u32 %v1743, 16
        %v1910 = vshll.u32 %v1743, 16
        %v1912 = vrot.slane %v1910, 1
        %v1913 = vor.u32 %v1908, %v1912
        %v1915 = vshll.u32 %v1791, 16
        %v1917 = vrot.slane %v1915, 1
        %v1918 = vsel %vm1798, %v1913, %v1917
        %v1920 = vshrl.u32 %v1744, 16
        %v1922 = vshll.u32 %v1744, 16
        %v1924 = vrot.slane %v1922, 1
        %v1925 = vor.u32 %v1920, %v1924
        %v1927 = vshll.u32 %v1792, 16
        %v1929 = vrot.slane %v1927, 1
        %v1930 = vsel %vm1798, %v1925, %v1929
        %v1932 = vshrl.u32 %v1745, 16
        %v1934 = vshll.u32 %v1745, 16
        %v1936 = vrot.slane %v1934, 1
        %v1937 = vor.u32 %v1932, %v1936
        %v1939 = vshll.u32 %v1793, 16
        %v1941 = vrot.slane %v1939, 1
        %v1942 = vsel %vm1798, %v1937, %v1941
        %v1944 = vshrl.u32 %v1746, 16
        %v1946 = vshll.u32 %v1746, 16
        %v1948 = vrot.slane %v1946, 1
        %v1949 = vor.u32 %v1944, %v1948
        %v1951 = vshll.u32 %v1794, 16
        %v1953 = vrot.slane %v1951, 1
        %v1954 = vsel %vm1798, %v1949, %v1953
        %v1956 = vshrl.u32 %v1747, 16
        %v1958 = vshll.u32 %v1747, 16
        %v1960 = vrot.slane %v1958, 1
        %v1961 = vor.u32 %v1956, %v1960
        %v1963 = vshll.u32 %v1795, 16
        %v1965 = vrot.slane %v1963, 1
        %v1966 = vsel %vm1798, %v1961, %v1965
        %v1968 = vshrl.u32 %v1748, 16
        %v1970 = vshll.u32 %v1748, 16
        %v1972 = vrot.slane %v1970, 1
        %v1973 = vor.u32 %v1968, %v1972
        %v1975 = vshll.u32 %v1796, 16
        %v1977 = vrot.slane %v1975, 1
        %v1978 = vsel %vm1798, %v1973, %v1977
        %v1980 = vshrl.u32 %v1749, 16
        %v1982 = vshll.u32 %v1749, 16
        %v1984 = vrot.slane %v1982, 1
        %v1985 = vor.u32 %v1980, %v1984
        %v1987 = vshll.u32 %v1797, 16
        %v1989 = vrot.slane %v1987, 1
        %v1990 = vsel %vm1798, %v1985, %v1989
        %1991 = vrot.lane.b32.xlu0 %v1810, 32
        %v1992 = vpop.permute.xlu0 %1991
        %1993 = vrot.lane.b32.xlu0 %v1822, 32
        %v1994 = vpop.permute.xlu0 %1993
        %1995 = vrot.lane.b32.xlu0 %v1834, 32
        %v1996 = vpop.permute.xlu0 %1995
        %1997 = vrot.lane.b32.xlu0 %v1846, 32
        %v1998 = vpop.permute.xlu0 %1997
        %1999 = vrot.lane.b32.xlu0 %v1858, 32
        %v2000 = vpop.permute.xlu0 %1999
        %2001 = vrot.lane.b32.xlu0 %v1870, 32
        %v2002 = vpop.permute.xlu0 %2001
        %2003 = vrot.lane.b32.xlu0 %v1882, 32
        %v2004 = vpop.permute.xlu0 %2003
        %2005 = vrot.lane.b32.xlu0 %v1894, 32
        %v2006 = vpop.permute.xlu0 %2005
        %2007 = vrot.lane.b32.xlu0 %v1906, 32
        %v2008 = vpop.permute.xlu0 %2007
        %2009 = vrot.lane.b32.xlu0 %v1918, 32
        %v2010 = vpop.permute.xlu0 %2009
        %2011 = vrot.lane.b32.xlu0 %v1930, 32
        %v2012 = vpop.permute.xlu0 %2011
        %2013 = vrot.lane.b32.xlu0 %v1942, 32
        %v2014 = vpop.permute.xlu0 %2013
        %2015 = vrot.lane.b32.xlu0 %v1954, 32
        %v2016 = vpop.permute.xlu0 %2015
        %2017 = vrot.lane.b32.xlu0 %v1966, 32
        %v2018 = vpop.permute.xlu0 %2017
        %2019 = vrot.lane.b32.xlu0 %v1978, 32
        %v2020 = vpop.permute.xlu0 %2019
        %2021 = vrot.lane.b32.xlu0 %v1990, 32
        %v2022 = vpop.permute.xlu0 %2021
        %v2039 = vunpack.c.l.b16 %v1525
        %v2040 = vunpack.c.l.b16 %v1526
        %v2041 = vunpack.c.l.b16 %v1527
        %v2042 = vunpack.c.l.b16 %v1528
        %v2043 = vunpack.c.l.b16 %v1529
        %v2044 = vunpack.c.l.b16 %v1530
        %v2045 = vunpack.c.l.b16 %v1531
        %v2046 = vunpack.c.l.b16 %v1532
        %v2047 = vunpack.c.l.b16 %v1533
        %v2048 = vunpack.c.l.b16 %v1534
        %v2049 = vunpack.c.l.b16 %v1535
        %v2050 = vunpack.c.l.b16 %v1536
        %v2051 = vunpack.c.l.b16 %v1537
        %v2052 = vunpack.c.l.b16 %v1538
        %v2053 = vunpack.c.l.b16 %v1539
        %v2054 = vunpack.c.l.b16 %v1540
        %v2055 = vpack.c.b16 %v1703, %v2039
        %v2056 = vpack.c.b16 %v1705, %v2040
        %v2057 = vpack.c.b16 %v1707, %v2041
        %v2058 = vpack.c.b16 %v1709, %v2042
        %v2059 = vpack.c.b16 %v1711, %v2043
        %v2060 = vpack.c.b16 %v1713, %v2044
        %v2061 = vpack.c.b16 %v1715, %v2045
        %v2062 = vpack.c.b16 %v1717, %v2046
        %v2063 = vpack.c.b16 %v1719, %v2047
        %v2064 = vpack.c.b16 %v1721, %v2048
        %v2065 = vpack.c.b16 %v1723, %v2049
        %v2066 = vpack.c.b16 %v1725, %v2050
        %v2067 = vpack.c.b16 %v1727, %v2051
        %v2068 = vpack.c.b16 %v1729, %v2052
        %v2069 = vpack.c.b16 %v1731, %v2053
        %v2070 = vpack.c.b16 %v1733, %v2054
        %vm2071 = vcmask 1046528
        %v2072 = vrot.slane %v2055, 1
        %v2073 = vrot.slane %v1782, 1
        %v2074 = vsel %vm2071, %v2072, %v2073
        %v2075 = vrot.slane %v2056, 1
        %v2076 = vrot.slane %v1783, 1
        %v2077 = vsel %vm2071, %v2075, %v2076
        %v2078 = vrot.slane %v2057, 1
        %v2079 = vrot.slane %v1784, 1
        %v2080 = vsel %vm2071, %v2078, %v2079
        %v2081 = vrot.slane %v2058, 1
        %v2082 = vrot.slane %v1785, 1
        %v2083 = vsel %vm2071, %v2081, %v2082
        %v2084 = vrot.slane %v2059, 1
        %v2085 = vrot.slane %v1786, 1
        %v2086 = vsel %vm2071, %v2084, %v2085
        %v2087 = vrot.slane %v2060, 1
        %v2088 = vrot.slane %v1787, 1
        %v2089 = vsel %vm2071, %v2087, %v2088
        %v2090 = vrot.slane %v2061, 1
        %v2091 = vrot.slane %v1788, 1
        %v2092 = vsel %vm2071, %v2090, %v2091
        %v2093 = vrot.slane %v2062, 1
        %v2094 = vrot.slane %v1789, 1
        %v2095 = vsel %vm2071, %v2093, %v2094
        %v2096 = vrot.slane %v2063, 1
        %v2097 = vrot.slane %v1790, 1
        %v2098 = vsel %vm2071, %v2096, %v2097
        %v2099 = vrot.slane %v2064, 1
        %v2100 = vrot.slane %v1791, 1
        %v2101 = vsel %vm2071, %v2099, %v2100
        %v2102 = vrot.slane %v2065, 1
        %v2103 = vrot.slane %v1792, 1
        %v2104 = vsel %vm2071, %v2102, %v2103
        %v2105 = vrot.slane %v2066, 1
        %v2106 = vrot.slane %v1793, 1
        %v2107 = vsel %vm2071, %v2105, %v2106
        %v2108 = vrot.slane %v2067, 1
        %v2109 = vrot.slane %v1794, 1
        %v2110 = vsel %vm2071, %v2108, %v2109
        %v2111 = vrot.slane %v2068, 1
        %v2112 = vrot.slane %v1795, 1
        %v2113 = vsel %vm2071, %v2111, %v2112
        %v2114 = vrot.slane %v2069, 1
        %v2115 = vrot.slane %v1796, 1
        %v2116 = vsel %vm2071, %v2114, %v2115
        %v2117 = vrot.slane %v2070, 1
        %v2118 = vrot.slane %v1797, 1
        %v2119 = vsel %vm2071, %v2117, %v2118
        %2120 = vrot.lane.b32.xlu0 %v2074, 64
        %v2121 = vpop.permute.xlu0 %2120
        %2122 = vrot.lane.b32.xlu0 %v2077, 64
        %v2123 = vpop.permute.xlu0 %2122
        %2124 = vrot.lane.b32.xlu0 %v2080, 64
        %v2125 = vpop.permute.xlu0 %2124
        %2126 = vrot.lane.b32.xlu0 %v2083, 64
        %v2127 = vpop.permute.xlu0 %2126
        %2128 = vrot.lane.b32.xlu0 %v2086, 64
        %v2129 = vpop.permute.xlu0 %2128
        %2130 = vrot.lane.b32.xlu0 %v2089, 64
        %v2131 = vpop.permute.xlu0 %2130
        %2132 = vrot.lane.b32.xlu0 %v2092, 64
        %v2133 = vpop.permute.xlu0 %2132
        %2134 = vrot.lane.b32.xlu0 %v2095, 64
        %v2135 = vpop.permute.xlu0 %2134
        %2136 = vrot.lane.b32.xlu0 %v2098, 64
        %v2137 = vpop.permute.xlu0 %2136
        %2138 = vrot.lane.b32.xlu0 %v2101, 64
        %v2139 = vpop.permute.xlu0 %2138
        %2140 = vrot.lane.b32.xlu0 %v2104, 64
        %v2141 = vpop.permute.xlu0 %2140
        %2142 = vrot.lane.b32.xlu0 %v2107, 64
        %v2143 = vpop.permute.xlu0 %2142
        %2144 = vrot.lane.b32.xlu0 %v2110, 64
        %v2145 = vpop.permute.xlu0 %2144
        %2146 = vrot.lane.b32.xlu0 %v2113, 64
        %v2147 = vpop.permute.xlu0 %2146
        %2148 = vrot.lane.b32.xlu0 %v2116, 64
        %v2149 = vpop.permute.xlu0 %2148
        %2150 = vrot.lane.b32.xlu0 %v2119, 64
        %v2151 = vpop.permute.xlu0 %2150
        %v2184 = vunpack.c.l.b16 %v1541
        %v2185 = vunpack.c.l.b16 %v1542
        %v2186 = vunpack.c.l.b16 %v1543
        %v2187 = vunpack.c.l.b16 %v1544
        %v2188 = vunpack.c.l.b16 %v1545
        %v2189 = vunpack.c.l.b16 %v1546
        %v2190 = vunpack.c.l.b16 %v1547
        %v2191 = vunpack.c.l.b16 %v1548
        %v2192 = vunpack.c.l.b16 %v1549
        %v2193 = vunpack.c.l.b16 %v1550
        %v2194 = vunpack.c.l.b16 %v1551
        %v2195 = vunpack.c.l.b16 %v1552
        %v2196 = vunpack.c.l.b16 %v1553
        %v2197 = vunpack.c.l.b16 %v1554
        %v2198 = vunpack.c.l.b16 %v1555
        %v2199 = vunpack.c.l.b16 %v1556
        %v2200 = vunpack.c.l.b16 %v1557
        %v2201 = vunpack.c.l.b16 %v1558
        %v2202 = vunpack.c.l.b16 %v1559
        %v2203 = vunpack.c.l.b16 %v1560
        %v2204 = vunpack.c.l.b16 %v1561
        %v2205 = vunpack.c.l.b16 %v1562
        %v2206 = vunpack.c.l.b16 %v1563
        %v2207 = vunpack.c.l.b16 %v1564
        %v2208 = vunpack.c.l.b16 %v1565
        %v2209 = vunpack.c.l.b16 %v1566
        %v2210 = vunpack.c.l.b16 %v1567
        %v2211 = vunpack.c.l.b16 %v1568
        %v2212 = vunpack.c.l.b16 %v1569
        %v2213 = vunpack.c.l.b16 %v1570
        %v2214 = vunpack.c.l.b16 %v1571
        %v2215 = vunpack.c.l.b16 %v1572
        %v2216 = vpack.c.b16 %v2185, %v2184
        %v2217 = vpack.c.b16 %v2187, %v2186
        %v2218 = vpack.c.b16 %v2189, %v2188
        %v2219 = vpack.c.b16 %v2191, %v2190
        %v2220 = vpack.c.b16 %v2193, %v2192
        %v2221 = vpack.c.b16 %v2195, %v2194
        %v2222 = vpack.c.b16 %v2197, %v2196
        %v2223 = vpack.c.b16 %v2199, %v2198
        %v2224 = vpack.c.b16 %v2201, %v2200
        %v2225 = vpack.c.b16 %v2203, %v2202
        %v2226 = vpack.c.b16 %v2205, %v2204
        %v2227 = vpack.c.b16 %v2207, %v2206
        %v2228 = vpack.c.b16 %v2209, %v2208
        %v2229 = vpack.c.b16 %v2211, %v2210
        %v2230 = vpack.c.b16 %v2213, %v2212
        %v2231 = vpack.c.b16 %v2215, %v2214
        %2232 = vrot.lane.b32.xlu0 %v2216, 96
        %v2233 = vpop.permute.xlu0 %2232
        %2234 = vrot.lane.b32.xlu0 %v2217, 96
        %v2235 = vpop.permute.xlu0 %2234
        %2236 = vrot.lane.b32.xlu0 %v2218, 96
        %v2237 = vpop.permute.xlu0 %2236
        %2238 = vrot.lane.b32.xlu0 %v2219, 96
        %v2239 = vpop.permute.xlu0 %2238
        %2240 = vrot.lane.b32.xlu0 %v2220, 96
        %v2241 = vpop.permute.xlu0 %2240
        %2242 = vrot.lane.b32.xlu0 %v2221, 96
        %v2243 = vpop.permute.xlu0 %2242
        %2244 = vrot.lane.b32.xlu0 %v2222, 96
        %v2245 = vpop.permute.xlu0 %2244
        %2246 = vrot.lane.b32.xlu0 %v2223, 96
        %v2247 = vpop.permute.xlu0 %2246
        %2248 = vrot.lane.b32.xlu0 %v2224, 96
        %v2249 = vpop.permute.xlu0 %2248
        %2250 = vrot.lane.b32.xlu0 %v2225, 96
        %v2251 = vpop.permute.xlu0 %2250
        %2252 = vrot.lane.b32.xlu0 %v2226, 96
        %v2253 = vpop.permute.xlu0 %2252
        %2254 = vrot.lane.b32.xlu0 %v2227, 96
        %v2255 = vpop.permute.xlu0 %2254
        %2256 = vrot.lane.b32.xlu0 %v2228, 96
        %v2257 = vpop.permute.xlu0 %2256
        %2258 = vrot.lane.b32.xlu0 %v2229, 96
        %v2259 = vpop.permute.xlu0 %2258
        %2260 = vrot.lane.b32.xlu0 %v2230, 96
        %v2261 = vpop.permute.xlu0 %2260
        %2262 = vrot.lane.b32.xlu0 %v2231, 96
        %v2263 = vpop.permute.xlu0 %2262
        %v2280 = vunpack.c.l.b16 %v1573
        %v2281 = vunpack.c.l.b16 %v1574
        %v2282 = vunpack.c.l.b16 %v1575
        %v2283 = vunpack.c.l.b16 %v1576
        %v2284 = vunpack.c.l.b16 %v1577
        %v2285 = vunpack.c.l.b16 %v1578
        %v2286 = vunpack.c.l.b16 %v1579
        %v2287 = vunpack.c.l.b16 %v1580
        %v2288 = vunpack.c.l.b16 %v1581
        %v2289 = vunpack.c.l.b16 %v1582
        %v2290 = vunpack.c.l.b16 %v1583
        %v2291 = vunpack.c.l.b16 %v1584
        %v2292 = vunpack.c.l.b16 %v1585
        %v2293 = vunpack.c.l.b16 %v1586
        %v2294 = vunpack.c.l.b16 %v1587
        %v2295 = vunpack.c.l.b16 %v1588
        %v2296 = vpack.c.b16 %v2280, %v2280
        %v2297 = vpack.c.b16 %v2281, %v2281
        %v2298 = vpack.c.b16 %v2282, %v2282
        %v2299 = vpack.c.b16 %v2283, %v2283
        %v2300 = vpack.c.b16 %v2284, %v2284
        %v2301 = vpack.c.b16 %v2285, %v2285
        %v2302 = vpack.c.b16 %v2286, %v2286
        %v2303 = vpack.c.b16 %v2287, %v2287
        %v2304 = vpack.c.b16 %v2288, %v2288
        %v2305 = vpack.c.b16 %v2289, %v2289
        %v2306 = vpack.c.b16 %v2290, %v2290
        %v2307 = vpack.c.b16 %v2291, %v2291
        %v2308 = vpack.c.b16 %v2292, %v2292
        %v2309 = vpack.c.b16 %v2293, %v2293
        %v2310 = vpack.c.b16 %v2294, %v2294
        %v2311 = vpack.c.b16 %v2295, %v2295
        %v2313 = vshrl.u32 %v2216, 16
        %v2315 = vshll.u32 %v2216, 16
        %v2317 = vrot.slane %v2315, 1
        %v2318 = vor.u32 %v2313, %v2317
        %v2320 = vshll.u32 %v2296, 16
        %v2322 = vrot.slane %v2320, 1
        %v2323 = vsel %vm1798, %v2318, %v2322
        %v2325 = vshrl.u32 %v2217, 16
        %v2327 = vshll.u32 %v2217, 16
        %v2329 = vrot.slane %v2327, 1
        %v2330 = vor.u32 %v2325, %v2329
        %v2332 = vshll.u32 %v2297, 16
        %v2334 = vrot.slane %v2332, 1
        %v2335 = vsel %vm1798, %v2330, %v2334
        %v2337 = vshrl.u32 %v2218, 16
        %v2339 = vshll.u32 %v2218, 16
        %v2341 = vrot.slane %v2339, 1
        %v2342 = vor.u32 %v2337, %v2341
        %v2344 = vshll.u32 %v2298, 16
        %v2346 = vrot.slane %v2344, 1
        %v2347 = vsel %vm1798, %v2342, %v2346
        %v2349 = vshrl.u32 %v2219, 16
        %v2351 = vshll.u32 %v2219, 16
        %v2353 = vrot.slane %v2351, 1
        %v2354 = vor.u32 %v2349, %v2353
        %v2356 = vshll.u32 %v2299, 16
        %v2358 = vrot.slane %v2356, 1
        %v2359 = vsel %vm1798, %v2354, %v2358
        %v2361 = vshrl.u32 %v2220, 16
        %v2363 = vshll.u32 %v2220, 16
        %v2365 = vrot.slane %v2363, 1
        %v2366 = vor.u32 %v2361, %v2365
        %v2368 = vshll.u32 %v2300, 16
        %v2370 = vrot.slane %v2368, 1
        %v2371 = vsel %vm1798, %v2366, %v2370
        %v2373 = vshrl.u32 %v2221, 16
        %v2375 = vshll.u32 %v2221, 16
        %v2377 = vrot.slane %v2375, 1
        %v2378 = vor.u32 %v2373, %v2377
        %v2380 = vshll.u32 %v2301, 16
        %v2382 = vrot.slane %v2380, 1
        %v2383 = vsel %vm1798, %v2378, %v2382
        %v2385 = vshrl.u32 %v2222, 16
        %v2387 = vshll.u32 %v2222, 16
        %v2389 = vrot.slane %v2387, 1
        %v2390 = vor.u32 %v2385, %v2389
        %v2392 = vshll.u32 %v2302, 16
        %v2394 = vrot.slane %v2392, 1
        %v2395 = vsel %vm1798, %v2390, %v2394
        %v2397 = vshrl.u32 %v2223, 16
        %v2399 = vshll.u32 %v2223, 16
        %v2401 = vrot.slane %v2399, 1
        %v2402 = vor.u32 %v2397, %v2401
        %v2404 = vshll.u32 %v2303, 16
        %v2406 = vrot.slane %v2404, 1
        %v2407 = vsel %vm1798, %v2402, %v2406
        %v2409 = vshrl.u32 %v2224, 16
        %v2411 = vshll.u32 %v2224, 16
        %v2413 = vrot.slane %v2411, 1
        %v2414 = vor.u32 %v2409, %v2413
        %v2416 = vshll.u32 %v2304, 16
        %v2418 = vrot.slane %v2416, 1
        %v2419 = vsel %vm1798, %v2414, %v2418
        %v2421 = vshrl.u32 %v2225, 16
        %v2423 = vshll.u32 %v2225, 16
        %v2425 = vrot.slane %v2423, 1
        %v2426 = vor.u32 %v2421, %v2425
        %v2428 = vshll.u32 %v2305, 16
        %v2430 = vrot.slane %v2428, 1
        %v2431 = vsel %vm1798, %v2426, %v2430
        %v2433 = vshrl.u32 %v2226, 16
        %v2435 = vshll.u32 %v2226, 16
        %v2437 = vrot.slane %v2435, 1
        %v2438 = vor.u32 %v2433, %v2437
        %v2440 = vshll.u32 %v2306, 16
        %v2442 = vrot.slane %v2440, 1
        %v2443 = vsel %vm1798, %v2438, %v2442
        %v2445 = vshrl.u32 %v2227, 16
        %v2447 = vshll.u32 %v2227, 16
        %v2449 = vrot.slane %v2447, 1
        %v2450 = vor.u32 %v2445, %v2449
        %v2452 = vshll.u32 %v2307, 16
        %v2454 = vrot.slane %v2452, 1
        %v2455 = vsel %vm1798, %v2450, %v2454
        %v2457 = vshrl.u32 %v2228, 16
        %v2459 = vshll.u32 %v2228, 16
        %v2461 = vrot.slane %v2459, 1
        %v2462 = vor.u32 %v2457, %v2461
        %v2464 = vshll.u32 %v2308, 16
        %v2466 = vrot.slane %v2464, 1
        %v2467 = vsel %vm1798, %v2462, %v2466
        %v2469 = vshrl.u32 %v2229, 16
        %v2471 = vshll.u32 %v2229, 16
        %v2473 = vrot.slane %v2471, 1
        %v2474 = vor.u32 %v2469, %v2473
        %v2476 = vshll.u32 %v2309, 16
        %v2478 = vrot.slane %v2476, 1
        %v2479 = vsel %vm1798, %v2474, %v2478
        %v2481 = vshrl.u32 %v2230, 16
        %v2483 = vshll.u32 %v2230, 16
        %v2485 = vrot.slane %v2483, 1
        %v2486 = vor.u32 %v2481, %v2485
        %v2488 = vshll.u32 %v2310, 16
        %v2490 = vrot.slane %v2488, 1
        %v2491 = vsel %vm1798, %v2486, %v2490
        %v2493 = vshrl.u32 %v2231, 16
        %v2495 = vshll.u32 %v2231, 16
        %v2497 = vrot.slane %v2495, 1
        %v2498 = vor.u32 %v2493, %v2497
        %v2500 = vshll.u32 %v2311, 16
        %v2502 = vrot.slane %v2500, 1
        %v2503 = vsel %vm1798, %v2498, %v2502
        %v2520 = vunpack.c.l.b16 %v1589
        %v2521 = vunpack.c.l.b16 %v1590
        %v2522 = vunpack.c.l.b16 %v1591
        %v2523 = vunpack.c.l.b16 %v1592
        %v2524 = vunpack.c.l.b16 %v1593
        %v2525 = vunpack.c.l.b16 %v1594
        %v2526 = vunpack.c.l.b16 %v1595
        %v2527 = vunpack.c.l.b16 %v1596
        %v2528 = vunpack.c.l.b16 %v1597
        %v2529 = vunpack.c.l.b16 %v1598
        %v2530 = vunpack.c.l.b16 %v1599
        %v2531 = vunpack.c.l.b16 %v1600
        %v2532 = vunpack.c.l.b16 %v1601
        %v2533 = vunpack.c.l.b16 %v1602
        %v2534 = vunpack.c.l.b16 %v1603
        %v2535 = vunpack.c.l.b16 %v1604
        %v2536 = vpack.c.b16 %v2185, %v2520
        %v2537 = vpack.c.b16 %v2187, %v2521
        %v2538 = vpack.c.b16 %v2189, %v2522
        %v2539 = vpack.c.b16 %v2191, %v2523
        %v2540 = vpack.c.b16 %v2193, %v2524
        %v2541 = vpack.c.b16 %v2195, %v2525
        %v2542 = vpack.c.b16 %v2197, %v2526
        %v2543 = vpack.c.b16 %v2199, %v2527
        %v2544 = vpack.c.b16 %v2201, %v2528
        %v2545 = vpack.c.b16 %v2203, %v2529
        %v2546 = vpack.c.b16 %v2205, %v2530
        %v2547 = vpack.c.b16 %v2207, %v2531
        %v2548 = vpack.c.b16 %v2209, %v2532
        %v2549 = vpack.c.b16 %v2211, %v2533
        %v2550 = vpack.c.b16 %v2213, %v2534
        %v2551 = vpack.c.b16 %v2215, %v2535
        %v2552 = vrot.slane %v2536, 1
        %v2553 = vrot.slane %v2296, 1
        %v2554 = vsel %vm2071, %v2552, %v2553
        %v2555 = vrot.slane %v2537, 1
        %v2556 = vrot.slane %v2297, 1
        %v2557 = vsel %vm2071, %v2555, %v2556
        %v2558 = vrot.slane %v2538, 1
        %v2559 = vrot.slane %v2298, 1
        %v2560 = vsel %vm2071, %v2558, %v2559
        %v2561 = vrot.slane %v2539, 1
        %v2562 = vrot.slane %v2299, 1
        %v2563 = vsel %vm2071, %v2561, %v2562
        %v2564 = vrot.slane %v2540, 1
        %v2565 = vrot.slane %v2300, 1
        %v2566 = vsel %vm2071, %v2564, %v2565
        %v2567 = vrot.slane %v2541, 1
        %v2568 = vrot.slane %v2301, 1
        %v2569 = vsel %vm2071, %v2567, %v2568
        %v2570 = vrot.slane %v2542, 1
        %v2571 = vrot.slane %v2302, 1
        %v2572 = vsel %vm2071, %v2570, %v2571
        %v2573 = vrot.slane %v2543, 1
        %v2574 = vrot.slane %v2303, 1
        %v2575 = vsel %vm2071, %v2573, %v2574
        %v2576 = vrot.slane %v2544, 1
        %v2577 = vrot.slane %v2304, 1
        %v2578 = vsel %vm2071, %v2576, %v2577
        %v2579 = vrot.slane %v2545, 1
        %v2580 = vrot.slane %v2305, 1
        %v2581 = vsel %vm2071, %v2579, %v2580
        %v2582 = vrot.slane %v2546, 1
        %v2583 = vrot.slane %v2306, 1
        %v2584 = vsel %vm2071, %v2582, %v2583
        %v2585 = vrot.slane %v2547, 1
        %v2586 = vrot.slane %v2307, 1
        %v2587 = vsel %vm2071, %v2585, %v2586
        %v2588 = vrot.slane %v2548, 1
        %v2589 = vrot.slane %v2308, 1
        %v2590 = vsel %vm2071, %v2588, %v2589
        %v2591 = vrot.slane %v2549, 1
        %v2592 = vrot.slane %v2309, 1
        %v2593 = vsel %vm2071, %v2591, %v2592
        %v2594 = vrot.slane %v2550, 1
        %v2595 = vrot.slane %v2310, 1
        %v2596 = vsel %vm2071, %v2594, %v2595
        %v2597 = vrot.slane %v2551, 1
        %v2598 = vrot.slane %v2311, 1
        %v2599 = vsel %vm2071, %v2597, %v2598
        %2600 = vrot.lane.b32.xlu0 %v2554, 32
        %v2601 = vpop.permute.xlu0 %2600
        %2602 = vrot.lane.b32.xlu0 %v2557, 32
        %v2603 = vpop.permute.xlu0 %2602
        %2604 = vrot.lane.b32.xlu0 %v2560, 32
        %v2605 = vpop.permute.xlu0 %2604
        %2606 = vrot.lane.b32.xlu0 %v2563, 32
        %v2607 = vpop.permute.xlu0 %2606
        %2608 = vrot.lane.b32.xlu0 %v2566, 32
        %v2609 = vpop.permute.xlu0 %2608
        %2610 = vrot.lane.b32.xlu0 %v2569, 32
        %v2611 = vpop.permute.xlu0 %2610
        %2612 = vrot.lane.b32.xlu0 %v2572, 32
        %v2613 = vpop.permute.xlu0 %2612
        %2614 = vrot.lane.b32.xlu0 %v2575, 32
        %v2615 = vpop.permute.xlu0 %2614
        %2616 = vrot.lane.b32.xlu0 %v2578, 32
        %v2617 = vpop.permute.xlu0 %2616
        %2618 = vrot.lane.b32.xlu0 %v2581, 32
        %v2619 = vpop.permute.xlu0 %2618
        %2620 = vrot.lane.b32.xlu0 %v2584, 32
        %v2621 = vpop.permute.xlu0 %2620
        %2622 = vrot.lane.b32.xlu0 %v2587, 32
        %v2623 = vpop.permute.xlu0 %2622
        %2624 = vrot.lane.b32.xlu0 %v2590, 32
        %v2625 = vpop.permute.xlu0 %2624
        %2626 = vrot.lane.b32.xlu0 %v2593, 32
        %v2627 = vpop.permute.xlu0 %2626
        %2628 = vrot.lane.b32.xlu0 %v2596, 32
        %v2629 = vpop.permute.xlu0 %2628
        %2630 = vrot.lane.b32.xlu0 %v2599, 32
        %v2631 = vpop.permute.xlu0 %2630
        %v2664 = vunpack.c.l.b16 %v1606
        %v2665 = vunpack.c.l.b16 %v1607
        %v2666 = vunpack.c.l.b16 %v1608
        %v2667 = vunpack.c.l.b16 %v1609
        %v2668 = vunpack.c.l.b16 %v1610
        %v2669 = vunpack.c.l.b16 %v1611
        %v2670 = vunpack.c.l.b16 %v1612
        %v2671 = vunpack.c.l.b16 %v1613
        %v2672 = vunpack.c.l.b16 %v1614
        %v2673 = vunpack.c.l.b16 %v1615
        %v2674 = vunpack.c.l.b16 %v1616
        %v2675 = vunpack.c.l.b16 %v1617
        %v2676 = vunpack.c.l.b16 %v1618
        %v2677 = vunpack.c.l.b16 %v1619
        %v2678 = vunpack.c.l.b16 %v1620
        %v2679 = vunpack.c.l.b16 %v1621
        %v2680 = vunpack.c.l.b16 %v1622
        %v2681 = vunpack.c.l.b16 %v1623
        %v2682 = vunpack.c.l.b16 %v1624
        %v2683 = vunpack.c.l.b16 %v1625
        %v2684 = vunpack.c.l.b16 %v1626
        %v2685 = vunpack.c.l.b16 %v1627
        %v2686 = vunpack.c.l.b16 %v1628
        %v2687 = vunpack.c.l.b16 %v1629
        %v2688 = vunpack.c.l.b16 %v1630
        %v2689 = vunpack.c.l.b16 %v1631
        %v2690 = vunpack.c.l.b16 %v1632
        %v2691 = vunpack.c.l.b16 %v1633
        %v2692 = vunpack.c.l.b16 %v1634
        %v2693 = vunpack.c.l.b16 %v1635
        %v2694 = vunpack.c.l.b16 %v1636
        %v2695 = vunpack.c.l.b16 %v1637
        %v2696 = vpack.c.b16 %v2665, %v2664
        %v2697 = vpack.c.b16 %v2667, %v2666
        %v2698 = vpack.c.b16 %v2669, %v2668
        %v2699 = vpack.c.b16 %v2671, %v2670
        %v2700 = vpack.c.b16 %v2673, %v2672
        %v2701 = vpack.c.b16 %v2675, %v2674
        %v2702 = vpack.c.b16 %v2677, %v2676
        %v2703 = vpack.c.b16 %v2679, %v2678
        %v2704 = vpack.c.b16 %v2681, %v2680
        %v2705 = vpack.c.b16 %v2683, %v2682
        %v2706 = vpack.c.b16 %v2685, %v2684
        %v2707 = vpack.c.b16 %v2687, %v2686
        %v2708 = vpack.c.b16 %v2689, %v2688
        %v2709 = vpack.c.b16 %v2691, %v2690
        %v2710 = vpack.c.b16 %v2693, %v2692
        %v2711 = vpack.c.b16 %v2695, %v2694
        %2712 = vrot.lane.b32.xlu0 %v2696, 64
        %v2713 = vpop.permute.xlu0 %2712
        %2714 = vrot.lane.b32.xlu0 %v2697, 64
        %v2715 = vpop.permute.xlu0 %2714
        %2716 = vrot.lane.b32.xlu0 %v2698, 64
        %v2717 = vpop.permute.xlu0 %2716
        %2718 = vrot.lane.b32.xlu0 %v2699, 64
        %v2719 = vpop.permute.xlu0 %2718
        %2720 = vrot.lane.b32.xlu0 %v2700, 64
        %v2721 = vpop.permute.xlu0 %2720
        %2722 = vrot.lane.b32.xlu0 %v2701, 64
        %v2723 = vpop.permute.xlu0 %2722
        %2724 = vrot.lane.b32.xlu0 %v2702, 64
        %v2725 = vpop.permute.xlu0 %2724
        %2726 = vrot.lane.b32.xlu0 %v2703, 64
        %v2727 = vpop.permute.xlu0 %2726
        %2728 = vrot.lane.b32.xlu0 %v2704, 64
        %v2729 = vpop.permute.xlu0 %2728
        %2730 = vrot.lane.b32.xlu0 %v2705, 64
        %v2731 = vpop.permute.xlu0 %2730
        %2732 = vrot.lane.b32.xlu0 %v2706, 64
        %v2733 = vpop.permute.xlu0 %2732
        %2734 = vrot.lane.b32.xlu0 %v2707, 64
        %v2735 = vpop.permute.xlu0 %2734
        %2736 = vrot.lane.b32.xlu0 %v2708, 64
        %v2737 = vpop.permute.xlu0 %2736
        %2738 = vrot.lane.b32.xlu0 %v2709, 64
        %v2739 = vpop.permute.xlu0 %2738
        %2740 = vrot.lane.b32.xlu0 %v2710, 64
        %v2741 = vpop.permute.xlu0 %2740
        %2742 = vrot.lane.b32.xlu0 %v2711, 64
        %v2743 = vpop.permute.xlu0 %2742
        %v2760 = vunpack.c.l.b16 %v1638
        %v2761 = vunpack.c.l.b16 %v1639
        %v2762 = vunpack.c.l.b16 %v1640
        %v2763 = vunpack.c.l.b16 %v1641
        %v2764 = vunpack.c.l.b16 %v1642
        %v2765 = vunpack.c.l.b16 %v1643
        %v2766 = vunpack.c.l.b16 %v1644
        %v2767 = vunpack.c.l.b16 %v1645
        %v2768 = vunpack.c.l.b16 %v1646
        %v2769 = vunpack.c.l.b16 %v1647
        %v2770 = vunpack.c.l.b16 %v1648
        %v2771 = vunpack.c.l.b16 %v1649
        %v2772 = vunpack.c.l.b16 %v1650
        %v2773 = vunpack.c.l.b16 %v1651
        %v2774 = vunpack.c.l.b16 %v1652
        %v2775 = vunpack.c.l.b16 %v1653
        %v2776 = vpack.c.b16 %v2760, %v2760
        %v2777 = vpack.c.b16 %v2761, %v2761
        %v2778 = vpack.c.b16 %v2762, %v2762
        %v2779 = vpack.c.b16 %v2763, %v2763
        %v2780 = vpack.c.b16 %v2764, %v2764
        %v2781 = vpack.c.b16 %v2765, %v2765
        %v2782 = vpack.c.b16 %v2766, %v2766
        %v2783 = vpack.c.b16 %v2767, %v2767
        %v2784 = vpack.c.b16 %v2768, %v2768
        %v2785 = vpack.c.b16 %v2769, %v2769
        %v2786 = vpack.c.b16 %v2770, %v2770
        %v2787 = vpack.c.b16 %v2771, %v2771
        %v2788 = vpack.c.b16 %v2772, %v2772
        %v2789 = vpack.c.b16 %v2773, %v2773
        %v2790 = vpack.c.b16 %v2774, %v2774
        %v2791 = vpack.c.b16 %v2775, %v2775
        %v2793 = vshrl.u32 %v2696, 16
        %v2795 = vshll.u32 %v2696, 16
        %v2797 = vrot.slane %v2795, 1
        %v2798 = vor.u32 %v2793, %v2797
        %v2800 = vshll.u32 %v2776, 16
        %v2802 = vrot.slane %v2800, 1
        %v2803 = vsel %vm1798, %v2798, %v2802
        %v2805 = vshrl.u32 %v2697, 16
        %v2807 = vshll.u32 %v2697, 16
        %v2809 = vrot.slane %v2807, 1
        %v2810 = vor.u32 %v2805, %v2809
        %v2812 = vshll.u32 %v2777, 16
        %v2814 = vrot.slane %v2812, 1
        %v2815 = vsel %vm1798, %v2810, %v2814
        %v2817 = vshrl.u32 %v2698, 16
        %v2819 = vshll.u32 %v2698, 16
        %v2821 = vrot.slane %v2819, 1
        %v2822 = vor.u32 %v2817, %v2821
        %v2824 = vshll.u32 %v2778, 16
        %v2826 = vrot.slane %v2824, 1
        %v2827 = vsel %vm1798, %v2822, %v2826
        %v2829 = vshrl.u32 %v2699, 16
        %v2831 = vshll.u32 %v2699, 16
        %v2833 = vrot.slane %v2831, 1
        %v2834 = vor.u32 %v2829, %v2833
        %v2836 = vshll.u32 %v2779, 16
        %v2838 = vrot.slane %v2836, 1
        %v2839 = vsel %vm1798, %v2834, %v2838
        %v2841 = vshrl.u32 %v2700, 16
        %v2843 = vshll.u32 %v2700, 16
        %v2845 = vrot.slane %v2843, 1
        %v2846 = vor.u32 %v2841, %v2845
        %v2848 = vshll.u32 %v2780, 16
        %v2850 = vrot.slane %v2848, 1
        %v2851 = vsel %vm1798, %v2846, %v2850
        %v2853 = vshrl.u32 %v2701, 16
        %v2855 = vshll.u32 %v2701, 16
        %v2857 = vrot.slane %v2855, 1
        %v2858 = vor.u32 %v2853, %v2857
        %v2860 = vshll.u32 %v2781, 16
        %v2862 = vrot.slane %v2860, 1
        %v2863 = vsel %vm1798, %v2858, %v2862
        %v2865 = vshrl.u32 %v2702, 16
        %v2867 = vshll.u32 %v2702, 16
        %v2869 = vrot.slane %v2867, 1
        %v2870 = vor.u32 %v2865, %v2869
        %v2872 = vshll.u32 %v2782, 16
        %v2874 = vrot.slane %v2872, 1
        %v2875 = vsel %vm1798, %v2870, %v2874
        %v2877 = vshrl.u32 %v2703, 16
        %v2879 = vshll.u32 %v2703, 16
        %v2881 = vrot.slane %v2879, 1
        %v2882 = vor.u32 %v2877, %v2881
        %v2884 = vshll.u32 %v2783, 16
        %v2886 = vrot.slane %v2884, 1
        %v2887 = vsel %vm1798, %v2882, %v2886
        %v2889 = vshrl.u32 %v2704, 16
        %v2891 = vshll.u32 %v2704, 16
        %v2893 = vrot.slane %v2891, 1
        %v2894 = vor.u32 %v2889, %v2893
        %v2896 = vshll.u32 %v2784, 16
        %v2898 = vrot.slane %v2896, 1
        %v2899 = vsel %vm1798, %v2894, %v2898
        %v2901 = vshrl.u32 %v2705, 16
        %v2903 = vshll.u32 %v2705, 16
        %v2905 = vrot.slane %v2903, 1
        %v2906 = vor.u32 %v2901, %v2905
        %v2908 = vshll.u32 %v2785, 16
        %v2910 = vrot.slane %v2908, 1
        %v2911 = vsel %vm1798, %v2906, %v2910
        %v2913 = vshrl.u32 %v2706, 16
        %v2915 = vshll.u32 %v2706, 16
        %v2917 = vrot.slane %v2915, 1
        %v2918 = vor.u32 %v2913, %v2917
        %v2920 = vshll.u32 %v2786, 16
        %v2922 = vrot.slane %v2920, 1
        %v2923 = vsel %vm1798, %v2918, %v2922
        %v2925 = vshrl.u32 %v2707, 16
        %v2927 = vshll.u32 %v2707, 16
        %v2929 = vrot.slane %v2927, 1
        %v2930 = vor.u32 %v2925, %v2929
        %v2932 = vshll.u32 %v2787, 16
        %v2934 = vrot.slane %v2932, 1
        %v2935 = vsel %vm1798, %v2930, %v2934
        %v2937 = vshrl.u32 %v2708, 16
        %v2939 = vshll.u32 %v2708, 16
        %v2941 = vrot.slane %v2939, 1
        %v2942 = vor.u32 %v2937, %v2941
        %v2944 = vshll.u32 %v2788, 16
        %v2946 = vrot.slane %v2944, 1
        %v2947 = vsel %vm1798, %v2942, %v2946
        %v2949 = vshrl.u32 %v2709, 16
        %v2951 = vshll.u32 %v2709, 16
        %v2953 = vrot.slane %v2951, 1
        %v2954 = vor.u32 %v2949, %v2953
        %v2956 = vshll.u32 %v2789, 16
        %v2958 = vrot.slane %v2956, 1
        %v2959 = vsel %vm1798, %v2954, %v2958
        %v2961 = vshrl.u32 %v2710, 16
        %v2963 = vshll.u32 %v2710, 16
        %v2965 = vrot.slane %v2963, 1
        %v2966 = vor.u32 %v2961, %v2965
        %v2968 = vshll.u32 %v2790, 16
        %v2970 = vrot.slane %v2968, 1
        %v2971 = vsel %vm1798, %v2966, %v2970
        %v2973 = vshrl.u32 %v2711, 16
        %v2975 = vshll.u32 %v2711, 16
        %v2977 = vrot.slane %v2975, 1
        %v2978 = vor.u32 %v2973, %v2977
        %v2980 = vshll.u32 %v2791, 16
        %v2982 = vrot.slane %v2980, 1
        %v2983 = vsel %vm1798, %v2978, %v2982
        %2984 = vrot.lane.b32.xlu0 %v2803, 96
        %v2985 = vpop.permute.xlu0 %2984
        %2986 = vrot.lane.b32.xlu0 %v2815, 96
        %v2987 = vpop.permute.xlu0 %2986
        %2988 = vrot.lane.b32.xlu0 %v2827, 96
        %v2989 = vpop.permute.xlu0 %2988
        %2990 = vrot.lane.b32.xlu0 %v2839, 96
        %v2991 = vpop.permute.xlu0 %2990
        %2992 = vrot.lane.b32.xlu0 %v2851, 96
        %v2993 = vpop.permute.xlu0 %2992
        %2994 = vrot.lane.b32.xlu0 %v2863, 96
        %v2995 = vpop.permute.xlu0 %2994
        %2996 = vrot.lane.b32.xlu0 %v2875, 96
        %v2997 = vpop.permute.xlu0 %2996
        %2998 = vrot.lane.b32.xlu0 %v2887, 96
        %v2999 = vpop.permute.xlu0 %2998
        %3000 = vrot.lane.b32.xlu0 %v2899, 96
        %v3001 = vpop.permute.xlu0 %3000
        %3002 = vrot.lane.b32.xlu0 %v2911, 96
        %v3003 = vpop.permute.xlu0 %3002
        %3004 = vrot.lane.b32.xlu0 %v2923, 96
        %v3005 = vpop.permute.xlu0 %3004
        %3006 = vrot.lane.b32.xlu0 %v2935, 96
        %v3007 = vpop.permute.xlu0 %3006
        %3008 = vrot.lane.b32.xlu0 %v2947, 96
        %v3009 = vpop.permute.xlu0 %3008
        %3010 = vrot.lane.b32.xlu0 %v2959, 96
        %v3011 = vpop.permute.xlu0 %3010
        %3012 = vrot.lane.b32.xlu0 %v2971, 96
        %v3013 = vpop.permute.xlu0 %3012
        %3014 = vrot.lane.b32.xlu0 %v2983, 96
        %v3015 = vpop.permute.xlu0 %3014
        %v3032 = vunpack.c.l.b16 %v1654
        %v3033 = vunpack.c.l.b16 %v1655
        %v3034 = vunpack.c.l.b16 %v1656
        %v3035 = vunpack.c.l.b16 %v1657
        %v3036 = vunpack.c.l.b16 %v1658
        %v3037 = vunpack.c.l.b16 %v1659
        %v3038 = vunpack.c.l.b16 %v1660
        %v3039 = vunpack.c.l.b16 %v1661
        %v3040 = vunpack.c.l.b16 %v1662
        %v3041 = vunpack.c.l.b16 %v1663
        %v3042 = vunpack.c.l.b16 %v1664
        %v3043 = vunpack.c.l.b16 %v1665
        %v3044 = vunpack.c.l.b16 %v1666
        %v3045 = vunpack.c.l.b16 %v1667
        %v3046 = vunpack.c.l.b16 %v1668
        %v3047 = vunpack.c.l.b16 %v1669
        %v3048 = vpack.c.b16 %v2665, %v3032
        %v3049 = vpack.c.b16 %v2667, %v3033
        %v3050 = vpack.c.b16 %v2669, %v3034
        %v3051 = vpack.c.b16 %v2671, %v3035
        %v3052 = vpack.c.b16 %v2673, %v3036
        %v3053 = vpack.c.b16 %v2675, %v3037
        %v3054 = vpack.c.b16 %v2677, %v3038
        %v3055 = vpack.c.b16 %v2679, %v3039
        %v3056 = vpack.c.b16 %v2681, %v3040
        %v3057 = vpack.c.b16 %v2683, %v3041
        %v3058 = vpack.c.b16 %v2685, %v3042
        %v3059 = vpack.c.b16 %v2687, %v3043
        %v3060 = vpack.c.b16 %v2689, %v3044
        %v3061 = vpack.c.b16 %v2691, %v3045
        %v3062 = vpack.c.b16 %v2693, %v3046
        %v3063 = vpack.c.b16 %v2695, %v3047
        %v3064 = vrot.slane %v3048, 1
        %v3065 = vrot.slane %v2776, 1
        %v3066 = vsel %vm2071, %v3064, %v3065
        %v3067 = vrot.slane %v3049, 1
        %v3068 = vrot.slane %v2777, 1
        %v3069 = vsel %vm2071, %v3067, %v3068
        %v3070 = vrot.slane %v3050, 1
        %v3071 = vrot.slane %v2778, 1
        %v3072 = vsel %vm2071, %v3070, %v3071
        %v3073 = vrot.slane %v3051, 1
        %v3074 = vrot.slane %v2779, 1
        %v3075 = vsel %vm2071, %v3073, %v3074
        %v3076 = vrot.slane %v3052, 1
        %v3077 = vrot.slane %v2780, 1
        %v3078 = vsel %vm2071, %v3076, %v3077
        %v3079 = vrot.slane %v3053, 1
        %v3080 = vrot.slane %v2781, 1
        %v3081 = vsel %vm2071, %v3079, %v3080
        %v3082 = vrot.slane %v3054, 1
        %v3083 = vrot.slane %v2782, 1
        %v3084 = vsel %vm2071, %v3082, %v3083
        %v3085 = vrot.slane %v3055, 1
        %v3086 = vrot.slane %v2783, 1
        %v3087 = vsel %vm2071, %v3085, %v3086
        %v3088 = vrot.slane %v3056, 1
        %v3089 = vrot.slane %v2784, 1
        %v3090 = vsel %vm2071, %v3088, %v3089
        %v3091 = vrot.slane %v3057, 1
        %v3092 = vrot.slane %v2785, 1
        %v3093 = vsel %vm2071, %v3091, %v3092
        %v3094 = vrot.slane %v3058, 1
        %v3095 = vrot.slane %v2786, 1
        %v3096 = vsel %vm2071, %v3094, %v3095
        %v3097 = vrot.slane %v3059, 1
        %v3098 = vrot.slane %v2787, 1
        %v3099 = vsel %vm2071, %v3097, %v3098
        %v3100 = vrot.slane %v3060, 1
        %v3101 = vrot.slane %v2788, 1
        %v3102 = vsel %vm2071, %v3100, %v3101
        %v3103 = vrot.slane %v3061, 1
        %v3104 = vrot.slane %v2789, 1
        %v3105 = vsel %vm2071, %v3103, %v3104
        %v3106 = vrot.slane %v3062, 1
        %v3107 = vrot.slane %v2790, 1
        %v3108 = vsel %vm2071, %v3106, %v3107
        %v3109 = vrot.slane %v3063, 1
        %v3110 = vrot.slane %v2791, 1
        %v3111 = vsel %vm2071, %v3109, %v3110
        %vm3112 = vcmask 261120
        %v3114 = vsel %vm3112, %v1734, %v1992
        %v3116 = vsel %vm3112, %v1735, %v1994
        %v3118 = vsel %vm3112, %v1736, %v1996
        %v3120 = vsel %vm3112, %v1737, %v1998
        %v3122 = vsel %vm3112, %v1738, %v2000
        %v3124 = vsel %vm3112, %v1739, %v2002
        %v3126 = vsel %vm3112, %v1740, %v2004
        %v3128 = vsel %vm3112, %v1741, %v2006
        %v3130 = vsel %vm3112, %v1742, %v2008
        %v3132 = vsel %vm3112, %v1743, %v2010
        %v3134 = vsel %vm3112, %v1744, %v2012
        %v3136 = vsel %vm3112, %v1745, %v2014
        %v3138 = vsel %vm3112, %v1746, %v2016
        %v3140 = vsel %vm3112, %v1747, %v2018
        %v3142 = vsel %vm3112, %v1748, %v2020
        %v3144 = vsel %vm3112, %v1749, %v2022
        %vm3145 = vcmask 523264
        %v3147 = vsel %vm3145, %v3114, %v2121
        %v3149 = vsel %vm3145, %v3116, %v2123
        %v3151 = vsel %vm3145, %v3118, %v2125
        %v3153 = vsel %vm3145, %v3120, %v2127
        %v3155 = vsel %vm3145, %v3122, %v2129
        %v3157 = vsel %vm3145, %v3124, %v2131
        %v3159 = vsel %vm3145, %v3126, %v2133
        %v3161 = vsel %vm3145, %v3128, %v2135
        %v3163 = vsel %vm3145, %v3130, %v2137
        %v3165 = vsel %vm3145, %v3132, %v2139
        %v3167 = vsel %vm3145, %v3134, %v2141
        %v3169 = vsel %vm3145, %v3136, %v2143
        %v3171 = vsel %vm3145, %v3138, %v2145
        %v3173 = vsel %vm3145, %v3140, %v2147
        %v3175 = vsel %vm3145, %v3142, %v2149
        %v3177 = vsel %vm3145, %v3144, %v2151
        %vm3178 = vcmask 785408
        %v3180 = vsel %vm3178, %v3147, %v2233
        %v3183 = vsel %vm3178, %v3149, %v2235
        %v3186 = vsel %vm3178, %v3151, %v2237
        %v3189 = vsel %vm3178, %v3153, %v2239
        %v3192 = vsel %vm3178, %v3155, %v2241
        %v3195 = vsel %vm3178, %v3157, %v2243
        %v3198 = vsel %vm3178, %v3159, %v2245
        %v3201 = vsel %vm3178, %v3161, %v2247
        %v3204 = vsel %vm3178, %v3163, %v2249
        %v3207 = vsel %vm3178, %v3165, %v2251
        %v3210 = vsel %vm3178, %v3167, %v2253
        %v3213 = vsel %vm3178, %v3169, %v2255
        %v3216 = vsel %vm3178, %v3171, %v2257
        %v3219 = vsel %vm3178, %v3173, %v2259
        %v3222 = vsel %vm3178, %v3175, %v2261
        %v3225 = vsel %vm3178, %v3177, %v2263
        %v3229 = vsel %vm3112, %v2323, %v2601
        %v3232 = vsel %vm3112, %v2335, %v2603
        %v3235 = vsel %vm3112, %v2347, %v2605
        %v3238 = vsel %vm3112, %v2359, %v2607
        %v3241 = vsel %vm3112, %v2371, %v2609
        %v3244 = vsel %vm3112, %v2383, %v2611
        %v3247 = vsel %vm3112, %v2395, %v2613
        %v3250 = vsel %vm3112, %v2407, %v2615
        %v3253 = vsel %vm3112, %v2419, %v2617
        %v3256 = vsel %vm3112, %v2431, %v2619
        %v3259 = vsel %vm3112, %v2443, %v2621
        %v3262 = vsel %vm3112, %v2455, %v2623
        %v3265 = vsel %vm3112, %v2467, %v2625
        %v3268 = vsel %vm3112, %v2479, %v2627
        %v3271 = vsel %vm3112, %v2491, %v2629
        %v3274 = vsel %vm3112, %v2503, %v2631
        %v3276 = vsel %vm3145, %v3229, %v2713
        %v3278 = vsel %vm3145, %v3232, %v2715
        %v3280 = vsel %vm3145, %v3235, %v2717
        %v3282 = vsel %vm3145, %v3238, %v2719
        %v3284 = vsel %vm3145, %v3241, %v2721
        %v3286 = vsel %vm3145, %v3244, %v2723
        %v3288 = vsel %vm3145, %v3247, %v2725
        %v3290 = vsel %vm3145, %v3250, %v2727
        %v3292 = vsel %vm3145, %v3253, %v2729
        %v3294 = vsel %vm3145, %v3256, %v2731
        %v3296 = vsel %vm3145, %v3259, %v2733
        %v3298 = vsel %vm3145, %v3262, %v2735
        %v3300 = vsel %vm3145, %v3265, %v2737
        %v3302 = vsel %vm3145, %v3268, %v2739
        %v3304 = vsel %vm3145, %v3271, %v2741
        %v3306 = vsel %vm3145, %v3274, %v2743
        %v3308 = vsel %vm3178, %v3276, %v2985
        %v3311 = vsel %vm3178, %v3278, %v2987
        %v3314 = vsel %vm3178, %v3280, %v2989
        %v3317 = vsel %vm3178, %v3282, %v2991
        %v3320 = vsel %vm3178, %v3284, %v2993
        %v3323 = vsel %vm3178, %v3286, %v2995
        %v3326 = vsel %vm3178, %v3288, %v2997
        %v3329 = vsel %vm3178, %v3290, %v2999
        %v3332 = vsel %vm3178, %v3292, %v3001
        %v3335 = vsel %vm3178, %v3294, %v3003
        %v3338 = vsel %vm3178, %v3296, %v3005
        %v3341 = vsel %vm3178, %v3298, %v3007
        %v3344 = vsel %vm3178, %v3300, %v3009
        %v3347 = vsel %vm3178, %v3302, %v3011
        %v3350 = vsel %vm3178, %v3304, %v3013
        %v3353 = vsel %vm3178, %v3306, %v3015
        %v3355 = vld [vmem:[%s2] sm:$0xf]
        %v3356 = vld [vmem:[%s2 + $0x4] sm:$0xf]
        %v3357 = vld [vmem:[%s2 + $0x8] sm:$0xf]
        %v3358 = vld [vmem:[%s2 + $0xc] sm:$0xf]
        %v3359 = vld [vmem:[%s2 + $0x10] sm:$0xf]
        %v3360 = vld [vmem:[%s2 + $0x14] sm:$0xf]
        %v3361 = vld [vmem:[%s2 + $0x18] sm:$0xf]
        %v3362 = vld [vmem:[%s2 + $0x1c] sm:$0xf]
        %v3363 = vld [vmem:[%s2 + $0x20] sm:$0xf]
        %v3364 = vld [vmem:[%s2 + $0x24] sm:$0xf]
        %v3365 = vld [vmem:[%s2 + $0x28] sm:$0xf]
        %v3366 = vld [vmem:[%s2 + $0x2c] sm:$0xf]
        %v3367 = vld [vmem:[%s2 + $0x30] sm:$0xf]
        %v3368 = vld [vmem:[%s2 + $0x34] sm:$0xf]
        %v3369 = vld [vmem:[%s2 + $0x38] sm:$0xf]
        %v3370 = vld [vmem:[%s2 + $0x3c] sm:$0xf]
        %v3371 = vld [vmem:[%s2 + $0x40] sm:$0xf]
        %v3372 = vld [vmem:[%s2 + $0x44] sm:$0xf]
        %v3373 = vld [vmem:[%s2 + $0x48] sm:$0xf]
        %v3374 = vld [vmem:[%s2 + $0x4c] sm:$0xf]
        %v3375 = vld [vmem:[%s2 + $0x50] sm:$0xf]
        %v3376 = vld [vmem:[%s2 + $0x54] sm:$0xf]
        %v3377 = vld [vmem:[%s2 + $0x58] sm:$0xf]
        %v3378 = vld [vmem:[%s2 + $0x5c] sm:$0xf]
        %v3379 = vld [vmem:[%s2 + $0x60] sm:$0xf]
        %v3380 = vld [vmem:[%s2 + $0x64] sm:$0xf]
        %v3381 = vld [vmem:[%s2 + $0x68] sm:$0xf]
        %v3382 = vld [vmem:[%s2 + $0x6c] sm:$0xf]
        %v3383 = vld [vmem:[%s2 + $0x70] sm:$0xf]
        %v3384 = vld [vmem:[%s2 + $0x74] sm:$0xf]
        %v3385 = vld [vmem:[%s2 + $0x78] sm:$0xf]
        %v3386 = vld [vmem:[%s2 + $0x7c] sm:$0xf]
        %v3387 = vld [vmem:[%s2 + $0x80] sm:$0xf]
        %v3388 = vld [vmem:[%s2 + $0x84] sm:$0xf]
        %v3389 = vld [vmem:[%s2 + $0x88] sm:$0xf]
        %v3390 = vld [vmem:[%s2 + $0x8c] sm:$0xf]
        %v3427 = vunpack.c.l.b16 %v3355
        %v3428 = vunpack.c.l.b16 %v3356
        %v3429 = vunpack.c.l.b16 %v3357
        %v3430 = vunpack.c.l.b16 %v3358
        %v3431 = vunpack.c.l.b16 %v3359
        %v3432 = vunpack.c.l.b16 %v3360
        %v3433 = vunpack.c.l.b16 %v3361
        %v3434 = vunpack.c.l.b16 %v3362
        %v3435 = vunpack.c.l.b16 %v3363
        %v3436 = vunpack.c.l.b16 %v3364
        %v3437 = vunpack.c.l.b16 %v3365
        %v3438 = vunpack.c.l.b16 %v3366
        %v3439 = vunpack.c.l.b16 %v3367
        %v3440 = vunpack.c.l.b16 %v3368
        %v3441 = vunpack.c.l.b16 %v3369
        %v3442 = vunpack.c.l.b16 %v3370
        %v3443 = vunpack.c.l.b16 %v3371
        %v3444 = vunpack.c.l.b16 %v3372
        %v3445 = vunpack.c.l.b16 %v3373
        %v3446 = vunpack.c.l.b16 %v3374
        %v3447 = vunpack.c.l.b16 %v3375
        %v3448 = vunpack.c.l.b16 %v3376
        %v3449 = vunpack.c.l.b16 %v3377
        %v3450 = vunpack.c.l.b16 %v3378
        %v3451 = vunpack.c.l.b16 %v3379
        %v3452 = vunpack.c.l.b16 %v3380
        %v3453 = vunpack.c.l.b16 %v3381
        %v3454 = vunpack.c.l.b16 %v3382
        %v3455 = vunpack.c.l.b16 %v3383
        %v3456 = vunpack.c.l.b16 %v3384
        %v3457 = vunpack.c.l.b16 %v3385
        %v3458 = vunpack.c.l.b16 %v3386
        %v3459 = vunpack.c.l.b16 %v3387
        %v3460 = vunpack.c.l.b16 %v3388
        %v3461 = vunpack.c.l.b16 %v3389
        %v3462 = vunpack.c.l.b16 %v3390
        %v3463 = vpack.c.b16 %v3428, %v3427
        %v3464 = vpack.c.b16 %v3430, %v3429
        %v3465 = vpack.c.b16 %v3432, %v3431
        %v3466 = vpack.c.b16 %v3434, %v3433
        %v3467 = vpack.c.b16 %v3436, %v3435
        %v3468 = vpack.c.b16 %v3438, %v3437
        %v3469 = vpack.c.b16 %v3440, %v3439
        %v3470 = vpack.c.b16 %v3442, %v3441
        %v3471 = vpack.c.b16 %v3444, %v3443
        %v3472 = vpack.c.b16 %v3446, %v3445
        %v3473 = vpack.c.b16 %v3448, %v3447
        %v3474 = vpack.c.b16 %v3450, %v3449
        %v3475 = vpack.c.b16 %v3452, %v3451
        %v3476 = vpack.c.b16 %v3454, %v3453
        %v3477 = vpack.c.b16 %v3456, %v3455
        %v3478 = vpack.c.b16 %v3458, %v3457
        %v3479 = vpack.c.b16 %v3460, %v3459
        %v3480 = vpack.c.b16 %v3462, %v3461
        %v3500 = vsel %vm3112, %v3066, 0
        %v3503 = vsel %vm3112, %v3069, 0
        %v3506 = vsel %vm3112, %v3072, 0
        %v3509 = vsel %vm3112, %v3075, 0
        %v3512 = vsel %vm3112, %v3078, 0
        %v3515 = vsel %vm3112, %v3081, 0
        %v3518 = vsel %vm3112, %v3084, 0
        %v3521 = vsel %vm3112, %v3087, 0
        %v3524 = vsel %vm3112, %v3090, 0
        %v3527 = vsel %vm3112, %v3093, 0
        %v3530 = vsel %vm3112, %v3096, 0
        %v3533 = vsel %vm3112, %v3099, 0
        %v3536 = vsel %vm3112, %v3102, 0
        %v3539 = vsel %vm3112, %v3105, 0
        %v3542 = vsel %vm3112, %v3108, 0
        %v3545 = vsel %vm3112, %v3111, 0
        %3547 = vmatprep.subr.bf16.mxu0 0
        %3548 = vmatpush1.bf16.msra.mxu0 %v3463
        %3549 = vmatprep.subr.bf16.mxu0 0
        %3550 = vmatpush1.bf16.msra.mxu0 %v3464
        %3551 = vmatprep.subr.bf16.mxu0 0
        %3552 = vmatpush1.bf16.msra.mxu0 %v3465
        %3553 = vmatprep.subr.bf16.mxu0 0
        %3554 = vmatpush1.bf16.msra.mxu0 %v3466
        %3555 = vmatprep.subr.bf16.mxu0 0
        %3556 = vmatpush1.bf16.msra.mxu0 %v3467
        %3557 = vmatprep.subr.bf16.mxu0 0
        %3558 = vmatpush1.bf16.msra.mxu0 %v3468
        %3559 = vmatprep.subr.bf16.mxu0 0
        %3560 = vmatpush1.bf16.msra.mxu0 %v3469
        %3561 = vmatprep.subr.bf16.mxu0 0
        %3562 = vmatpush1.bf16.msra.mxu0 %v3470
        %3563 = vmatprep.subr.bf16.mxu0 0
        %3564 = vmatpush1.bf16.msra.mxu0 %v3471
        %3565 = vmatprep.subr.bf16.mxu0 0
        %3566 = vmatpush1.bf16.msra.mxu0 %v3472
        %3567 = vmatprep.subr.bf16.mxu0 0
        %3568 = vmatpush1.bf16.msra.mxu0 %v3473
        %3569 = vmatprep.subr.bf16.mxu0 0
        %3570 = vmatpush1.bf16.msra.mxu0 %v3474
        %3571 = vmatprep.subr.bf16.mxu0 0
        %3572 = vmatpush1.bf16.msra.mxu0 %v3475
        %3573 = vmatprep.subr.bf16.mxu0 0
        %3574 = vmatpush1.bf16.msra.mxu0 %v3476
        %3575 = vmatprep.subr.bf16.mxu0 0
        %3576 = vmatpush1.bf16.msra.mxu0 %v3477
        %3577 = vmatprep.subr.bf16.mxu0 0
        %3578 = vmatpush1.bf16.msra.mxu0 %v3478
        %3579 = vmatprep.mubr.bf16.mxu0 %v3308
        %3580 = vmatmul.mubr.bf16.gmra.mrb[0].mxu0 %v3180
        %v3581 = vpop.f32.mrb[0].mxu0
        %v3582 = vadd.f32 0.0, %v3581
        %v3583 = vpop.f32.mrb[0].mxu0
        %v3584 = vpop.f32.mrb[0].mxu0
        %v3585 = vadd.f32 0.0, %v3584
        %v3586 = vpop.f32.mrb[0].mxu0
        %3587 = vmatprep.mubr.bf16.mxu0 %v3311
        %3588 = vmatmul.mubr.bf16.gmra.mrb[0].mxu0 %v3183
        %v3589 = vpop.f32.mrb[0].mxu0
        %v3590 = vadd.f32 0.0, %v3589
        %v3591 = vpop.f32.mrb[0].mxu0
        %v3592 = vpop.f32.mrb[0].mxu0
        %v3593 = vadd.f32 0.0, %v3592
        %v3594 = vpop.f32.mrb[0].mxu0
        %3595 = vmatprep.mubr.bf16.mxu0 %v3314
        %3596 = vmatmul.mubr.bf16.gmra.mrb[0].mxu0 %v3186
        %v3597 = vpop.f32.mrb[0].mxu0
        %v3598 = vadd.f32 0.0, %v3597
        %v3599 = vpop.f32.mrb[0].mxu0
        %v3600 = vpop.f32.mrb[0].mxu0
        %v3601 = vadd.f32 0.0, %v3600
        %v3602 = vpop.f32.mrb[0].mxu0
        %3603 = vmatprep.mubr.bf16.mxu0 %v3317
        %3604 = vmatmul.mubr.bf16.gmra.mrb[0].mxu0 %v3189
        %v3605 = vpop.f32.mrb[0].mxu0
        %v3606 = vadd.f32 0.0, %v3605
        %v3607 = vpop.f32.mrb[0].mxu0
        %v3608 = vpop.f32.mrb[0].mxu0
        %v3609 = vadd.f32 0.0, %v3608
        %v3610 = vpop.f32.mrb[0].mxu0
        %3611 = vmatprep.mubr.bf16.mxu0 %v3320
        %3612 = vmatmul.mubr.bf16.gmra.mrb[0].mxu0 %v3192
        %v3613 = vpop.f32.mrb[0].mxu0
        %v3614 = vadd.f32 0.0, %v3613
        %v3615 = vpop.f32.mrb[0].mxu0
        %v3616 = vpop.f32.mrb[0].mxu0
        %v3617 = vadd.f32 0.0, %v3616
        %v3618 = vpop.f32.mrb[0].mxu0
        %3619 = vmatprep.mubr.bf16.mxu0 %v3323
        %3620 = vmatmul.mubr.bf16.gmra.mrb[0].mxu0 %v3195
        %v3621 = vpop.f32.mrb[0].mxu0
        %v3622 = vadd.f32 0.0, %v3621
        %v3623 = vpop.f32.mrb[0].mxu0
        %v3624 = vpop.f32.mrb[0].mxu0
        %v3625 = vadd.f32 0.0, %v3624
        %v3626 = vpop.f32.mrb[0].mxu0
        %3627 = vmatprep.mubr.bf16.mxu0 %v3326
        %3628 = vmatmul.mubr.bf16.gmra.mrb[0].mxu0 %v3198
        %v3629 = vpop.f32.mrb[0].mxu0
        %v3630 = vadd.f32 0.0, %v3629
        %v3631 = vpop.f32.mrb[0].mxu0
        %v3632 = vpop.f32.mrb[0].mxu0
        %v3633 = vadd.f32 0.0, %v3632
        %v3634 = vpop.f32.mrb[0].mxu0
        %3635 = vmatprep.mubr.bf16.mxu0 %v3329
        %3636 = vmatmul.mubr.bf16.gmra.mrb[0].mxu0 %v3201
        %v3637 = vpop.f32.mrb[0].mxu0
        %v3638 = vadd.f32 0.0, %v3637
        %v3639 = vpop.f32.mrb[0].mxu0
        %v3640 = vpop.f32.mrb[0].mxu0
        %v3641 = vadd.f32 0.0, %v3640
        %v3642 = vpop.f32.mrb[0].mxu0
        %3643 = vmatprep.mubr.bf16.mxu0 %v3332
        %3644 = vmatmul.mubr.bf16.gmra.mrb[0].mxu0 %v3204
        %v3645 = vpop.f32.mrb[0].mxu0
        %v3646 = vadd.f32 0.0, %v3645
        %v3647 = vpop.f32.mrb[0].mxu0
        %v3648 = vpop.f32.mrb[0].mxu0
        %v3649 = vadd.f32 0.0, %v3648
        %v3650 = vpop.f32.mrb[0].mxu0
        %3651 = vmatprep.mubr.bf16.mxu0 %v3335
        %3652 = vmatmul.mubr.bf16.gmra.mrb[0].mxu0 %v3207
        %v3653 = vpop.f32.mrb[0].mxu0
        %v3654 = vadd.f32 0.0, %v3653
        %v3655 = vpop.f32.mrb[0].mxu0
        %v3656 = vpop.f32.mrb[0].mxu0
        %v3657 = vadd.f32 0.0, %v3656
        %v3658 = vpop.f32.mrb[0].mxu0
        %3659 = vmatprep.mubr.bf16.mxu0 %v3338
        %3660 = vmatmul.mubr.bf16.gmra.mrb[0].mxu0 %v3210
        %v3661 = vpop.f32.mrb[0].mxu0
        %v3662 = vadd.f32 0.0, %v3661
        %v3663 = vpop.f32.mrb[0].mxu0
        %v3664 = vpop.f32.mrb[0].mxu0
        %v3665 = vadd.f32 0.0, %v3664
        %v3666 = vpop.f32.mrb[0].mxu0
        %3667 = vmatprep.mubr.bf16.mxu0 %v3341
        %3668 = vmatmul.mubr.bf16.gmra.mrb[0].mxu0 %v3213
        %v3669 = vpop.f32.mrb[0].mxu0
        %v3670 = vadd.f32 0.0, %v3669
        %v3671 = vpop.f32.mrb[0].mxu0
        %v3672 = vpop.f32.mrb[0].mxu0
        %v3673 = vadd.f32 0.0, %v3672
        %v3674 = vpop.f32.mrb[0].mxu0
        %3675 = vmatprep.mubr.bf16.mxu0 %v3344
        %3676 = vmatmul.mubr.bf16.gmra.mrb[0].mxu0 %v3216
        %v3677 = vpop.f32.mrb[0].mxu0
        %v3678 = vadd.f32 0.0, %v3677
        %v3679 = vpop.f32.mrb[0].mxu0
        %v3680 = vpop.f32.mrb[0].mxu0
        %v3681 = vadd.f32 0.0, %v3680
        %v3682 = vpop.f32.mrb[0].mxu0
        %3683 = vmatprep.mubr.bf16.mxu0 %v3347
        %3684 = vmatmul.mubr.bf16.gmra.mrb[0].mxu0 %v3219
        %v3685 = vpop.f32.mrb[0].mxu0
        %v3686 = vadd.f32 0.0, %v3685
        %v3687 = vpop.f32.mrb[0].mxu0
        %v3688 = vpop.f32.mrb[0].mxu0
        %v3689 = vadd.f32 0.0, %v3688
        %v3690 = vpop.f32.mrb[0].mxu0
        %3691 = vmatprep.mubr.bf16.mxu0 %v3350
        %3692 = vmatmul.mubr.bf16.gmra.mrb[0].mxu0 %v3222
        %v3693 = vpop.f32.mrb[0].mxu0
        %v3694 = vadd.f32 0.0, %v3693
        %v3695 = vpop.f32.mrb[0].mxu0
        %v3696 = vpop.f32.mrb[0].mxu0
        %v3697 = vadd.f32 0.0, %v3696
        %v3698 = vpop.f32.mrb[0].mxu0
        %3699 = vmatprep.mubr.bf16.mxu0 %v3353
        %3700 = vmatmul.mubr.bf16.gmra.mrb[0].mxu0 %v3225
        %v3701 = vpop.f32.mrb[0].mxu0
        %v3702 = vadd.f32 0.0, %v3701
        %v3703 = vpop.f32.mrb[0].mxu0
        %v3704 = vpop.f32.mrb[0].mxu0
        %v3705 = vadd.f32 0.0, %v3704
        %v3706 = vpop.f32.mrb[0].mxu0
        %3707 = vdwg.mxu0
        %3708 = vmatprep.subr.bf16.mxu0 0
        %3709 = vmatpush1.bf16.msra.mxu0 %v3479
        %3710 = vmatprep.subr.bf16.mxu0 0
        %3711 = vmatpush1.bf16.msra.mxu0 %v3480
        %3712 = vmatprep.subr.bf16.mxu0 0
        %3713 = vmatpush1.bf16.msra.mxu0 0
        %3714 = vmatprep.subr.bf16.mxu0 0
        %3715 = vmatpush1.bf16.msra.mxu0 0
        %3716 = vmatprep.subr.bf16.mxu0 0
        %3717 = vmatpush1.bf16.msra.mxu0 0
        %3718 = vmatprep.subr.bf16.mxu0 0
        %3719 = vmatpush1.bf16.msra.mxu0 0
        %3720 = vmatprep.subr.bf16.mxu0 0
        %3721 = vmatpush1.bf16.msra.mxu0 0
        %3722 = vmatprep.subr.bf16.mxu0 0
        %3723 = vmatpush1.bf16.msra.mxu0 0
        %3724 = vmatprep.subr.bf16.mxu0 0
        %3725 = vmatpush1.bf16.msra.mxu0 0
        %3726 = vmatprep.subr.bf16.mxu0 0
        %3727 = vmatpush1.bf16.msra.mxu0 0
        %3728 = vmatprep.subr.bf16.mxu0 0
        %3729 = vmatpush1.bf16.msra.mxu0 0
        %3730 = vmatprep.subr.bf16.mxu0 0
        %3731 = vmatpush1.bf16.msra.mxu0 0
        %3732 = vmatprep.subr.bf16.mxu0 0
        %3733 = vmatpush1.bf16.msra.mxu0 0
        %3734 = vmatprep.subr.bf16.mxu0 0
        %3735 = vmatpush1.bf16.msra.mxu0 0
        %3736 = vmatprep.subr.bf16.mxu0 0
        %3737 = vmatpush1.bf16.msra.mxu0 0
        %3738 = vmatprep.subr.bf16.mxu0 0
        %3739 = vmatpush1.bf16.msra.mxu0 0
        %3740 = vmatprep.mubr.bf16.mxu0 0
        %3741 = vmatmul.mubr.bf16.gmra.mrb[0].mxu0 %v3500
        %v3742 = vpop.f32.mrb[0].mxu0
        %v3743 = vadd.f32 %v3582, %v3742
        %v3744 = vpop.f32.mrb[0].mxu0
        %v3745 = vpop.f32.mrb[0].mxu0
        %v3746 = vadd.f32 %v3585, %v3745
        %v3747 = vpop.f32.mrb[0].mxu0
        %3748 = vmatprep.mubr.bf16.mxu0 0
        %3749 = vmatmul.mubr.bf16.gmra.mrb[0].mxu0 %v3503
        %v3750 = vpop.f32.mrb[0].mxu0
        %v3751 = vadd.f32 %v3590, %v3750
        %v3752 = vpop.f32.mrb[0].mxu0
        %v3753 = vpop.f32.mrb[0].mxu0
        %v3754 = vadd.f32 %v3593, %v3753
        %v3755 = vpop.f32.mrb[0].mxu0
        %3756 = vmatprep.mubr.bf16.mxu0 0
        %3757 = vmatmul.mubr.bf16.gmra.mrb[0].mxu0 %v3506
        %v3758 = vpop.f32.mrb[0].mxu0
        %v3759 = vadd.f32 %v3598, %v3758
        %v3760 = vpop.f32.mrb[0].mxu0
        %v3761 = vpop.f32.mrb[0].mxu0
        %v3762 = vadd.f32 %v3601, %v3761
        %v3763 = vpop.f32.mrb[0].mxu0
        %3764 = vmatprep.mubr.bf16.mxu0 0
        %3765 = vmatmul.mubr.bf16.gmra.mrb[0].mxu0 %v3509
        %v3766 = vpop.f32.mrb[0].mxu0
        %v3767 = vadd.f32 %v3606, %v3766
        %v3768 = vpop.f32.mrb[0].mxu0
        %v3769 = vpop.f32.mrb[0].mxu0
        %v3770 = vadd.f32 %v3609, %v3769
        %v3771 = vpop.f32.mrb[0].mxu0
        %3772 = vmatprep.mubr.bf16.mxu0 0
        %3773 = vmatmul.mubr.bf16.gmra.mrb[0].mxu0 %v3512
        %v3774 = vpop.f32.mrb[0].mxu0
        %v3775 = vadd.f32 %v3614, %v3774
        %v3776 = vpop.f32.mrb[0].mxu0
        %v3777 = vpop.f32.mrb[0].mxu0
        %v3778 = vadd.f32 %v3617, %v3777
        %v3779 = vpop.f32.mrb[0].mxu0
        %3780 = vmatprep.mubr.bf16.mxu0 0
        %3781 = vmatmul.mubr.bf16.gmra.mrb[0].mxu0 %v3515
        %v3782 = vpop.f32.mrb[0].mxu0
        %v3783 = vadd.f32 %v3622, %v3782
        %v3784 = vpop.f32.mrb[0].mxu0
        %v3785 = vpop.f32.mrb[0].mxu0
        %v3786 = vadd.f32 %v3625, %v3785
        %v3787 = vpop.f32.mrb[0].mxu0
        %3788 = vmatprep.mubr.bf16.mxu0 0
        %3789 = vmatmul.mubr.bf16.gmra.mrb[0].mxu0 %v3518
        %v3790 = vpop.f32.mrb[0].mxu0
        %v3791 = vadd.f32 %v3630, %v3790
        %v3792 = vpop.f32.mrb[0].mxu0
        %v3793 = vpop.f32.mrb[0].mxu0
        %v3794 = vadd.f32 %v3633, %v3793
        %v3795 = vpop.f32.mrb[0].mxu0
        %3796 = vmatprep.mubr.bf16.mxu0 0
        %3797 = vmatmul.mubr.bf16.gmra.mrb[0].mxu0 %v3521
        %v3798 = vpop.f32.mrb[0].mxu0
        %v3799 = vadd.f32 %v3638, %v3798
        %v3800 = vpop.f32.mrb[0].mxu0
        %v3801 = vpop.f32.mrb[0].mxu0
        %v3802 = vadd.f32 %v3641, %v3801
        %v3803 = vpop.f32.mrb[0].mxu0
        %3804 = vmatprep.mubr.bf16.mxu0 0
        %3805 = vmatmul.mubr.bf16.gmra.mrb[0].mxu0 %v3524
        %v3806 = vpop.f32.mrb[0].mxu0
        %v3807 = vadd.f32 %v3646, %v3806
        %v3808 = vpop.f32.mrb[0].mxu0
        %v3809 = vpop.f32.mrb[0].mxu0
        %v3810 = vadd.f32 %v3649, %v3809
        %v3811 = vpop.f32.mrb[0].mxu0
        %3812 = vmatprep.mubr.bf16.mxu0 0
        %3813 = vmatmul.mubr.bf16.gmra.mrb[0].mxu0 %v3527
        %v3814 = vpop.f32.mrb[0].mxu0
        %v3815 = vadd.f32 %v3654, %v3814
        %v3816 = vpop.f32.mrb[0].mxu0
        %v3817 = vpop.f32.mrb[0].mxu0
        %v3818 = vadd.f32 %v3657, %v3817
        %v3819 = vpop.f32.mrb[0].mxu0
        %3820 = vmatprep.mubr.bf16.mxu0 0
        %3821 = vmatmul.mubr.bf16.gmra.mrb[0].mxu0 %v3530
        %v3822 = vpop.f32.mrb[0].mxu0
        %v3823 = vadd.f32 %v3662, %v3822
        %v3824 = vpop.f32.mrb[0].mxu0
        %v3825 = vpop.f32.mrb[0].mxu0
        %v3826 = vadd.f32 %v3665, %v3825
        %v3827 = vpop.f32.mrb[0].mxu0
        %3828 = vmatprep.mubr.bf16.mxu0 0
        %3829 = vmatmul.mubr.bf16.gmra.mrb[0].mxu0 %v3533
        %v3830 = vpop.f32.mrb[0].mxu0
        %v3831 = vadd.f32 %v3670, %v3830
        %v3832 = vpop.f32.mrb[0].mxu0
        %v3833 = vpop.f32.mrb[0].mxu0
        %v3834 = vadd.f32 %v3673, %v3833
        %v3835 = vpop.f32.mrb[0].mxu0
        %3836 = vmatprep.mubr.bf16.mxu0 0
        %3837 = vmatmul.mubr.bf16.gmra.mrb[0].mxu0 %v3536
        %v3838 = vpop.f32.mrb[0].mxu0
        %v3839 = vadd.f32 %v3678, %v3838
        %v3840 = vpop.f32.mrb[0].mxu0
        %v3841 = vpop.f32.mrb[0].mxu0
        %v3842 = vadd.f32 %v3681, %v3841
        %v3843 = vpop.f32.mrb[0].mxu0
        %3844 = vmatprep.mubr.bf16.mxu0 0
        %3845 = vmatmul.mubr.bf16.gmra.mrb[0].mxu0 %v3539
        %v3846 = vpop.f32.mrb[0].mxu0
        %v3847 = vadd.f32 %v3686, %v3846
        %v3848 = vpop.f32.mrb[0].mxu0
        %v3849 = vpop.f32.mrb[0].mxu0
        %v3850 = vadd.f32 %v3689, %v3849
        %v3851 = vpop.f32.mrb[0].mxu0
        %3852 = vmatprep.mubr.bf16.mxu0 0
        %3853 = vmatmul.mubr.bf16.gmra.mrb[0].mxu0 %v3542
        %v3854 = vpop.f32.mrb[0].mxu0
        %v3855 = vadd.f32 %v3694, %v3854
        %v3856 = vpop.f32.mrb[0].mxu0
        %v3857 = vpop.f32.mrb[0].mxu0
        %v3858 = vadd.f32 %v3697, %v3857
        %v3859 = vpop.f32.mrb[0].mxu0
        %3860 = vmatprep.mubr.bf16.mxu0 0
        %3861 = vmatmul.mubr.bf16.gmra.mrb[0].mxu0 %v3545
        %v3862 = vpop.f32.mrb[0].mxu0
        %v3863 = vadd.f32 %v3702, %v3862
        %v3864 = vpop.f32.mrb[0].mxu0
        %v3865 = vpop.f32.mrb[0].mxu0
        %v3866 = vadd.f32 %v3705, %v3865
        %v3867 = vpop.f32.mrb[0].mxu0
        %3868 = vdwg.mxu0
        %v3869 = vld [vmem:[%s6] sm:$0x1]
        %v3871 = vlaneseq
        %v3872 = vshrl.u32 %v3871, 7
        %v3873 = vsub.s32 0, %v3872
        %v3874 = vrot.slane %v3869, %v3873
        %v3876 = vmul.f32 %v3743, %v3874
        %v3877 = vmul.f32 %v3746, %v3874
        %v3878 = vmul.f32 %v3751, %v3874
        %v3879 = vmul.f32 %v3754, %v3874
        %v3880 = vmul.f32 %v3759, %v3874
        %v3881 = vmul.f32 %v3762, %v3874
        %v3882 = vmul.f32 %v3767, %v3874
        %v3883 = vmul.f32 %v3770, %v3874
        %v3884 = vmul.f32 %v3775, %v3874
        %v3885 = vmul.f32 %v3778, %v3874
        %v3886 = vmul.f32 %v3783, %v3874
        %v3887 = vmul.f32 %v3786, %v3874
        %v3888 = vmul.f32 %v3791, %v3874
        %v3889 = vmul.f32 %v3794, %v3874
        %v3890 = vmul.f32 %v3799, %v3874
        %v3891 = vmul.f32 %v3802, %v3874
        %v3892 = vmul.f32 %v3807, %v3874
        %v3893 = vmul.f32 %v3810, %v3874
        %v3894 = vmul.f32 %v3815, %v3874
        %v3895 = vmul.f32 %v3818, %v3874
        %v3896 = vmul.f32 %v3823, %v3874
        %v3897 = vmul.f32 %v3826, %v3874
        %v3898 = vmul.f32 %v3831, %v3874
        %v3899 = vmul.f32 %v3834, %v3874
        %v3900 = vmul.f32 %v3839, %v3874
        %v3901 = vmul.f32 %v3842, %v3874
        %v3902 = vmul.f32 %v3847, %v3874
        %v3903 = vmul.f32 %v3850, %v3874
        %v3904 = vmul.f32 %v3855, %v3874
        %v3905 = vmul.f32 %v3858, %v3874
        %v3906 = vmul.f32 %v3863, %v3874
        %v3907 = vmul.f32 %v3866, %v3874
        %v3908 = vld [vmem:[%s7] sm:$0x1]
        %v3910 = vlaneseq
        %v3911 = vshrl.u32 %v3910, 7
        %v3912 = vsub.s32 0, %v3911
        %v3913 = vrot.slane %v3908, %v3912
        %v3915 = vadd.f32 %v3876, %v3913
        %v3916 = vadd.f32 %v3877, %v3913
        %v3917 = vadd.f32 %v3878, %v3913
        %v3918 = vadd.f32 %v3879, %v3913
        %v3919 = vadd.f32 %v3880, %v3913
        %v3920 = vadd.f32 %v3881, %v3913
        %v3921 = vadd.f32 %v3882, %v3913
        %v3922 = vadd.f32 %v3883, %v3913
        %v3923 = vadd.f32 %v3884, %v3913
        %v3924 = vadd.f32 %v3885, %v3913
        %v3925 = vadd.f32 %v3886, %v3913
        %v3926 = vadd.f32 %v3887, %v3913
        %v3927 = vadd.f32 %v3888, %v3913
        %v3928 = vadd.f32 %v3889, %v3913
        %v3929 = vadd.f32 %v3890, %v3913
        %v3930 = vadd.f32 %v3891, %v3913
        %v3931 = vadd.f32 %v3892, %v3913
        %v3932 = vadd.f32 %v3893, %v3913
        %v3933 = vadd.f32 %v3894, %v3913
        %v3934 = vadd.f32 %v3895, %v3913
        %v3935 = vadd.f32 %v3896, %v3913
        %v3936 = vadd.f32 %v3897, %v3913
        %v3937 = vadd.f32 %v3898, %v3913
        %v3938 = vadd.f32 %v3899, %v3913
        %v3939 = vadd.f32 %v3900, %v3913
        %v3940 = vadd.f32 %v3901, %v3913
        %v3941 = vadd.f32 %v3902, %v3913
        %v3942 = vadd.f32 %v3903, %v3913
        %v3943 = vadd.f32 %v3904, %v3913
        %v3944 = vadd.f32 %v3905, %v3913
        %v3945 = vadd.f32 %v3906, %v3913
        %v3946 = vadd.f32 %v3907, %v3913
        %v3947 = vmax.f32 %v3915, 0.0
        %v3948 = vmax.f32 %v3916, 0.0
        %v3949 = vmax.f32 %v3917, 0.0
        %v3950 = vmax.f32 %v3918, 0.0
        %v3951 = vmax.f32 %v3919, 0.0
        %v3952 = vmax.f32 %v3920, 0.0
        %v3953 = vmax.f32 %v3921, 0.0
        %v3954 = vmax.f32 %v3922, 0.0
        %v3955 = vmax.f32 %v3923, 0.0
        %v3956 = vmax.f32 %v3924, 0.0
        %v3957 = vmax.f32 %v3925, 0.0
        %v3958 = vmax.f32 %v3926, 0.0
        %v3959 = vmax.f32 %v3927, 0.0
        %v3960 = vmax.f32 %v3928, 0.0
        %v3961 = vmax.f32 %v3929, 0.0
        %v3962 = vmax.f32 %v3930, 0.0
        %v3963 = vmax.f32 %v3931, 0.0
        %v3964 = vmax.f32 %v3932, 0.0
        %v3965 = vmax.f32 %v3933, 0.0
        %v3966 = vmax.f32 %v3934, 0.0
        %v3967 = vmax.f32 %v3935, 0.0
        %v3968 = vmax.f32 %v3936, 0.0
        %v3969 = vmax.f32 %v3937, 0.0
        %v3970 = vmax.f32 %v3938, 0.0
        %v3971 = vmax.f32 %v3939, 0.0
        %v3972 = vmax.f32 %v3940, 0.0
        %v3973 = vmax.f32 %v3941, 0.0
        %v3974 = vmax.f32 %v3942, 0.0
        %v3975 = vmax.f32 %v3943, 0.0
        %v3976 = vmax.f32 %v3944, 0.0
        %v3977 = vmax.f32 %v3945, 0.0
        %v3978 = vmax.f32 %v3946, 0.0
        %v3979 = vpack.c.bf16 %v3948, %v3947
        %v3980 = vpack.c.bf16 %v3950, %v3949
        %v3981 = vpack.c.bf16 %v3952, %v3951
        %v3982 = vpack.c.bf16 %v3954, %v3953
        %v3983 = vpack.c.bf16 %v3956, %v3955
        %v3984 = vpack.c.bf16 %v3958, %v3957
        %v3985 = vpack.c.bf16 %v3960, %v3959
        %v3986 = vpack.c.bf16 %v3962, %v3961
        %v3987 = vpack.c.bf16 %v3964, %v3963
        %v3988 = vpack.c.bf16 %v3966, %v3965
        %v3989 = vpack.c.bf16 %v3968, %v3967
        %v3990 = vpack.c.bf16 %v3970, %v3969
        %v3991 = vpack.c.bf16 %v3972, %v3971
        %v3992 = vpack.c.bf16 %v3974, %v3973
        %v3993 = vpack.c.bf16 %v3976, %v3975
        %v3994 = vpack.c.bf16 %v3978, %v3977
        %v3995 = vld [vmem:[%s3] sm:$0xf]
        %v3996 = vld [vmem:[%s3 + $0x4] sm:$0xf]
        %v3997 = vld [vmem:[%s3 + $0x8] sm:$0xf]
        %v3998 = vld [vmem:[%s3 + $0xc] sm:$0xf]
        %v4003 = vunpack.c.l.b16 %v3995
        %v4004 = vunpack.c.l.b16 %v3996
        %v4005 = vunpack.c.l.b16 %v3997
        %v4006 = vunpack.c.l.b16 %v3998
        %v4007 = vpack.c.b16 %v4004, %v4003
        %v4008 = vpack.c.b16 %v4006, %v4005
        %v4012 = vsel %vm3112, %v3979, 0
        %v4015 = vsel %vm3112, %v3980, 0
        %v4018 = vsel %vm3112, %v3981, 0
        %v4021 = vsel %vm3112, %v3982, 0
        %v4024 = vsel %vm3112, %v3983, 0
        %v4027 = vsel %vm3112, %v3984, 0
        %v4030 = vsel %vm3112, %v3985, 0
        %v4033 = vsel %vm3112, %v3986, 0
        %v4036 = vsel %vm3112, %v3987, 0
        %v4039 = vsel %vm3112, %v3988, 0
        %v4042 = vsel %vm3112, %v3989, 0
        %v4045 = vsel %vm3112, %v3990, 0
        %v4048 = vsel %vm3112, %v3991, 0
        %v4051 = vsel %vm3112, %v3992, 0
        %v4054 = vsel %vm3112, %v3993, 0
        %v4057 = vsel %vm3112, %v3994, 0
        %4059 = vmatprep.subr.bf16.mxu0 0
        %4060 = vmatpush1.bf16.msra.mxu0 %v4007
        %4061 = vmatprep.subr.bf16.mxu0 0
        %4062 = vmatpush1.bf16.msra.mxu0 %v4008
        %4063 = vmatprep.subr.bf16.mxu0 0
        %4064 = vmatpush1.bf16.msra.mxu0 0
        %4065 = vmatprep.subr.bf16.mxu0 0
        %4066 = vmatpush1.bf16.msra.mxu0 0
        %4067 = vmatprep.subr.bf16.mxu0 0
        %4068 = vmatpush1.bf16.msra.mxu0 0
        %4069 = vmatprep.subr.bf16.mxu0 0
        %4070 = vmatpush1.bf16.msra.mxu0 0
        %4071 = vmatprep.subr.bf16.mxu0 0
        %4072 = vmatpush1.bf16.msra.mxu0 0
        %4073 = vmatprep.subr.bf16.mxu0 0
        %4074 = vmatpush1.bf16.msra.mxu0 0
        %4075 = vmatprep.subr.bf16.mxu0 0
        %4076 = vmatpush1.bf16.msra.mxu0 0
        %4077 = vmatprep.subr.bf16.mxu0 0
        %4078 = vmatpush1.bf16.msra.mxu0 0
        %4079 = vmatprep.subr.bf16.mxu0 0
        %4080 = vmatpush1.bf16.msra.mxu0 0
        %4081 = vmatprep.subr.bf16.mxu0 0
        %4082 = vmatpush1.bf16.msra.mxu0 0
        %4083 = vmatprep.subr.bf16.mxu0 0
        %4084 = vmatpush1.bf16.msra.mxu0 0
        %4085 = vmatprep.subr.bf16.mxu0 0
        %4086 = vmatpush1.bf16.msra.mxu0 0
        %4087 = vmatprep.subr.bf16.mxu0 0
        %4088 = vmatpush1.bf16.msra.mxu0 0
        %4089 = vmatprep.subr.bf16.mxu0 0
        %4090 = vmatpush1.bf16.msra.mxu0 0
        %4091 = vmatprep.mubr.bf16.mxu0 0
        %4092 = vmatmul.mubr.bf16.gmra.mrb[0].mxu0 %v4012
        %v4093 = vpop.f32.mrb[0].mxu0
        %v4094 = vadd.f32 0.0, %v4093
        %v4095 = vpop.f32.mrb[0].mxu0
        %v4096 = vpop.f32.mrb[0].mxu0
        %v4097 = vadd.f32 0.0, %v4096
        %v4098 = vpop.f32.mrb[0].mxu0
        %4099 = vmatprep.mubr.bf16.mxu0 0
        %4100 = vmatmul.mubr.bf16.gmra.mrb[0].mxu0 %v4015
        %v4101 = vpop.f32.mrb[0].mxu0
        %v4102 = vadd.f32 0.0, %v4101
        %v4103 = vpop.f32.mrb[0].mxu0
        %v4104 = vpop.f32.mrb[0].mxu0
        %v4105 = vadd.f32 0.0, %v4104
        %v4106 = vpop.f32.mrb[0].mxu0
        %4107 = vmatprep.mubr.bf16.mxu0 0
        %4108 = vmatmul.mubr.bf16.gmra.mrb[0].mxu0 %v4018
        %v4109 = vpop.f32.mrb[0].mxu0
        %v4110 = vadd.f32 0.0, %v4109
        %v4111 = vpop.f32.mrb[0].mxu0
        %v4112 = vpop.f32.mrb[0].mxu0
        %v4113 = vadd.f32 0.0, %v4112
        %v4114 = vpop.f32.mrb[0].mxu0
        %4115 = vmatprep.mubr.bf16.mxu0 0
        %4116 = vmatmul.mubr.bf16.gmra.mrb[0].mxu0 %v4021
        %v4117 = vpop.f32.mrb[0].mxu0
        %v4118 = vadd.f32 0.0, %v4117
        %v4119 = vpop.f32.mrb[0].mxu0
        %v4120 = vpop.f32.mrb[0].mxu0
        %v4121 = vadd.f32 0.0, %v4120
        %v4122 = vpop.f32.mrb[0].mxu0
        %4123 = vmatprep.mubr.bf16.mxu0 0
        %4124 = vmatmul.mubr.bf16.gmra.mrb[0].mxu0 %v4024
        %v4125 = vpop.f32.mrb[0].mxu0
        %v4126 = vadd.f32 0.0, %v4125
        %v4127 = vpop.f32.mrb[0].mxu0
        %v4128 = vpop.f32.mrb[0].mxu0
        %v4129 = vadd.f32 0.0, %v4128
        %v4130 = vpop.f32.mrb[0].mxu0
        %4131 = vmatprep.mubr.bf16.mxu0 0
        %4132 = vmatmul.mubr.bf16.gmra.mrb[0].mxu0 %v4027
        %v4133 = vpop.f32.mrb[0].mxu0
        %v4134 = vadd.f32 0.0, %v4133
        %v4135 = vpop.f32.mrb[0].mxu0
        %v4136 = vpop.f32.mrb[0].mxu0
        %v4137 = vadd.f32 0.0, %v4136
        %v4138 = vpop.f32.mrb[0].mxu0
        %4139 = vmatprep.mubr.bf16.mxu0 0
        %4140 = vmatmul.mubr.bf16.gmra.mrb[0].mxu0 %v4030
        %v4141 = vpop.f32.mrb[0].mxu0
        %v4142 = vadd.f32 0.0, %v4141
        %v4143 = vpop.f32.mrb[0].mxu0
        %v4144 = vpop.f32.mrb[0].mxu0
        %v4145 = vadd.f32 0.0, %v4144
        %v4146 = vpop.f32.mrb[0].mxu0
        %4147 = vmatprep.mubr.bf16.mxu0 0
        %4148 = vmatmul.mubr.bf16.gmra.mrb[0].mxu0 %v4033
        %v4149 = vpop.f32.mrb[0].mxu0
        %v4150 = vadd.f32 0.0, %v4149
        %v4151 = vpop.f32.mrb[0].mxu0
        %v4152 = vpop.f32.mrb[0].mxu0
        %v4153 = vadd.f32 0.0, %v4152
        %v4154 = vpop.f32.mrb[0].mxu0
        %4155 = vmatprep.mubr.bf16.mxu0 0
        %4156 = vmatmul.mubr.bf16.gmra.mrb[0].mxu0 %v4036
        %v4157 = vpop.f32.mrb[0].mxu0
        %v4158 = vadd.f32 0.0, %v4157
        %v4159 = vpop.f32.mrb[0].mxu0
        %v4160 = vpop.f32.mrb[0].mxu0
        %v4161 = vadd.f32 0.0, %v4160
        %v4162 = vpop.f32.mrb[0].mxu0
        %4163 = vmatprep.mubr.bf16.mxu0 0
        %4164 = vmatmul.mubr.bf16.gmra.mrb[0].mxu0 %v4039
        %v4165 = vpop.f32.mrb[0].mxu0
        %v4166 = vadd.f32 0.0, %v4165
        %v4167 = vpop.f32.mrb[0].mxu0
        %v4168 = vpop.f32.mrb[0].mxu0
        %v4169 = vadd.f32 0.0, %v4168
        %v4170 = vpop.f32.mrb[0].mxu0
        %4171 = vmatprep.mubr.bf16.mxu0 0
        %4172 = vmatmul.mubr.bf16.gmra.mrb[0].mxu0 %v4042
        %v4173 = vpop.f32.mrb[0].mxu0
        %v4174 = vadd.f32 0.0, %v4173
        %v4175 = vpop.f32.mrb[0].mxu0
        %v4176 = vpop.f32.mrb[0].mxu0
        %v4177 = vadd.f32 0.0, %v4176
        %v4178 = vpop.f32.mrb[0].mxu0
        %4179 = vmatprep.mubr.bf16.mxu0 0
        %4180 = vmatmul.mubr.bf16.gmra.mrb[0].mxu0 %v4045
        %v4181 = vpop.f32.mrb[0].mxu0
        %v4182 = vadd.f32 0.0, %v4181
        %v4183 = vpop.f32.mrb[0].mxu0
        %v4184 = vpop.f32.mrb[0].mxu0
        %v4185 = vadd.f32 0.0, %v4184
        %v4186 = vpop.f32.mrb[0].mxu0
        %4187 = vmatprep.mubr.bf16.mxu0 0
        %4188 = vmatmul.mubr.bf16.gmra.mrb[0].mxu0 %v4048
        %v4189 = vpop.f32.mrb[0].mxu0
        %v4190 = vadd.f32 0.0, %v4189
        %v4191 = vpop.f32.mrb[0].mxu0
        %v4192 = vpop.f32.mrb[0].mxu0
        %v4193 = vadd.f32 0.0, %v4192
        %v4194 = vpop.f32.mrb[0].mxu0
        %4195 = vmatprep.mubr.bf16.mxu0 0
        %4196 = vmatmul.mubr.bf16.gmra.mrb[0].mxu0 %v4051
        %v4197 = vpop.f32.mrb[0].mxu0
        %v4198 = vadd.f32 0.0, %v4197
        %v4199 = vpop.f32.mrb[0].mxu0
        %v4200 = vpop.f32.mrb[0].mxu0
        %v4201 = vadd.f32 0.0, %v4200
        %v4202 = vpop.f32.mrb[0].mxu0
        %4203 = vmatprep.mubr.bf16.mxu0 0
        %4204 = vmatmul.mubr.bf16.gmra.mrb[0].mxu0 %v4054
        %v4205 = vpop.f32.mrb[0].mxu0
        %v4206 = vadd.f32 0.0, %v4205
        %v4207 = vpop.f32.mrb[0].mxu0
        %v4208 = vpop.f32.mrb[0].mxu0
        %v4209 = vadd.f32 0.0, %v4208
        %v4210 = vpop.f32.mrb[0].mxu0
        %4211 = vmatprep.mubr.bf16.mxu0 0
        %4212 = vmatmul.mubr.bf16.gmra.mrb[0].mxu0 %v4057
        %v4213 = vpop.f32.mrb[0].mxu0
        %v4214 = vadd.f32 0.0, %v4213
        %v4215 = vpop.f32.mrb[0].mxu0
        %v4216 = vpop.f32.mrb[0].mxu0
        %v4217 = vadd.f32 0.0, %v4216
        %v4218 = vpop.f32.mrb[0].mxu0
        %4219 = vdwg.mxu0
        %v4220 = vld [vmem:[%s8] sm:$0x1]
        %v4222 = vlaneseq
        %v4223 = vshrl.u32 %v4222, 7
        %v4224 = vsub.s32 0, %v4223
        %v4225 = vrot.slane %v4220, %v4224
        %v4227 = vmul.f32 %v4094, %v4225
        %v4228 = vmul.f32 %v4097, %v4225
        %v4229 = vmul.f32 %v4102, %v4225
        %v4230 = vmul.f32 %v4105, %v4225
        %v4231 = vmul.f32 %v4110, %v4225
        %v4232 = vmul.f32 %v4113, %v4225
        %v4233 = vmul.f32 %v4118, %v4225
        %v4234 = vmul.f32 %v4121, %v4225
        %v4235 = vmul.f32 %v4126, %v4225
        %v4236 = vmul.f32 %v4129, %v4225
        %v4237 = vmul.f32 %v4134, %v4225
        %v4238 = vmul.f32 %v4137, %v4225
        %v4239 = vmul.f32 %v4142, %v4225
        %v4240 = vmul.f32 %v4145, %v4225
        %v4241 = vmul.f32 %v4150, %v4225
        %v4242 = vmul.f32 %v4153, %v4225
        %v4243 = vmul.f32 %v4158, %v4225
        %v4244 = vmul.f32 %v4161, %v4225
        %v4245 = vmul.f32 %v4166, %v4225
        %v4246 = vmul.f32 %v4169, %v4225
        %v4247 = vmul.f32 %v4174, %v4225
        %v4248 = vmul.f32 %v4177, %v4225
        %v4249 = vmul.f32 %v4182, %v4225
        %v4250 = vmul.f32 %v4185, %v4225
        %v4251 = vmul.f32 %v4190, %v4225
        %v4252 = vmul.f32 %v4193, %v4225
        %v4253 = vmul.f32 %v4198, %v4225
        %v4254 = vmul.f32 %v4201, %v4225
        %v4255 = vmul.f32 %v4206, %v4225
        %v4256 = vmul.f32 %v4209, %v4225
        %v4257 = vmul.f32 %v4214, %v4225
        %v4258 = vmul.f32 %v4217, %v4225
        %v4259 = vld [vmem:[%s9] sm:$0x1]
        %v4261 = vlaneseq
        %v4262 = vshrl.u32 %v4261, 7
        %v4263 = vsub.s32 0, %v4262
        %v4264 = vrot.slane %v4259, %v4263
        %v4266 = vadd.f32 %v4227, %v4264
        %v4267 = vadd.f32 %v4228, %v4264
        %v4268 = vadd.f32 %v4229, %v4264
        %v4269 = vadd.f32 %v4230, %v4264
        %v4270 = vadd.f32 %v4231, %v4264
        %v4271 = vadd.f32 %v4232, %v4264
        %v4272 = vadd.f32 %v4233, %v4264
        %v4273 = vadd.f32 %v4234, %v4264
        %v4274 = vadd.f32 %v4235, %v4264
        %v4275 = vadd.f32 %v4236, %v4264
        %v4276 = vadd.f32 %v4237, %v4264
        %v4277 = vadd.f32 %v4238, %v4264
        %v4278 = vadd.f32 %v4239, %v4264
        %v4279 = vadd.f32 %v4240, %v4264
        %v4280 = vadd.f32 %v4241, %v4264
        %v4281 = vadd.f32 %v4242, %v4264
        %v4282 = vadd.f32 %v4243, %v4264
        %v4283 = vadd.f32 %v4244, %v4264
        %v4284 = vadd.f32 %v4245, %v4264
        %v4285 = vadd.f32 %v4246, %v4264
        %v4286 = vadd.f32 %v4247, %v4264
        %v4287 = vadd.f32 %v4248, %v4264
        %v4288 = vadd.f32 %v4249, %v4264
        %v4289 = vadd.f32 %v4250, %v4264
        %v4290 = vadd.f32 %v4251, %v4264
        %v4291 = vadd.f32 %v4252, %v4264
        %v4292 = vadd.f32 %v4253, %v4264
        %v4293 = vadd.f32 %v4254, %v4264
        %v4294 = vadd.f32 %v4255, %v4264
        %v4295 = vadd.f32 %v4256, %v4264
        %v4296 = vadd.f32 %v4257, %v4264
        %v4297 = vadd.f32 %v4258, %v4264
        %v4298 = vld [vmem:[%s357] sm:$0xf]
        %v4299 = vld [vmem:[%s357 + $0x4] sm:$0xf]
        %v4300 = vld [vmem:[%s357 + $0x8] sm:$0xf]
        %v4301 = vld [vmem:[%s357 + $0xc] sm:$0xf]
        %v4302 = vld [vmem:[%s357 + $0x10] sm:$0xf]
        %v4303 = vld [vmem:[%s357 + $0x14] sm:$0xf]
        %v4304 = vld [vmem:[%s357 + $0x18] sm:$0xf]
        %v4305 = vld [vmem:[%s357 + $0x1c] sm:$0xf]
        %v4306 = vld [vmem:[%s357 + $0x20] sm:$0xf]
        %v4307 = vld [vmem:[%s357 + $0x24] sm:$0xf]
        %v4308 = vld [vmem:[%s357 + $0x28] sm:$0xf]
        %v4309 = vld [vmem:[%s357 + $0x2c] sm:$0xf]
        %v4310 = vld [vmem:[%s357 + $0x30] sm:$0xf]
        %v4311 = vld [vmem:[%s357 + $0x34] sm:$0xf]
        %v4312 = vld [vmem:[%s357 + $0x38] sm:$0xf]
        %v4313 = vld [vmem:[%s357 + $0x3c] sm:$0xf]
        %v4314 = vld [vmem:[%s357 + $0x40] sm:$0xf]
        %v4315 = vld [vmem:[%s357 + $0x44] sm:$0xf]
        %v4316 = vld [vmem:[%s357 + $0x48] sm:$0xf]
        %v4317 = vld [vmem:[%s357 + $0x4c] sm:$0xf]
        %v4318 = vld [vmem:[%s357 + $0x50] sm:$0xf]
        %v4319 = vld [vmem:[%s357 + $0x54] sm:$0xf]
        %v4320 = vld [vmem:[%s357 + $0x58] sm:$0xf]
        %v4321 = vld [vmem:[%s357 + $0x5c] sm:$0xf]
        %v4322 = vld [vmem:[%s357 + $0x60] sm:$0xf]
        %v4323 = vld [vmem:[%s357 + $0x64] sm:$0xf]
        %v4324 = vld [vmem:[%s357 + $0x68] sm:$0xf]
        %v4325 = vld [vmem:[%s357 + $0x6c] sm:$0xf]
        %v4326 = vld [vmem:[%s357 + $0x70] sm:$0xf]
        %v4327 = vld [vmem:[%s357 + $0x74] sm:$0xf]
        %v4328 = vld [vmem:[%s357 + $0x78] sm:$0xf]
        %v4329 = vld [vmem:[%s357 + $0x7c] sm:$0xf]
        %v4330 = vunpack.c.l.bf16 %v4298
        %v4331 = vunpack.c.l.bf16 %v4299
        %v4332 = vunpack.c.l.bf16 %v4300
        %v4333 = vunpack.c.l.bf16 %v4301
        %v4334 = vunpack.c.l.bf16 %v4302
        %v4335 = vunpack.c.l.bf16 %v4303
        %v4336 = vunpack.c.l.bf16 %v4304
        %v4337 = vunpack.c.l.bf16 %v4305
        %v4338 = vunpack.c.l.bf16 %v4306
        %v4339 = vunpack.c.l.bf16 %v4307
        %v4340 = vunpack.c.l.bf16 %v4308
        %v4341 = vunpack.c.l.bf16 %v4309
        %v4342 = vunpack.c.l.bf16 %v4310
        %v4343 = vunpack.c.l.bf16 %v4311
        %v4344 = vunpack.c.l.bf16 %v4312
        %v4345 = vunpack.c.l.bf16 %v4313
        %v4346 = vunpack.c.l.bf16 %v4314
        %v4347 = vunpack.c.l.bf16 %v4315
        %v4348 = vunpack.c.l.bf16 %v4316
        %v4349 = vunpack.c.l.bf16 %v4317
        %v4350 = vunpack.c.l.bf16 %v4318
        %v4351 = vunpack.c.l.bf16 %v4319
        %v4352 = vunpack.c.l.bf16 %v4320
        %v4353 = vunpack.c.l.bf16 %v4321
        %v4354 = vunpack.c.l.bf16 %v4322
        %v4355 = vunpack.c.l.bf16 %v4323
        %v4356 = vunpack.c.l.bf16 %v4324
        %v4357 = vunpack.c.l.bf16 %v4325
        %v4358 = vunpack.c.l.bf16 %v4326
        %v4359 = vunpack.c.l.bf16 %v4327
        %v4360 = vunpack.c.l.bf16 %v4328
        %v4361 = vunpack.c.l.bf16 %v4329
        %v4362 = vadd.f32 %v4266, %v4330
        %v4363 = vadd.f32 %v4267, %v4331
        %v4364 = vadd.f32 %v4268, %v4332
        %v4365 = vadd.f32 %v4269, %v4333
        %v4366 = vadd.f32 %v4270, %v4334
        %v4367 = vadd.f32 %v4271, %v4335
        %v4368 = vadd.f32 %v4272, %v4336
        %v4369 = vadd.f32 %v4273, %v4337
        %v4370 = vadd.f32 %v4274, %v4338
        %v4371 = vadd.f32 %v4275, %v4339
        %v4372 = vadd.f32 %v4276, %v4340
        %v4373 = vadd.f32 %v4277, %v4341
        %v4374 = vadd.f32 %v4278, %v4342
        %v4375 = vadd.f32 %v4279, %v4343
        %v4376 = vadd.f32 %v4280, %v4344
        %v4377 = vadd.f32 %v4281, %v4345
        %v4378 = vadd.f32 %v4282, %v4346
        %v4379 = vadd.f32 %v4283, %v4347
        %v4380 = vadd.f32 %v4284, %v4348
        %v4381 = vadd.f32 %v4285, %v4349
        %v4382 = vadd.f32 %v4286, %v4350
        %v4383 = vadd.f32 %v4287, %v4351
        %v4384 = vadd.f32 %v4288, %v4352
        %v4385 = vadd.f32 %v4289, %v4353
        %v4386 = vadd.f32 %v4290, %v4354
        %v4387 = vadd.f32 %v4291, %v4355
        %v4388 = vadd.f32 %v4292, %v4356
        %v4389 = vadd.f32 %v4293, %v4357
        %v4390 = vadd.f32 %v4294, %v4358
        %v4391 = vadd.f32 %v4295, %v4359
        %v4392 = vadd.f32 %v4296, %v4360
        %v4393 = vadd.f32 %v4297, %v4361
        %v4394 = vmax.f32 %v4362, 0.0
        %v4395 = vmax.f32 %v4363, 0.0
        %v4396 = vmax.f32 %v4364, 0.0
        %v4397 = vmax.f32 %v4365, 0.0
        %v4398 = vmax.f32 %v4366, 0.0
        %v4399 = vmax.f32 %v4367, 0.0
        %v4400 = vmax.f32 %v4368, 0.0
        %v4401 = vmax.f32 %v4369, 0.0
        %v4402 = vmax.f32 %v4370, 0.0
        %v4403 = vmax.f32 %v4371, 0.0
        %v4404 = vmax.f32 %v4372, 0.0
        %v4405 = vmax.f32 %v4373, 0.0
        %v4406 = vmax.f32 %v4374, 0.0
        %v4407 = vmax.f32 %v4375, 0.0
        %v4408 = vmax.f32 %v4376, 0.0
        %v4409 = vmax.f32 %v4377, 0.0
        %v4410 = vmax.f32 %v4378, 0.0
        %v4411 = vmax.f32 %v4379, 0.0
        %v4412 = vmax.f32 %v4380, 0.0
        %v4413 = vmax.f32 %v4381, 0.0
        %v4414 = vmax.f32 %v4382, 0.0
        %v4415 = vmax.f32 %v4383, 0.0
        %v4416 = vmax.f32 %v4384, 0.0
        %v4417 = vmax.f32 %v4385, 0.0
        %v4418 = vmax.f32 %v4386, 0.0
        %v4419 = vmax.f32 %v4387, 0.0
        %v4420 = vmax.f32 %v4388, 0.0
        %v4421 = vmax.f32 %v4389, 0.0
        %v4422 = vmax.f32 %v4390, 0.0
        %v4423 = vmax.f32 %v4391, 0.0
        %v4424 = vmax.f32 %v4392, 0.0
        %v4425 = vmax.f32 %v4393, 0.0
        %4426 = vst [vmem:[%s352] sm:$0xff] %v4394
        %4427 = vst [vmem:[%s352 + $0x8] sm:$0xff] %v4395
        %4428 = vst [vmem:[%s352 + $0x10] sm:$0xff] %v4396
        %4429 = vst [vmem:[%s352 + $0x18] sm:$0xff] %v4397
        %4430 = vst [vmem:[%s352 + $0x20] sm:$0xff] %v4398
        %4431 = vst [vmem:[%s352 + $0x28] sm:$0xff] %v4399
        %4432 = vst [vmem:[%s352 + $0x30] sm:$0xff] %v4400
        %4433 = vst [vmem:[%s352 + $0x38] sm:$0xff] %v4401
        %4434 = vst [vmem:[%s352 + $0x40] sm:$0xff] %v4402
        %4435 = vst [vmem:[%s352 + $0x48] sm:$0xff] %v4403
        %4436 = vst [vmem:[%s352 + $0x50] sm:$0xff] %v4404
        %4437 = vst [vmem:[%s352 + $0x58] sm:$0xff] %v4405
        %4438 = vst [vmem:[%s352 + $0x60] sm:$0xff] %v4406
        %4439 = vst [vmem:[%s352 + $0x68] sm:$0xff] %v4407
        %4440 = vst [vmem:[%s352 + $0x70] sm:$0xff] %v4408
        %4441 = vst [vmem:[%s352 + $0x78] sm:$0xff] %v4409
        %4442 = vst [vmem:[%s352 + $0x80] sm:$0xff] %v4410
        %4443 = vst [vmem:[%s352 + $0x88] sm:$0xff] %v4411
        %4444 = vst [vmem:[%s352 + $0x90] sm:$0xff] %v4412
        %4445 = vst [vmem:[%s352 + $0x98] sm:$0xff] %v4413
        %4446 = vst [vmem:[%s352 + $0xa0] sm:$0xff] %v4414
        %4447 = vst [vmem:[%s352 + $0xa8] sm:$0xff] %v4415
        %4448 = vst [vmem:[%s352 + $0xb0] sm:$0xff] %v4416
        %4449 = vst [vmem:[%s352 + $0xb8] sm:$0xff] %v4417
        %4450 = vst [vmem:[%s352 + $0xc0] sm:$0xff] %v4418
        %4451 = vst [vmem:[%s352 + $0xc8] sm:$0xff] %v4419
        %4452 = vst [vmem:[%s352 + $0xd0] sm:$0xff] %v4420
        %4453 = vst [vmem:[%s352 + $0xd8] sm:$0xff] %v4421
        %4454 = vst [vmem:[%s352 + $0xe0] sm:$0xff] %v4422
        %4455 = vst [vmem:[%s352 + $0xe8] sm:$0xff] %v4423
        %4456 = vst [vmem:[%s352 + $0xf0] sm:$0xff] %v4424
        %4457 = vst [vmem:[%s352 + $0xf8] sm:$0xff] %v4425
        %s4458 = sand.u32 %s247, 1
        %s4459 = scalar_lea.sflag [#allocation4], %s4458
        %s4460 = sand.u32 %s247, 1
        %s4461 = smul.addr %s4460, 256
        %s4462 = scalar_lea.vmem [#allocation3], %s4461
        // Predicated region
        $region61: #{tpu_custom_call.1} parent=59 // pred_check
          %p4463 = pneg %p257
        $region62: #{tpu_custom_call.1} parent=59 // pred_check_branch
          %4465 = sbr.rel (%p4463) target = $region64
        $region63: #{tpu_custom_call.1} parent=59 // pred_region
          %s4467 = ssub.s32 4096, 4096
          %4468 = vsyncadd %s4459, %s4467
          %s4469 = smul.addr %s24, 32
          %s4470 = smul.addr %s4469, 128
          %s4471 = scalar_lea.hbm %s10, %s4470
          %s4472 = sshll.u32 %s4462, 4
          %s4473 = int_to_ptr.vmem [resolvable:$true] %s4472
          %4478 = dma.vmem_to_hbm [thread:$0]  %s4473, 4096, %s4471, %s4459, 128, 128, 8
        $region64: #{tpu_custom_call.1} parent=59 // pred_fallthru
          _
      $region60: #{tpu_custom_call.1} parent=5 // pred_fallthru
        _
      %p4479 = scmp.le.s32.totalorder 2, %s19
      // Predicated region
      $region65: #{tpu_custom_call.1} parent=5 // pred_check
        %p4480 = pneg %p4479
      $region66: #{tpu_custom_call.1} parent=5 // pred_check_branch
        %4482 = sbr.rel (%p4480) target = $region68
      $region67: #{tpu_custom_call.1} parent=5 // pred_region
        %s4483 = ssub.s32 %s19, 2
        // Predicated region
        $region69: #{tpu_custom_call.1} parent=67 // pred_check
          %p4484 = pneg %p263
        $region70: #{tpu_custom_call.1} parent=67 // pred_check_branch
          %4486 = sbr.rel (%p4484) target = $region72
        $region71: #{tpu_custom_call.1} parent=67 // pred_region
          %s4487 = sand.u32 %s248, 1
          %s4488 = scalar_lea.sflag [#allocation4], %s4487
          %s4489 = sand.u32 %s248, 1
          %s4490 = smul.addr %s4489, 256
          %s4491 = scalar_lea.vmem [#allocation3], %s4490
          %4492 = dma.done %s4488, 4096
        $region72: #{tpu_custom_call.1} parent=67 // pred_fallthru
          _
      $region68: #{tpu_custom_call.1} parent=5 // pred_fallthru
        _
    $region6: #{tpu_custom_call.1} parent=1 // loop_footer
      %s23 = sadd.s32 1, %s19
    $region7: #{tpu_custom_call.1} parent=1 // loop_footer_branch
      %18 = sbr.rel target = $region3
    $region8: #{tpu_custom_call.1} parent=1 // loop_exit
      _
    %4493 = vsyncpa [#allocation4], 1
    %s4494 = scalar_lea.sflag [#allocation4], 1
    %4495 = vsyncpa %s4494, 1

</llo_original>
